<compile_context>
chip_gen: v6e
topology: v6e:2x2x1
jax: 0.10.0
libtpu: 0.0.40
codegen_flags: <defaults>
</compile_context>

<pallas_src>
import jax
import jax.numpy as jnp
from jax import lax
from jax.experimental import pallas as pl
from jax.experimental.pallas import tpu as pltpu

TAPS = tuple((ky, kx) for ky in range(3) for kx in range(3))   # (ky, kx) row-major
NTAP = len(TAPS)


# --------------------------- Pallas kernel ----------------------------------

def _make_convres_kernel(n_taps, m, chid, cin_p):
    """Fused ConvRes forward, batch folded into M, one grid step.

    x_ref   : (n_taps*m, cin_p)  tap-stacked padded input, channels-last (lane) padded
    b1m_ref : (n_taps*m, chid)   BN1 shift pre-multiplied by the interior mask
    w1_ref  : (cin_p, chid)      1x1 conv weight with BN1 scale folded in
    w2_ref  : (n_taps*chid, cout_p)  per-tap 3x3 seq weights, BN2 scale folded in
    wp_ref  : (n_taps*cin_p, cout_p) per-tap 3x3 proj weights
    b2_ref  : (1, cout_p)        BN2 shift + proj conv bias
    o_ref   : (m, cout_p)        lane-dense output
    """

    def kernel(x_ref, b1m_ref, w1_ref, w2_ref, wp_ref, b2_ref, o_ref):
        acc = jnp.zeros(o_ref.shape, jnp.float32)
        for t in range(n_taps):
            # Contiguous, sublane-aligned static slices (multiples of 128 / 8 rows).
            xt = x_ref[pl.ds(t * m, m), :]                                # (m, cin_p)
            # stage 1 recomputed per tap: 1x1 conv + BN1 + ReLU (masked shift keeps
            # the zero-padded border of the hidden activation exactly zero).
            ht = jnp.maximum(
                jnp.dot(xt, w1_ref[...], preferred_element_type=jnp.float32)
                + b1m_ref[pl.ds(t * m, m), :], 0.0)                       # (m, chid)
            # stage 2: accumulate this tap's contribution from both branches.
            acc += jnp.dot(ht, w2_ref[pl.ds(t * chid, chid), :],
                           preferred_element_type=jnp.float32)
            acc += jnp.dot(xt, wp_ref[pl.ds(t * cin_p, cin_p), :],
                           preferred_element_type=jnp.float32)
        # single fused bias (= BN2 shift + proj conv bias) + ReLU, lane-dense store
        o_ref[...] = jnp.maximum(acc + b2_ref[...], 0.0).astype(o_ref.dtype)

    return kernel


# --------------------------- pallas_call wrapper ------------------------------

def conv_res_pallas(x_taps, b1m, w1s, w2s, wps, b2):
    m_all, cin_p = x_taps.shape
    chid = w1s.shape[1]
    cout_p = w2s.shape[1]
    n_taps = w2s.shape[0] // chid
    m = m_all // n_taps                                   # = N * HO * WO

    kernel = _make_convres_kernel(n_taps, m, chid, cin_p)
    flops = 2 * m_all * (cin_p * chid + chid * cout_p + cin_p * cout_p)
    bytes_accessed = 4 * (x_taps.size + b1m.size + w1s.size + w2s.size
                          + wps.size + b2.size + m * cout_p)

    return pl.pallas_call(
        kernel,
        out_shape=jax.ShapeDtypeStruct((m, cout_p), jnp.float32),
        grid=(1,),                                        # single step, batch in M
        in_specs=[
            pl.BlockSpec((m_all, cin_p), lambda i: (0, 0)),       # tap-stacked input
            pl.BlockSpec((m_all, chid), lambda i: (0, 0)),        # masked BN1 shift
            pl.BlockSpec((cin_p, chid), lambda i: (0, 0)),        # w1 * scale1
            pl.BlockSpec((n_taps * chid, cout_p), lambda i: (0, 0)),   # w2 * scale2
            pl.BlockSpec((n_taps * cin_p, cout_p), lambda i: (0, 0)),  # w_proj
            pl.BlockSpec((1, cout_p), lambda i: (0, 0)),          # shift2 + bias_p
        ],
        out_specs=pl.BlockSpec((m, cout_p), lambda i: (0, 0)),
        compiler_params=pltpu.CompilerParams(
            dimension_semantics=("arbitrary",)),
        cost_estimate=pl.CostEstimate(flops=flops, transcendentals=0,
                                      bytes_accessed=bytes_accessed),
    )(x_taps, b1m, w1s, w2s, wps, b2)


# ------------------------------- host-side prep -------------------------------

def build_tap_stack(x_nchw, cin_p, ho, wo):
    """NCHW -> (9 * N * HO * WO, cin_p) tap slabs of the zero-padded input."""
    n, cin, h, w = x_nchw.shape
    x = jnp.transpose(x_nchw, (0, 2, 3, 1))                              # NHWC
    x = jnp.pad(x, ((0, 0), (1, 1), (1, 1), (0, cin_p - cin)))           # spatial+lane pad
    taps = [x[:, ky:ky + 2 * ho:2, kx:kx + 2 * wo:2, :] for ky, kx in TAPS]
    return jnp.stack(taps, axis=0).reshape(NTAP * n * ho * wo, cin_p)


def build_masked_bias(shift1, n, h, w, ho, wo):
    """BN1 shift pre-multiplied by the per-tap interior mask, row-aligned with the
    tap stack. Border rows of the hidden activation thus stay exactly zero."""
    ones = jnp.pad(jnp.ones((h, w), jnp.float32), ((1, 1), (1, 1)))
    taps = [ones[ky:ky + 2 * ho:2, kx:kx + 2 * wo:2] for ky, kx in TAPS]
    mask = jnp.stack(taps, axis=0).reshape(NTAP, 1, ho * wo, 1)
    mask = jnp.broadcast_to(mask, (NTAP, n, ho * wo, 1)).reshape(NTAP * n * ho * wo, 1)
    return mask * shift1[None, :]                                        # (M_all, chid)


def bn_fold(gamma, beta, mean, var, eps=1e-5):
    scale = gamma / jnp.sqrt(var + eps)
    shift = beta - mean * scale
    return scale, shift


def prepare_weights(w1_oihw, w2_oihw, wp_oihw, bias_p,
                    scale1, shift1, scale2, shift2, cin_p, cout_p):
    chid, cin = w1_oihw.shape[:2]
    cout = w2_oihw.shape[0]
    # 1x1 conv with BN1 scale folded in; zero rows for the padded input channels.
    w1s = jnp.zeros((cin_p, chid), jnp.float32)
    w1s = w1s.at[:cin, :].set(w1_oihw[:, :, 0, 0].T * scale1[None, :])
    # Per-tap stacked weights: each tap occupies a static 8-aligned K-slice.
    w2s = jnp.zeros((NTAP * chid, cout_p), jnp.float32)
    wps = jnp.zeros((NTAP * cin_p, cout_p), jnp.float32)
    for t, (ky, kx) in enumerate(TAPS):
        w2s = w2s.at[t * chid:(t + 1) * chid, :cout].set(
            w2_oihw[:, :, ky, kx].T * scale2[None, :])
        wps = wps.at[t * cin_p:t * cin_p + cin, :cout].set(wp_oihw[:, :, ky, kx].T)
    # Single fused bias = BN2 shift + proj conv bias (padded output lanes stay 0).
    b2 = jnp.zeros((1, cout_p), jnp.float32).at[0, :cout].set(shift2 + bias_p)
    return w1s, w2s, wps, b2


# ------------------------------------ main -------------------------------------

if __name__ == "__main__":
    N, CIN, H, W = 2, 4, 16, 16
    CHID, COUT, STRIDE = 8, 8, 2
    CIN_P = 8            # pad input channels so every tap K-block is 8 rows
    COUT_P = 128         # lane-dense output; real channels sliced out afterwards

    ks = jax.random.split(jax.random.PRNGKey(0), 13)
    x_nchw = jax.random.normal(ks[0], (N, CIN, H, W), jnp.float32)

    # Parameters (deterministic, synthetic) -- shapes follow nn.Conv2d / nn.BatchNorm2d.
    w1_oihw = jax.random.normal(ks[1], (CHID, CIN, 1, 1), jnp.float32) * 0.3    # conv1 (no bias)
    w2_oihw = jax.random.normal(ks[2], (COUT, CHID, 3, 3), jnp.float32) * 0.15  # conv2 (no bias)
    wp_oihw = jax.random.normal(ks[3], (COUT, CIN, 3, 3), jnp.float32) * 0.2    # proj conv
    bias_p = jax.random.normal(ks[4], (COUT,), jnp.float32) * 0.1               # proj bias

    g1 = jax.random.uniform(ks[5], (CHID,), jnp.float32, 0.5, 1.5)
    be1 = jax.random.normal(ks[6], (CHID,), jnp.float32) * 0.1
    m1 = jax.random.normal(ks[7], (CHID,), jnp.float32) * 0.1
    v1 = jax.random.uniform(ks[8], (CHID,), jnp.float32, 0.5, 1.5)
    g2 = jax.random.uniform(ks[9], (COUT,), jnp.float32, 0.5, 1.5)
    be2 = jax.random.normal(ks[10], (COUT,), jnp.float32) * 0.1
    m2 = jax.random.normal(ks[11], (COUT,), jnp.float32) * 0.1
    v2 = jax.random.uniform(ks[12], (COUT,), jnp.float32, 0.5, 1.5)

    scale1, shift1 = bn_fold(g1, be1, m1, v1)
    scale2, shift2 = bn_fold(g2, be2, m2, v2)

    HO = (H + 2 - 3) // STRIDE + 1
    WO = (W + 2 - 3) // STRIDE + 1

    w1s, w2s, wps, b2 = prepare_weights(w1_oihw, w2_oihw, wp_oihw, bias_p,
                                        scale1, shift1, scale2, shift2,
                                        CIN_P, COUT_P)
    b1m = build_masked_bias(shift1, N, H, W, HO, WO)

    @jax.jit
    def conv_res_forward(x_nchw):
        x_taps = build_tap_stack(x_nchw, CIN_P, HO, WO)
        out = conv_res_pallas(x_taps, b1m, w1s, w2s, wps, b2)   # (N*HO*WO, COUT_P)
        out = out[:, :COUT].reshape(N, HO, WO, COUT)
        return jnp.transpose(out, (0, 3, 1, 2))                 # back to NCHW

    def ref_forward(x_nchw):
        hi = lax.Precision.HIGHEST
        dn = lambda lhs, rhs: lax.conv_dimension_numbers(lhs.shape, rhs.shape,
                                                         ('NCHW', 'OIHW', 'NCHW'))
        h = lax.conv_general_dilated(x_nchw, w1_oihw, (1, 1), 'VALID',
                                     dimension_numbers=dn(x_nchw, w1_oihw), precision=hi)
        h = jnp.maximum(h * scale1[None, :, None, None] + shift1[None, :, None, None], 0.0)
        y = lax.conv_general_dilated(h, w2_oihw, (STRIDE, STRIDE), ((1, 1), (1, 1)),
                                     dimension_numbers=dn(h, w2_oihw), precision=hi)
        y = y * scale2[None, :, None, None] + shift2[None, :, None, None]
        p = lax.conv_general_dilated(x_nchw, wp_oihw, (STRIDE, STRIDE), ((1, 1), (1, 1)),
                                     dimension_numbers=dn(x_nchw, wp_oihw), precision=hi)
        p = p + bias_p[None, :, None, None]
        return jnp.maximum(y + p, 0.0)

    out = jax.block_until_ready(conv_res_forward(x_nchw))
    ref = jax.block_until_ready(ref_forward(x_nchw))

    assert out.shape == (N, COUT, H // STRIDE, W // STRIDE), out.shape
    assert jnp.allclose(out, ref, rtol=1e-2, atol=1e-2), \
        float(jnp.max(jnp.abs(out - ref)))

    print("KERNEL_OK")
</pallas_src>

<mosaic_0001>
module attributes {stable_mosaic.version = 11 : i64} {
  func.func @kernel(%arg0: i32, %arg1: memref<1152x8xf32, #tpu.memory_space<vmem>>, %arg2: memref<1152x8xf32, #tpu.memory_space<vmem>>, %arg3: memref<8x8xf32, #tpu.memory_space<vmem>>, %arg4: memref<72x128xf32, #tpu.memory_space<vmem>>, %arg5: memref<72x128xf32, #tpu.memory_space<vmem>>, %arg6: memref<1x128xf32, #tpu.memory_space<vmem>>, %arg7: memref<128x128xf32, #tpu.memory_space<vmem>>) attributes {dimension_semantics = [#tpu.dimension_semantics<arbitrary>], iteration_bounds = array<i64: 1>, scalar_prefetch = 0 : i64, scratch_operands = 0 : i64, tpu.core_type = #tpu.core_type<tc>, window_params = [{pipeline_mode = #tpu.pipeline_mode<synchronous>, transform_indices = @transform_0, window_bounds = array<i64: 1152, 8>}, {pipeline_mode = #tpu.pipeline_mode<synchronous>, transform_indices = @transform_1, window_bounds = array<i64: 1152, 8>}, {pipeline_mode = #tpu.pipeline_mode<synchronous>, transform_indices = @transform_2, window_bounds = array<i64: 8, 8>}, {pipeline_mode = #tpu.pipeline_mode<synchronous>, transform_indices = @transform_3, window_bounds = array<i64: 72, 128>}, {pipeline_mode = #tpu.pipeline_mode<synchronous>, transform_indices = @transform_4, window_bounds = array<i64: 72, 128>}, {pipeline_mode = #tpu.pipeline_mode<synchronous>, transform_indices = @transform_5, window_bounds = array<i64: 1, 128>}, {pipeline_mode = #tpu.pipeline_mode<synchronous>, transform_indices = @transform_6, window_bounds = array<i64: 128, 128>}]} {
    %cst = arith.constant 0.000000e+00 : f32
    %0 = vector.broadcast %cst : f32 to vector<128x128xf32>
    %c0 = arith.constant 0 : index
    %c0_0 = arith.constant 0 : index
    %1 = vector.load %arg1[%c0, %c0_0] : memref<1152x8xf32, #tpu.memory_space<vmem>>, vector<128x8xf32>
    %c0_1 = arith.constant 0 : index
    %c0_2 = arith.constant 0 : index
    %2 = vector.load %arg3[%c0_1, %c0_2] : memref<8x8xf32, #tpu.memory_space<vmem>>, vector<8x8xf32>
    %cst_3 = arith.constant dense<0.000000e+00> : vector<128x8xf32>
    %3 = tpu.matmul %1, %2, %cst_3 {dimension_numbers = #tpu.dot_dimension_numbers<[1], [0], [0], [1], [0, 0, 1, 1], [], []>} : vector<128x8xf32>, vector<8x8xf32>, vector<128x8xf32> -> vector<128x8xf32>
    %c0_4 = arith.constant 0 : index
    %c0_5 = arith.constant 0 : index
    %4 = vector.load %arg2[%c0_4, %c0_5] : memref<1152x8xf32, #tpu.memory_space<vmem>>, vector<128x8xf32>
    %5 = arith.addf %3, %4 : vector<128x8xf32>
    %cst_6 = arith.constant 0.000000e+00 : f32
    %6 = vector.broadcast %cst_6 : f32 to vector<128x8xf32>
    %7 = arith.maximumf %5, %6 : vector<128x8xf32>
    %c0_7 = arith.constant 0 : index
    %c0_8 = arith.constant 0 : index
    %8 = vector.load %arg4[%c0_7, %c0_8] : memref<72x128xf32, #tpu.memory_space<vmem>>, vector<8x128xf32>
    %cst_9 = arith.constant dense<0.000000e+00> : vector<128x128xf32>
    %9 = tpu.matmul %7, %8, %cst_9 {dimension_numbers = #tpu.dot_dimension_numbers<[1], [0], [0], [1], [0, 0, 1, 1], [], []>} : vector<128x8xf32>, vector<8x128xf32>, vector<128x128xf32> -> vector<128x128xf32>
    %10 = arith.addf %0, %9 : vector<128x128xf32>
    %c0_10 = arith.constant 0 : index
    %c0_11 = arith.constant 0 : index
    %11 = vector.load %arg5[%c0_10, %c0_11] : memref<72x128xf32, #tpu.memory_space<vmem>>, vector<8x128xf32>
    %cst_12 = arith.constant dense<0.000000e+00> : vector<128x128xf32>
    %12 = tpu.matmul %1, %11, %cst_12 {dimension_numbers = #tpu.dot_dimension_numbers<[1], [0], [0], [1], [0, 0, 1, 1], [], []>} : vector<128x8xf32>, vector<8x128xf32>, vector<128x128xf32> -> vector<128x128xf32>
    %13 = arith.addf %10, %12 : vector<128x128xf32>
    %c128 = arith.constant 128 : index
    %c0_13 = arith.constant 0 : index
    %14 = vector.load %arg1[%c128, %c0_13] : memref<1152x8xf32, #tpu.memory_space<vmem>>, vector<128x8xf32>
    %c0_14 = arith.constant 0 : index
    %c0_15 = arith.constant 0 : index
    %15 = vector.load %arg3[%c0_14, %c0_15] : memref<8x8xf32, #tpu.memory_space<vmem>>, vector<8x8xf32>
    %cst_16 = arith.constant dense<0.000000e+00> : vector<128x8xf32>
    %16 = tpu.matmul %14, %15, %cst_16 {dimension_numbers = #tpu.dot_dimension_numbers<[1], [0], [0], [1], [0, 0, 1, 1], [], []>} : vector<128x8xf32>, vector<8x8xf32>, vector<128x8xf32> -> vector<128x8xf32>
    %c128_17 = arith.constant 128 : index
    %c0_18 = arith.constant 0 : index
    %17 = vector.load %arg2[%c128_17, %c0_18] : memref<1152x8xf32, #tpu.memory_space<vmem>>, vector<128x8xf32>
    %18 = arith.addf %16, %17 : vector<128x8xf32>
    %cst_19 = arith.constant 0.000000e+00 : f32
    %19 = vector.broadcast %cst_19 : f32 to vector<128x8xf32>
    %20 = arith.maximumf %18, %19 : vector<128x8xf32>
    %c8 = arith.constant 8 : index
    %c0_20 = arith.constant 0 : index
    %21 = vector.load %arg4[%c8, %c0_20] : memref<72x128xf32, #tpu.memory_space<vmem>>, vector<8x128xf32>
    %cst_21 = arith.constant dense<0.000000e+00> : vector<128x128xf32>
    %22 = tpu.matmul %20, %21, %cst_21 {dimension_numbers = #tpu.dot_dimension_numbers<[1], [0], [0], [1], [0, 0, 1, 1], [], []>} : vector<128x8xf32>, vector<8x128xf32>, vector<128x128xf32> -> vector<128x128xf32>
    %23 = arith.addf %13, %22 : vector<128x128xf32>
    %c8_22 = arith.constant 8 : index
    %c0_23 = arith.constant 0 : index
    %24 = vector.load %arg5[%c8_22, %c0_23] : memref<72x128xf32, #tpu.memory_space<vmem>>, vector<8x128xf32>
    %cst_24 = arith.constant dense<0.000000e+00> : vector<128x128xf32>
    %25 = tpu.matmul %14, %24, %cst_24 {dimension_numbers = #tpu.dot_dimension_numbers<[1], [0], [0], [1], [0, 0, 1, 1], [], []>} : vector<128x8xf32>, vector<8x128xf32>, vector<128x128xf32> -> vector<128x128xf32>
    %26 = arith.addf %23, %25 : vector<128x128xf32>
    %c256 = arith.constant 256 : index
    %c0_25 = arith.constant 0 : index
    %27 = vector.load %arg1[%c256, %c0_25] : memref<1152x8xf32, #tpu.memory_space<vmem>>, vector<128x8xf32>
    %c0_26 = arith.constant 0 : index
    %c0_27 = arith.constant 0 : index
    %28 = vector.load %arg3[%c0_26, %c0_27] : memref<8x8xf32, #tpu.memory_space<vmem>>, vector<8x8xf32>
    %cst_28 = arith.constant dense<0.000000e+00> : vector<128x8xf32>
    %29 = tpu.matmul %27, %28, %cst_28 {dimension_numbers = #tpu.dot_dimension_numbers<[1], [0], [0], [1], [0, 0, 1, 1], [], []>} : vector<128x8xf32>, vector<8x8xf32>, vector<128x8xf32> -> vector<128x8xf32>
    %c256_29 = arith.constant 256 : index
    %c0_30 = arith.constant 0 : index
    %30 = vector.load %arg2[%c256_29, %c0_30] : memref<1152x8xf32, #tpu.memory_space<vmem>>, vector<128x8xf32>
    %31 = arith.addf %29, %30 : vector<128x8xf32>
    %cst_31 = arith.constant 0.000000e+00 : f32
    %32 = vector.broadcast %cst_31 : f32 to vector<128x8xf32>
    %33 = arith.maximumf %31, %32 : vector<128x8xf32>
    %c16 = arith.constant 16 : index
    %c0_32 = arith.constant 0 : index
    %34 = vector.load %arg4[%c16, %c0_32] : memref<72x128xf32, #tpu.memory_space<vmem>>, vector<8x128xf32>
    %cst_33 = arith.constant dense<0.000000e+00> : vector<128x128xf32>
    %35 = tpu.matmul %33, %34, %cst_33 {dimension_numbers = #tpu.dot_dimension_numbers<[1], [0], [0], [1], [0, 0, 1, 1], [], []>} : vector<128x8xf32>, vector<8x128xf32>, vector<128x128xf32> -> vector<128x128xf32>
    %36 = arith.addf %26, %35 : vector<128x128xf32>
    %c16_34 = arith.constant 16 : index
    %c0_35 = arith.constant 0 : index
    %37 = vector.load %arg5[%c16_34, %c0_35] : memref<72x128xf32, #tpu.memory_space<vmem>>, vector<8x128xf32>
    %cst_36 = arith.constant dense<0.000000e+00> : vector<128x128xf32>
    %38 = tpu.matmul %27, %37, %cst_36 {dimension_numbers = #tpu.dot_dimension_numbers<[1], [0], [0], [1], [0, 0, 1, 1], [], []>} : vector<128x8xf32>, vector<8x128xf32>, vector<128x128xf32> -> vector<128x128xf32>
    %39 = arith.addf %36, %38 : vector<128x128xf32>
    %c384 = arith.constant 384 : index
    %c0_37 = arith.constant 0 : index
    %40 = vector.load %arg1[%c384, %c0_37] : memref<1152x8xf32, #tpu.memory_space<vmem>>, vector<128x8xf32>
    %c0_38 = arith.constant 0 : index
    %c0_39 = arith.constant 0 : index
    %41 = vector.load %arg3[%c0_38, %c0_39] : memref<8x8xf32, #tpu.memory_space<vmem>>, vector<8x8xf32>
    %cst_40 = arith.constant dense<0.000000e+00> : vector<128x8xf32>
    %42 = tpu.matmul %40, %41, %cst_40 {dimension_numbers = #tpu.dot_dimension_numbers<[1], [0], [0], [1], [0, 0, 1, 1], [], []>} : vector<128x8xf32>, vector<8x8xf32>, vector<128x8xf32> -> vector<128x8xf32>
    %c384_41 = arith.constant 384 : index
    %c0_42 = arith.constant 0 : index
    %43 = vector.load %arg2[%c384_41, %c0_42] : memref<1152x8xf32, #tpu.memory_space<vmem>>, vector<128x8xf32>
    %44 = arith.addf %42, %43 : vector<128x8xf32>
    %cst_43 = arith.constant 0.000000e+00 : f32
    %45 = vector.broadcast %cst_43 : f32 to vector<128x8xf32>
    %46 = arith.maximumf %44, %45 : vector<128x8xf32>
    %c24 = arith.constant 24 : index
    %c0_44 = arith.constant 0 : index
    %47 = vector.load %arg4[%c24, %c0_44] : memref<72x128xf32, #tpu.memory_space<vmem>>, vector<8x128xf32>
    %cst_45 = arith.constant dense<0.000000e+00> : vector<128x128xf32>
    %48 = tpu.matmul %46, %47, %cst_45 {dimension_numbers = #tpu.dot_dimension_numbers<[1], [0], [0], [1], [0, 0, 1, 1], [], []>} : vector<128x8xf32>, vector<8x128xf32>, vector<128x128xf32> -> vector<128x128xf32>
    %49 = arith.addf %39, %48 : vector<128x128xf32>
    %c24_46 = arith.constant 24 : index
    %c0_47 = arith.constant 0 : index
    %50 = vector.load %arg5[%c24_46, %c0_47] : memref<72x128xf32, #tpu.memory_space<vmem>>, vector<8x128xf32>
    %cst_48 = arith.constant dense<0.000000e+00> : vector<128x128xf32>
    %51 = tpu.matmul %40, %50, %cst_48 {dimension_numbers = #tpu.dot_dimension_numbers<[1], [0], [0], [1], [0, 0, 1, 1], [], []>} : vector<128x8xf32>, vector<8x128xf32>, vector<128x128xf32> -> vector<128x128xf32>
    %52 = arith.addf %49, %51 : vector<128x128xf32>
    %c512 = arith.constant 512 : index
    %c0_49 = arith.constant 0 : index
    %53 = vector.load %arg1[%c512, %c0_49] : memref<1152x8xf32, #tpu.memory_space<vmem>>, vector<128x8xf32>
    %c0_50 = arith.constant 0 : index
    %c0_51 = arith.constant 0 : index
    %54 = vector.load %arg3[%c0_50, %c0_51] : memref<8x8xf32, #tpu.memory_space<vmem>>, vector<8x8xf32>
    %cst_52 = arith.constant dense<0.000000e+00> : vector<128x8xf32>
    %55 = tpu.matmul %53, %54, %cst_52 {dimension_numbers = #tpu.dot_dimension_numbers<[1], [0], [0], [1], [0, 0, 1, 1], [], []>} : vector<128x8xf32>, vector<8x8xf32>, vector<128x8xf32> -> vector<128x8xf32>
    %c512_53 = arith.constant 512 : index
    %c0_54 = arith.constant 0 : index
    %56 = vector.load %arg2[%c512_53, %c0_54] : memref<1152x8xf32, #tpu.memory_space<vmem>>, vector<128x8xf32>
    %57 = arith.addf %55, %56 : vector<128x8xf32>
    %cst_55 = arith.constant 0.000000e+00 : f32
    %58 = vector.broadcast %cst_55 : f32 to vector<128x8xf32>
    %59 = arith.maximumf %57, %58 : vector<128x8xf32>
    %c32 = arith.constant 32 : index
    %c0_56 = arith.constant 0 : index
    %60 = vector.load %arg4[%c32, %c0_56] : memref<72x128xf32, #tpu.memory_space<vmem>>, vector<8x128xf32>
    %cst_57 = arith.constant dense<0.000000e+00> : vector<128x128xf32>
    %61 = tpu.matmul %59, %60, %cst_57 {dimension_numbers = #tpu.dot_dimension_numbers<[1], [0], [0], [1], [0, 0, 1, 1], [], []>} : vector<128x8xf32>, vector<8x128xf32>, vector<128x128xf32> -> vector<128x128xf32>
    %62 = arith.addf %52, %61 : vector<128x128xf32>
    %c32_58 = arith.constant 32 : index
    %c0_59 = arith.constant 0 : index
    %63 = vector.load %arg5[%c32_58, %c0_59] : memref<72x128xf32, #tpu.memory_space<vmem>>, vector<8x128xf32>
    %cst_60 = arith.constant dense<0.000000e+00> : vector<128x128xf32>
    %64 = tpu.matmul %53, %63, %cst_60 {dimension_numbers = #tpu.dot_dimension_numbers<[1], [0], [0], [1], [0, 0, 1, 1], [], []>} : vector<128x8xf32>, vector<8x128xf32>, vector<128x128xf32> -> vector<128x128xf32>
    %65 = arith.addf %62, %64 : vector<128x128xf32>
    %c640 = arith.constant 640 : index
    %c0_61 = arith.constant 0 : index
    %66 = vector.load %arg1[%c640, %c0_61] : memref<1152x8xf32, #tpu.memory_space<vmem>>, vector<128x8xf32>
    %c0_62 = arith.constant 0 : index
    %c0_63 = arith.constant 0 : index
    %67 = vector.load %arg3[%c0_62, %c0_63] : memref<8x8xf32, #tpu.memory_space<vmem>>, vector<8x8xf32>
    %cst_64 = arith.constant dense<0.000000e+00> : vector<128x8xf32>
    %68 = tpu.matmul %66, %67, %cst_64 {dimension_numbers = #tpu.dot_dimension_numbers<[1], [0], [0], [1], [0, 0, 1, 1], [], []>} : vector<128x8xf32>, vector<8x8xf32>, vector<128x8xf32> -> vector<128x8xf32>
    %c640_65 = arith.constant 640 : index
    %c0_66 = arith.constant 0 : index
    %69 = vector.load %arg2[%c640_65, %c0_66] : memref<1152x8xf32, #tpu.memory_space<vmem>>, vector<128x8xf32>
    %70 = arith.addf %68, %69 : vector<128x8xf32>
    %cst_67 = arith.constant 0.000000e+00 : f32
    %71 = vector.broadcast %cst_67 : f32 to vector<128x8xf32>
    %72 = arith.maximumf %70, %71 : vector<128x8xf32>
    %c40 = arith.constant 40 : index
    %c0_68 = arith.constant 0 : index
    %73 = vector.load %arg4[%c40, %c0_68] : memref<72x128xf32, #tpu.memory_space<vmem>>, vector<8x128xf32>
    %cst_69 = arith.constant dense<0.000000e+00> : vector<128x128xf32>
    %74 = tpu.matmul %72, %73, %cst_69 {dimension_numbers = #tpu.dot_dimension_numbers<[1], [0], [0], [1], [0, 0, 1, 1], [], []>} : vector<128x8xf32>, vector<8x128xf32>, vector<128x128xf32> -> vector<128x128xf32>
    %75 = arith.addf %65, %74 : vector<128x128xf32>
    %c40_70 = arith.constant 40 : index
    %c0_71 = arith.constant 0 : index
    %76 = vector.load %arg5[%c40_70, %c0_71] : memref<72x128xf32, #tpu.memory_space<vmem>>, vector<8x128xf32>
    %cst_72 = arith.constant dense<0.000000e+00> : vector<128x128xf32>
    %77 = tpu.matmul %66, %76, %cst_72 {dimension_numbers = #tpu.dot_dimension_numbers<[1], [0], [0], [1], [0, 0, 1, 1], [], []>} : vector<128x8xf32>, vector<8x128xf32>, vector<128x128xf32> -> vector<128x128xf32>
    %78 = arith.addf %75, %77 : vector<128x128xf32>
    %c768 = arith.constant 768 : index
    %c0_73 = arith.constant 0 : index
    %79 = vector.load %arg1[%c768, %c0_73] : memref<1152x8xf32, #tpu.memory_space<vmem>>, vector<128x8xf32>
    %c0_74 = arith.constant 0 : index
    %c0_75 = arith.constant 0 : index
    %80 = vector.load %arg3[%c0_74, %c0_75] : memref<8x8xf32, #tpu.memory_space<vmem>>, vector<8x8xf32>
    %cst_76 = arith.constant dense<0.000000e+00> : vector<128x8xf32>
    %81 = tpu.matmul %79, %80, %cst_76 {dimension_numbers = #tpu.dot_dimension_numbers<[1], [0], [0], [1], [0, 0, 1, 1], [], []>} : vector<128x8xf32>, vector<8x8xf32>, vector<128x8xf32> -> vector<128x8xf32>
    %c768_77 = arith.constant 768 : index
    %c0_78 = arith.constant 0 : index
    %82 = vector.load %arg2[%c768_77, %c0_78] : memref<1152x8xf32, #tpu.memory_space<vmem>>, vector<128x8xf32>
    %83 = arith.addf %81, %82 : vector<128x8xf32>
    %cst_79 = arith.constant 0.000000e+00 : f32
    %84 = vector.broadcast %cst_79 : f32 to vector<128x8xf32>
    %85 = arith.maximumf %83, %84 : vector<128x8xf32>
    %c48 = arith.constant 48 : index
    %c0_80 = arith.constant 0 : index
    %86 = vector.load %arg4[%c48, %c0_80] : memref<72x128xf32, #tpu.memory_space<vmem>>, vector<8x128xf32>
    %cst_81 = arith.constant dense<0.000000e+00> : vector<128x128xf32>
    %87 = tpu.matmul %85, %86, %cst_81 {dimension_numbers = #tpu.dot_dimension_numbers<[1], [0], [0], [1], [0, 0, 1, 1], [], []>} : vector<128x8xf32>, vector<8x128xf32>, vector<128x128xf32> -> vector<128x128xf32>
    %88 = arith.addf %78, %87 : vector<128x128xf32>
    %c48_82 = arith.constant 48 : index
    %c0_83 = arith.constant 0 : index
    %89 = vector.load %arg5[%c48_82, %c0_83] : memref<72x128xf32, #tpu.memory_space<vmem>>, vector<8x128xf32>
    %cst_84 = arith.constant dense<0.000000e+00> : vector<128x128xf32>
    %90 = tpu.matmul %79, %89, %cst_84 {dimension_numbers = #tpu.dot_dimension_numbers<[1], [0], [0], [1], [0, 0, 1, 1], [], []>} : vector<128x8xf32>, vector<8x128xf32>, vector<128x128xf32> -> vector<128x128xf32>
    %91 = arith.addf %88, %90 : vector<128x128xf32>
    %c896 = arith.constant 896 : index
    %c0_85 = arith.constant 0 : index
    %92 = vector.load %arg1[%c896, %c0_85] : memref<1152x8xf32, #tpu.memory_space<vmem>>, vector<128x8xf32>
    %c0_86 = arith.constant 0 : index
    %c0_87 = arith.constant 0 : index
    %93 = vector.load %arg3[%c0_86, %c0_87] : memref<8x8xf32, #tpu.memory_space<vmem>>, vector<8x8xf32>
    %cst_88 = arith.constant dense<0.000000e+00> : vector<128x8xf32>
    %94 = tpu.matmul %92, %93, %cst_88 {dimension_numbers = #tpu.dot_dimension_numbers<[1], [0], [0], [1], [0, 0, 1, 1], [], []>} : vector<128x8xf32>, vector<8x8xf32>, vector<128x8xf32> -> vector<128x8xf32>
    %c896_89 = arith.constant 896 : index
    %c0_90 = arith.constant 0 : index
    %95 = vector.load %arg2[%c896_89, %c0_90] : memref<1152x8xf32, #tpu.memory_space<vmem>>, vector<128x8xf32>
    %96 = arith.addf %94, %95 : vector<128x8xf32>
    %cst_91 = arith.constant 0.000000e+00 : f32
    %97 = vector.broadcast %cst_91 : f32 to vector<128x8xf32>
    %98 = arith.maximumf %96, %97 : vector<128x8xf32>
    %c56 = arith.constant 56 : index
    %c0_92 = arith.constant 0 : index
    %99 = vector.load %arg4[%c56, %c0_92] : memref<72x128xf32, #tpu.memory_space<vmem>>, vector<8x128xf32>
    %cst_93 = arith.constant dense<0.000000e+00> : vector<128x128xf32>
    %100 = tpu.matmul %98, %99, %cst_93 {dimension_numbers = #tpu.dot_dimension_numbers<[1], [0], [0], [1], [0, 0, 1, 1], [], []>} : vector<128x8xf32>, vector<8x128xf32>, vector<128x128xf32> -> vector<128x128xf32>
    %101 = arith.addf %91, %100 : vector<128x128xf32>
    %c56_94 = arith.constant 56 : index
    %c0_95 = arith.constant 0 : index
    %102 = vector.load %arg5[%c56_94, %c0_95] : memref<72x128xf32, #tpu.memory_space<vmem>>, vector<8x128xf32>
    %cst_96 = arith.constant dense<0.000000e+00> : vector<128x128xf32>
    %103 = tpu.matmul %92, %102, %cst_96 {dimension_numbers = #tpu.dot_dimension_numbers<[1], [0], [0], [1], [0, 0, 1, 1], [], []>} : vector<128x8xf32>, vector<8x128xf32>, vector<128x128xf32> -> vector<128x128xf32>
    %104 = arith.addf %101, %103 : vector<128x128xf32>
    %c1024 = arith.constant 1024 : index
    %c0_97 = arith.constant 0 : index
    %105 = vector.load %arg1[%c1024, %c0_97] : memref<1152x8xf32, #tpu.memory_space<vmem>>, vector<128x8xf32>
    %c0_98 = arith.constant 0 : index
    %c0_99 = arith.constant 0 : index
    %106 = vector.load %arg3[%c0_98, %c0_99] : memref<8x8xf32, #tpu.memory_space<vmem>>, vector<8x8xf32>
    %cst_100 = arith.constant dense<0.000000e+00> : vector<128x8xf32>
    %107 = tpu.matmul %105, %106, %cst_100 {dimension_numbers = #tpu.dot_dimension_numbers<[1], [0], [0], [1], [0, 0, 1, 1], [], []>} : vector<128x8xf32>, vector<8x8xf32>, vector<128x8xf32> -> vector<128x8xf32>
    %c1024_101 = arith.constant 1024 : index
    %c0_102 = arith.constant 0 : index
    %108 = vector.load %arg2[%c1024_101, %c0_102] : memref<1152x8xf32, #tpu.memory_space<vmem>>, vector<128x8xf32>
    %109 = arith.addf %107, %108 : vector<128x8xf32>
    %cst_103 = arith.constant 0.000000e+00 : f32
    %110 = vector.broadcast %cst_103 : f32 to vector<128x8xf32>
    %111 = arith.maximumf %109, %110 : vector<128x8xf32>
    %c64 = arith.constant 64 : index
    %c0_104 = arith.constant 0 : index
    %112 = vector.load %arg4[%c64, %c0_104] : memref<72x128xf32, #tpu.memory_space<vmem>>, vector<8x128xf32>
    %cst_105 = arith.constant dense<0.000000e+00> : vector<128x128xf32>
    %113 = tpu.matmul %111, %112, %cst_105 {dimension_numbers = #tpu.dot_dimension_numbers<[1], [0], [0], [1], [0, 0, 1, 1], [], []>} : vector<128x8xf32>, vector<8x128xf32>, vector<128x128xf32> -> vector<128x128xf32>
    %114 = arith.addf %104, %113 : vector<128x128xf32>
    %c64_106 = arith.constant 64 : index
    %c0_107 = arith.constant 0 : index
    %115 = vector.load %arg5[%c64_106, %c0_107] : memref<72x128xf32, #tpu.memory_space<vmem>>, vector<8x128xf32>
    %cst_108 = arith.constant dense<0.000000e+00> : vector<128x128xf32>
    %116 = tpu.matmul %105, %115, %cst_108 {dimension_numbers = #tpu.dot_dimension_numbers<[1], [0], [0], [1], [0, 0, 1, 1], [], []>} : vector<128x8xf32>, vector<8x128xf32>, vector<128x128xf32> -> vector<128x128xf32>
    %117 = arith.addf %114, %116 : vector<128x128xf32>
    %c0_109 = arith.constant 0 : index
    %c0_110 = arith.constant 0 : index
    %118 = vector.load %arg6[%c0_109, %c0_110] : memref<1x128xf32, #tpu.memory_space<vmem>>, vector<1x128xf32>
    %119 = vector.broadcast %118 : vector<1x128xf32> to vector<128x128xf32>
    %120 = arith.addf %117, %119 : vector<128x128xf32>
    %cst_111 = arith.constant 0.000000e+00 : f32
    %121 = vector.broadcast %cst_111 : f32 to vector<128x128xf32>
    %122 = arith.maximumf %120, %121 : vector<128x128xf32>
    %c0_112 = arith.constant 0 : index
    %c0_113 = arith.constant 0 : index
    %123 = vector.load %arg7[%c0_112, %c0_113] : memref<128x128xf32, #tpu.memory_space<vmem>>, vector<128x128xf32>
    tpu.vector_store %arg7[%c0_112, %c0_113], %122 {strides = array<i32>} : memref<128x128xf32, #tpu.memory_space<vmem>>, vector<128x128xf32>,
    return
  }
  func.func @transform_0(%arg0: i32) -> (i32, i32) {
    %c0_i32 = arith.constant 0 : i32
    %c0_i32_0 = arith.constant 0 : i32
    %c0_i32_1 = arith.constant 0 : i32
    return %c0_i32, %c0_i32_0 : i32, i32
  }
  func.func @transform_1(%arg0: i32) -> (i32, i32) {
    %c0_i32 = arith.constant 0 : i32
    %c0_i32_0 = arith.constant 0 : i32
    %c0_i32_1 = arith.constant 0 : i32
    return %c0_i32, %c0_i32_0 : i32, i32
  }
  func.func @transform_2(%arg0: i32) -> (i32, i32) {
    %c0_i32 = arith.constant 0 : i32
    %c0_i32_0 = arith.constant 0 : i32
    %c0_i32_1 = arith.constant 0 : i32
    return %c0_i32, %c0_i32_0 : i32, i32
  }
  func.func @transform_3(%arg0: i32) -> (i32, i32) {
    %c0_i32 = arith.constant 0 : i32
    %c0_i32_0 = arith.constant 0 : i32
    %c0_i32_1 = arith.constant 0 : i32
    return %c0_i32, %c0_i32_0 : i32, i32
  }
  func.func @transform_4(%arg0: i32) -> (i32, i32) {
    %c0_i32 = arith.constant 0 : i32
    %c0_i32_0 = arith.constant 0 : i32
    %c0_i32_1 = arith.constant 0 : i32
    return %c0_i32, %c0_i32_0 : i32, i32
  }
  func.func @transform_5(%arg0: i32) -> (i32, i32) {
    %c0_i32 = arith.constant 0 : i32
    %c0_i32_0 = arith.constant 0 : i32
    %c0_i32_1 = arith.constant 0 : i32
    return %c0_i32, %c0_i32_0 : i32, i32
  }
  func.func @transform_6(%arg0: i32) -> (i32, i32) {
    %c0_i32 = arith.constant 0 : i32
    %c0_i32_0 = arith.constant 0 : i32
    %c0_i32_1 = arith.constant 0 : i32
    return %c0_i32, %c0_i32_0 : i32, i32
  }
}

</mosaic_0001>

<llo_original>
// kernel: conv_res_forward.1
$region0: #{conv_res_forward.1}
  #allocation0 [shape = 'u32[]', space=smem, size = 0x4, offset = 0x4, fixed_abs, tag = 'smem constant byte address 0x4 - core index']
  #allocation1 [shape = 'u32[144,128]{1,0:T(1,128)}', space=vmem, size = 0x12000, scoped, tag = 'internal scratch']
  %s0 = inlined_call_operand.vmem [shape: f32[1152,8], index: 0, kind: input, shape index: {}]
  %s1 = inlined_call_operand.vmem [shape: f32[1152,8], index: 1, kind: input, shape index: {}]
  %s2 = inlined_call_operand.vmem [shape: f32[8,8], index: 2, kind: input, shape index: {}]
  %s3 = inlined_call_operand.vmem [shape: f32[72,128], index: 3, kind: input, shape index: {}]
  %s4 = inlined_call_operand.vmem [shape: f32[72,128], index: 4, kind: input, shape index: {}]
  %s5 = inlined_call_operand.vmem [shape: f32[1,128], index: 5, kind: input, shape index: {}]
  %s6 = inlined_call_operand.vmem [shape: f32[128,128], index: 6, kind: output, shape index: {}]
  %s7 = sld [smem:[#allocation0]]
  $region34: #{conv_res_forward.1} parent=0
    _
  %s9 = ssub.s32 1, %s7
  %s10 = scalar_select 0, %s9, %s7
  // Predicated region
  $region2: #{conv_res_forward.1} parent=0 // pred_check
    _
  $region3: #{conv_res_forward.1} parent=0 // pred_check_branch
    %12 = sbr.rel (0) target = $region5
  $region4: #{conv_res_forward.1} parent=0 // pred_region
    _
  $region5: #{conv_res_forward.1} parent=0 // pred_fallthru
    _
  // Predicated region
  $region6: #{conv_res_forward.1} parent=0 // pred_check
    _
  $region7: #{conv_res_forward.1} parent=0 // pred_check_branch
    %14 = sbr.rel (0) target = $region9
  $region8: #{conv_res_forward.1} parent=0 // pred_region
    _
  $region9: #{conv_res_forward.1} parent=0 // pred_fallthru
    _
  // Predicated region
  $region10: #{conv_res_forward.1} parent=0 // pred_check
    _
  $region11: #{conv_res_forward.1} parent=0 // pred_check_branch
    %16 = sbr.rel (0) target = $region13
  $region12: #{conv_res_forward.1} parent=0 // pred_region
    _
  $region13: #{conv_res_forward.1} parent=0 // pred_fallthru
    _
  // Predicated region
  $region14: #{conv_res_forward.1} parent=0 // pred_check
    _
  $region15: #{conv_res_forward.1} parent=0 // pred_check_branch
    %18 = sbr.rel (0) target = $region17
  $region16: #{conv_res_forward.1} parent=0 // pred_region
    _
  $region17: #{conv_res_forward.1} parent=0 // pred_fallthru
    _
  // Predicated region
  $region18: #{conv_res_forward.1} parent=0 // pred_check
    _
  $region19: #{conv_res_forward.1} parent=0 // pred_check_branch
    %20 = sbr.rel (0) target = $region21
  $region20: #{conv_res_forward.1} parent=0 // pred_region
    _
  $region21: #{conv_res_forward.1} parent=0 // pred_fallthru
    _
  // Predicated region
  $region22: #{conv_res_forward.1} parent=0 // pred_check
    _
  $region23: #{conv_res_forward.1} parent=0 // pred_check_branch
    %22 = sbr.rel (0) target = $region25
  $region24: #{conv_res_forward.1} parent=0 // pred_region
    _
  $region25: #{conv_res_forward.1} parent=0 // pred_fallthru
    _
  %v23 = vld [vmem:[%s0] sm:$0xff]
  %v24 = vld [vmem:[%s0 + $0x8] sm:$0xff]
  %v25 = vld [vmem:[%s0 + $0x10] sm:$0xff]
  %v26 = vld [vmem:[%s0 + $0x18] sm:$0xff]
  %v27 = vld [vmem:[%s0 + $0x20] sm:$0xff]
  %v28 = vld [vmem:[%s0 + $0x28] sm:$0xff]
  %v29 = vld [vmem:[%s0 + $0x30] sm:$0xff]
  %v30 = vld [vmem:[%s0 + $0x38] sm:$0xff]
  %v31 = vld [vmem:[%s0 + $0x40] sm:$0xff]
  %v32 = vld [vmem:[%s0 + $0x48] sm:$0xff]
  %v33 = vld [vmem:[%s0 + $0x50] sm:$0xff]
  %v34 = vld [vmem:[%s0 + $0x58] sm:$0xff]
  %v35 = vld [vmem:[%s0 + $0x60] sm:$0xff]
  %v36 = vld [vmem:[%s0 + $0x68] sm:$0xff]
  %v37 = vld [vmem:[%s0 + $0x70] sm:$0xff]
  %v38 = vld [vmem:[%s0 + $0x78] sm:$0xff]
  %v39 = vld [vmem:[%s2] sm:$0xff]
  %v40 = vld [vmem:[%s1] sm:$0xff]
  %v41 = vld [vmem:[%s1 + $0x8] sm:$0xff]
  %v42 = vld [vmem:[%s1 + $0x10] sm:$0xff]
  %v43 = vld [vmem:[%s1 + $0x18] sm:$0xff]
  %v44 = vld [vmem:[%s1 + $0x20] sm:$0xff]
  %v45 = vld [vmem:[%s1 + $0x28] sm:$0xff]
  %v46 = vld [vmem:[%s1 + $0x30] sm:$0xff]
  %v47 = vld [vmem:[%s1 + $0x38] sm:$0xff]
  %v48 = vld [vmem:[%s1 + $0x40] sm:$0xff]
  %v49 = vld [vmem:[%s1 + $0x48] sm:$0xff]
  %v50 = vld [vmem:[%s1 + $0x50] sm:$0xff]
  %v51 = vld [vmem:[%s1 + $0x58] sm:$0xff]
  %v52 = vld [vmem:[%s1 + $0x60] sm:$0xff]
  %v53 = vld [vmem:[%s1 + $0x68] sm:$0xff]
  %v54 = vld [vmem:[%s1 + $0x70] sm:$0xff]
  %v55 = vld [vmem:[%s1 + $0x78] sm:$0xff]
  %vm56 = vcmask 64512
  %v58 = vsel %vm56, %v23, 0
  %v61 = vsel %vm56, %v24, 0
  %v64 = vsel %vm56, %v25, 0
  %v67 = vsel %vm56, %v26, 0
  %v70 = vsel %vm56, %v27, 0
  %v73 = vsel %vm56, %v28, 0
  %v76 = vsel %vm56, %v29, 0
  %v79 = vsel %vm56, %v30, 0
  %v82 = vsel %vm56, %v31, 0
  %v85 = vsel %vm56, %v32, 0
  %v88 = vsel %vm56, %v33, 0
  %v91 = vsel %vm56, %v34, 0
  %v94 = vsel %vm56, %v35, 0
  %v97 = vsel %vm56, %v36, 0
  %v100 = vsel %vm56, %v37, 0
  %v103 = vsel %vm56, %v38, 0
  %105 = vmatprep.subr.mxu0 0.0
  %106 = vmatpush1.msra.mxu0 0.0
  %107 = vmatprep.subr.mxu0 0.0
  %108 = vmatpush1.msra.mxu0 0.0
  %109 = vmatprep.subr.mxu0 0.0
  %110 = vmatpush1.msra.mxu0 0.0
  %111 = vmatprep.subr.mxu0 0.0
  %112 = vmatpush1.msra.mxu0 0.0
  %113 = vmatprep.subr.mxu0 0.0
  %114 = vmatpush1.msra.mxu0 0.0
  %115 = vmatprep.subr.mxu0 0.0
  %116 = vmatpush1.msra.mxu0 0.0
  %117 = vmatprep.subr.mxu0 0.0
  %118 = vmatpush1.msra.mxu0 0.0
  %119 = vmatprep.subr.mxu0 0.0
  %120 = vmatpush1.msra.mxu0 0.0
  %121 = vmatprep.subr.mxu0 0.0
  %122 = vmatpush1.msra.mxu0 0.0
  %123 = vmatprep.subr.mxu0 0.0
  %124 = vmatpush1.msra.mxu0 0.0
  %125 = vmatprep.subr.mxu0 0.0
  %126 = vmatpush1.msra.mxu0 0.0
  %127 = vmatprep.subr.mxu0 0.0
  %128 = vmatpush1.msra.mxu0 0.0
  %129 = vmatprep.subr.mxu0 0.0
  %130 = vmatpush1.msra.mxu0 0.0
  %131 = vmatprep.subr.mxu0 0.0
  %132 = vmatpush1.msra.mxu0 0.0
  %133 = vmatprep.subr.mxu0 0.0
  %134 = vmatpush1.msra.mxu0 0.0
  %135 = vmatprep.subr.mxu0 0.0
  %136 = vmatpush1.msra.mxu0 %v39
  %137 = vmatprep.subr.mxu0 0.0
  %138 = vmatpush2.msra.mxu0 0.0
  %139 = vmatprep.subr.mxu0 0.0
  %140 = vmatpush2.msra.mxu0 0.0
  %141 = vmatprep.subr.mxu0 0.0
  %142 = vmatpush2.msra.mxu0 0.0
  %143 = vmatprep.subr.mxu0 0.0
  %144 = vmatpush2.msra.mxu0 0.0
  %145 = vmatprep.subr.mxu0 0.0
  %146 = vmatpush2.msra.mxu0 0.0
  %147 = vmatprep.subr.mxu0 0.0
  %148 = vmatpush2.msra.mxu0 0.0
  %149 = vmatprep.subr.mxu0 0.0
  %150 = vmatpush2.msra.mxu0 0.0
  %151 = vmatprep.subr.mxu0 0.0
  %152 = vmatpush2.msra.mxu0 0.0
  %153 = vmatprep.subr.mxu0 0.0
  %154 = vmatpush2.msra.mxu0 0.0
  %155 = vmatprep.subr.mxu0 0.0
  %156 = vmatpush2.msra.mxu0 0.0
  %157 = vmatprep.subr.mxu0 0.0
  %158 = vmatpush2.msra.mxu0 0.0
  %159 = vmatprep.subr.mxu0 0.0
  %160 = vmatpush2.msra.mxu0 0.0
  %161 = vmatprep.subr.mxu0 0.0
  %162 = vmatpush2.msra.mxu0 0.0
  %163 = vmatprep.subr.mxu0 0.0
  %164 = vmatpush2.msra.mxu0 0.0
  %165 = vmatprep.subr.mxu0 0.0
  %166 = vmatpush2.msra.mxu0 0.0
  %167 = vmatprep.subr.mxu0 0.0
  %168 = vmatpush2.msra.mxu0 0.0
  %169 = vmatprep.mubr.f32.mxu0 0.0
  %170 = vmatmul.mubr.f32.gmra.mxu0 %v58
  %v171 = vpop.f32.mrf.mxu0
  %v172 = vadd.f32 %v40, %v171
  %v173 = vpop.f32.mrf.mxu0
  %174 = vmatprep.mubr.f32.mxu0 0.0
  %175 = vmatmul.mubr.f32.gmra.mxu0 %v61
  %v176 = vpop.f32.mrf.mxu0
  %v177 = vadd.f32 %v41, %v176
  %v178 = vpop.f32.mrf.mxu0
  %179 = vmatprep.mubr.f32.mxu0 0.0
  %180 = vmatmul.mubr.f32.gmra.mxu0 %v64
  %v181 = vpop.f32.mrf.mxu0
  %v182 = vadd.f32 %v42, %v181
  %v183 = vpop.f32.mrf.mxu0
  %184 = vmatprep.mubr.f32.mxu0 0.0
  %185 = vmatmul.mubr.f32.gmra.mxu0 %v67
  %v186 = vpop.f32.mrf.mxu0
  %v187 = vadd.f32 %v43, %v186
  %v188 = vpop.f32.mrf.mxu0
  %189 = vmatprep.mubr.f32.mxu0 0.0
  %190 = vmatmul.mubr.f32.gmra.mxu0 %v70
  %v191 = vpop.f32.mrf.mxu0
  %v192 = vadd.f32 %v44, %v191
  %v193 = vpop.f32.mrf.mxu0
  %194 = vmatprep.mubr.f32.mxu0 0.0
  %195 = vmatmul.mubr.f32.gmra.mxu0 %v73
  %v196 = vpop.f32.mrf.mxu0
  %v197 = vadd.f32 %v45, %v196
  %v198 = vpop.f32.mrf.mxu0
  %199 = vmatprep.mubr.f32.mxu0 0.0
  %200 = vmatmul.mubr.f32.gmra.mxu0 %v76
  %v201 = vpop.f32.mrf.mxu0
  %v202 = vadd.f32 %v46, %v201
  %v203 = vpop.f32.mrf.mxu0
  %204 = vmatprep.mubr.f32.mxu0 0.0
  %205 = vmatmul.mubr.f32.gmra.mxu0 %v79
  %v206 = vpop.f32.mrf.mxu0
  %v207 = vadd.f32 %v47, %v206
  %v208 = vpop.f32.mrf.mxu0
  %209 = vmatprep.mubr.f32.mxu0 0.0
  %210 = vmatmul.mubr.f32.gmra.mxu0 %v82
  %v211 = vpop.f32.mrf.mxu0
  %v212 = vadd.f32 %v48, %v211
  %v213 = vpop.f32.mrf.mxu0
  %214 = vmatprep.mubr.f32.mxu0 0.0
  %215 = vmatmul.mubr.f32.gmra.mxu0 %v85
  %v216 = vpop.f32.mrf.mxu0
  %v217 = vadd.f32 %v49, %v216
  %v218 = vpop.f32.mrf.mxu0
  %219 = vmatprep.mubr.f32.mxu0 0.0
  %220 = vmatmul.mubr.f32.gmra.mxu0 %v88
  %v221 = vpop.f32.mrf.mxu0
  %v222 = vadd.f32 %v50, %v221
  %v223 = vpop.f32.mrf.mxu0
  %224 = vmatprep.mubr.f32.mxu0 0.0
  %225 = vmatmul.mubr.f32.gmra.mxu0 %v91
  %v226 = vpop.f32.mrf.mxu0
  %v227 = vadd.f32 %v51, %v226
  %v228 = vpop.f32.mrf.mxu0
  %229 = vmatprep.mubr.f32.mxu0 0.0
  %230 = vmatmul.mubr.f32.gmra.mxu0 %v94
  %v231 = vpop.f32.mrf.mxu0
  %v232 = vadd.f32 %v52, %v231
  %v233 = vpop.f32.mrf.mxu0
  %234 = vmatprep.mubr.f32.mxu0 0.0
  %235 = vmatmul.mubr.f32.gmra.mxu0 %v97
  %v236 = vpop.f32.mrf.mxu0
  %v237 = vadd.f32 %v53, %v236
  %v238 = vpop.f32.mrf.mxu0
  %239 = vmatprep.mubr.f32.mxu0 0.0
  %240 = vmatmul.mubr.f32.gmra.mxu0 %v100
  %v241 = vpop.f32.mrf.mxu0
  %v242 = vadd.f32 %v54, %v241
  %v243 = vpop.f32.mrf.mxu0
  %244 = vmatprep.mubr.f32.mxu0 0.0
  %245 = vmatmul.mubr.f32.gmra.mxu0 %v103
  %v246 = vpop.f32.mrf.mxu0
  %v247 = vadd.f32 %v55, %v246
  %v248 = vpop.f32.mrf.mxu0
  %249 = vdwg.mxu0
  %v250 = vmax.f32 %v172, 0.0
  %v251 = vmax.f32 %v177, 0.0
  %v252 = vmax.f32 %v182, 0.0
  %v253 = vmax.f32 %v187, 0.0
  %v254 = vmax.f32 %v192, 0.0
  %v255 = vmax.f32 %v197, 0.0
  %v256 = vmax.f32 %v202, 0.0
  %v257 = vmax.f32 %v207, 0.0
  %v258 = vmax.f32 %v212, 0.0
  %v259 = vmax.f32 %v217, 0.0
  %v260 = vmax.f32 %v222, 0.0
  %v261 = vmax.f32 %v227, 0.0
  %v262 = vmax.f32 %v232, 0.0
  %v263 = vmax.f32 %v237, 0.0
  %v264 = vmax.f32 %v242, 0.0
  %v265 = vmax.f32 %v247, 0.0
  %v266 = vld [vmem:[%s3] sm:$0xff]
  %v267 = vld [vmem:[%s4] sm:$0xff]
  %268 = vmatprep.subr.mxu0 0.0
  %269 = vmatpush1.msra.mxu0 0.0
  %270 = vmatprep.subr.mxu0 0.0
  %271 = vmatpush1.msra.mxu0 0.0
  %272 = vmatprep.subr.mxu0 0.0
  %273 = vmatpush1.msra.mxu0 0.0
  %274 = vmatprep.subr.mxu0 0.0
  %275 = vmatpush1.msra.mxu0 0.0
  %276 = vmatprep.subr.mxu0 0.0
  %277 = vmatpush1.msra.mxu0 0.0
  %278 = vmatprep.subr.mxu0 0.0
  %279 = vmatpush1.msra.mxu0 0.0
  %280 = vmatprep.subr.mxu0 0.0
  %281 = vmatpush1.msra.mxu0 0.0
  %282 = vmatprep.subr.mxu0 0.0
  %283 = vmatpush1.msra.mxu0 0.0
  %284 = vmatprep.subr.mxu0 0.0
  %285 = vmatpush1.msra.mxu0 0.0
  %286 = vmatprep.subr.mxu0 0.0
  %287 = vmatpush1.msra.mxu0 0.0
  %288 = vmatprep.subr.mxu0 0.0
  %289 = vmatpush1.msra.mxu0 0.0
  %290 = vmatprep.subr.mxu0 0.0
  %291 = vmatpush1.msra.mxu0 0.0
  %292 = vmatprep.subr.mxu0 0.0
  %293 = vmatpush1.msra.mxu0 0.0
  %294 = vmatprep.subr.mxu0 0.0
  %295 = vmatpush1.msra.mxu0 0.0
  %296 = vmatprep.subr.mxu0 0.0
  %297 = vmatpush1.msra.mxu0 0.0
  %298 = vmatprep.subr.mxu0 0.0
  %299 = vmatpush1.msra.mxu0 %v267
  %300 = vmatprep.subr.mxu0 0.0
  %301 = vmatpush2.msra.mxu0 0.0
  %302 = vmatprep.subr.mxu0 0.0
  %303 = vmatpush2.msra.mxu0 0.0
  %304 = vmatprep.subr.mxu0 0.0
  %305 = vmatpush2.msra.mxu0 0.0
  %306 = vmatprep.subr.mxu0 0.0
  %307 = vmatpush2.msra.mxu0 0.0
  %308 = vmatprep.subr.mxu0 0.0
  %309 = vmatpush2.msra.mxu0 0.0
  %310 = vmatprep.subr.mxu0 0.0
  %311 = vmatpush2.msra.mxu0 0.0
  %312 = vmatprep.subr.mxu0 0.0
  %313 = vmatpush2.msra.mxu0 0.0
  %314 = vmatprep.subr.mxu0 0.0
  %315 = vmatpush2.msra.mxu0 0.0
  %316 = vmatprep.subr.mxu0 0.0
  %317 = vmatpush2.msra.mxu0 0.0
  %318 = vmatprep.subr.mxu0 0.0
  %319 = vmatpush2.msra.mxu0 0.0
  %320 = vmatprep.subr.mxu0 0.0
  %321 = vmatpush2.msra.mxu0 0.0
  %322 = vmatprep.subr.mxu0 0.0
  %323 = vmatpush2.msra.mxu0 0.0
  %324 = vmatprep.subr.mxu0 0.0
  %325 = vmatpush2.msra.mxu0 0.0
  %326 = vmatprep.subr.mxu0 0.0
  %327 = vmatpush2.msra.mxu0 0.0
  %328 = vmatprep.subr.mxu0 0.0
  %329 = vmatpush2.msra.mxu0 0.0
  %330 = vmatprep.subr.mxu0 0.0
  %331 = vmatpush2.msra.mxu0 0.0
  %332 = vmatprep.mubr.f32.mxu0 0.0
  %333 = vmatmul.mubr.f32.gmra.mxu0 %v58
  %v334 = vpop.f32.mrf.mxu0
  %v335 = vadd.f32 0.0, %v334
  %v336 = vpop.f32.mrf.mxu0
  %337 = vmatprep.mubr.f32.mxu0 0.0
  %338 = vmatmul.mubr.f32.gmra.mxu0 %v61
  %v339 = vpop.f32.mrf.mxu0
  %v340 = vadd.f32 0.0, %v339
  %v341 = vpop.f32.mrf.mxu0
  %342 = vmatprep.mubr.f32.mxu0 0.0
  %343 = vmatmul.mubr.f32.gmra.mxu0 %v64
  %v344 = vpop.f32.mrf.mxu0
  %v345 = vadd.f32 0.0, %v344
  %v346 = vpop.f32.mrf.mxu0
  %347 = vmatprep.mubr.f32.mxu0 0.0
  %348 = vmatmul.mubr.f32.gmra.mxu0 %v67
  %v349 = vpop.f32.mrf.mxu0
  %v350 = vadd.f32 0.0, %v349
  %v351 = vpop.f32.mrf.mxu0
  %352 = vmatprep.mubr.f32.mxu0 0.0
  %353 = vmatmul.mubr.f32.gmra.mxu0 %v70
  %v354 = vpop.f32.mrf.mxu0
  %v355 = vadd.f32 0.0, %v354
  %v356 = vpop.f32.mrf.mxu0
  %357 = vmatprep.mubr.f32.mxu0 0.0
  %358 = vmatmul.mubr.f32.gmra.mxu0 %v73
  %v359 = vpop.f32.mrf.mxu0
  %v360 = vadd.f32 0.0, %v359
  %v361 = vpop.f32.mrf.mxu0
  %362 = vmatprep.mubr.f32.mxu0 0.0
  %363 = vmatmul.mubr.f32.gmra.mxu0 %v76
  %v364 = vpop.f32.mrf.mxu0
  %v365 = vadd.f32 0.0, %v364
  %v366 = vpop.f32.mrf.mxu0
  %367 = vmatprep.mubr.f32.mxu0 0.0
  %368 = vmatmul.mubr.f32.gmra.mxu0 %v79
  %v369 = vpop.f32.mrf.mxu0
  %v370 = vadd.f32 0.0, %v369
  %v371 = vpop.f32.mrf.mxu0
  %372 = vmatprep.mubr.f32.mxu0 0.0
  %373 = vmatmul.mubr.f32.gmra.mxu0 %v82
  %v374 = vpop.f32.mrf.mxu0
  %v375 = vadd.f32 0.0, %v374
  %v376 = vpop.f32.mrf.mxu0
  %377 = vmatprep.mubr.f32.mxu0 0.0
  %378 = vmatmul.mubr.f32.gmra.mxu0 %v85
  %v379 = vpop.f32.mrf.mxu0
  %v380 = vadd.f32 0.0, %v379
  %v381 = vpop.f32.mrf.mxu0
  %382 = vmatprep.mubr.f32.mxu0 0.0
  %383 = vmatmul.mubr.f32.gmra.mxu0 %v88
  %v384 = vpop.f32.mrf.mxu0
  %v385 = vadd.f32 0.0, %v384
  %v386 = vpop.f32.mrf.mxu0
  %387 = vmatprep.mubr.f32.mxu0 0.0
  %388 = vmatmul.mubr.f32.gmra.mxu0 %v91
  %v389 = vpop.f32.mrf.mxu0
  %v390 = vadd.f32 0.0, %v389
  %v391 = vpop.f32.mrf.mxu0
  %392 = vmatprep.mubr.f32.mxu0 0.0
  %393 = vmatmul.mubr.f32.gmra.mxu0 %v94
  %v394 = vpop.f32.mrf.mxu0
  %v395 = vadd.f32 0.0, %v394
  %v396 = vpop.f32.mrf.mxu0
  %397 = vmatprep.mubr.f32.mxu0 0.0
  %398 = vmatmul.mubr.f32.gmra.mxu0 %v97
  %v399 = vpop.f32.mrf.mxu0
  %v400 = vadd.f32 0.0, %v399
  %v401 = vpop.f32.mrf.mxu0
  %402 = vmatprep.mubr.f32.mxu0 0.0
  %403 = vmatmul.mubr.f32.gmra.mxu0 %v100
  %v404 = vpop.f32.mrf.mxu0
  %v405 = vadd.f32 0.0, %v404
  %v406 = vpop.f32.mrf.mxu0
  %407 = vmatprep.mubr.f32.mxu0 0.0
  %408 = vmatmul.mubr.f32.gmra.mxu0 %v103
  %v409 = vpop.f32.mrf.mxu0
  %v410 = vadd.f32 0.0, %v409
  %v411 = vpop.f32.mrf.mxu0
  %412 = vdwg.mxu0
  %v414 = vsel %vm56, %v250, 0
  %v417 = vsel %vm56, %v251, 0
  %v420 = vsel %vm56, %v252, 0
  %v423 = vsel %vm56, %v253, 0
  %v426 = vsel %vm56, %v254, 0
  %v429 = vsel %vm56, %v255, 0
  %v432 = vsel %vm56, %v256, 0
  %v435 = vsel %vm56, %v257, 0
  %v438 = vsel %vm56, %v258, 0
  %v441 = vsel %vm56, %v259, 0
  %v444 = vsel %vm56, %v260, 0
  %v447 = vsel %vm56, %v261, 0
  %v450 = vsel %vm56, %v262, 0
  %v453 = vsel %vm56, %v263, 0
  %v456 = vsel %vm56, %v264, 0
  %v459 = vsel %vm56, %v265, 0
  %461 = vmatprep.subr.mxu0 0.0
  %462 = vmatpush1.msra.mxu0 0.0
  %463 = vmatprep.subr.mxu0 0.0
  %464 = vmatpush1.msra.mxu0 0.0
  %465 = vmatprep.subr.mxu0 0.0
  %466 = vmatpush1.msra.mxu0 0.0
  %467 = vmatprep.subr.mxu0 0.0
  %468 = vmatpush1.msra.mxu0 0.0
  %469 = vmatprep.subr.mxu0 0.0
  %470 = vmatpush1.msra.mxu0 0.0
  %471 = vmatprep.subr.mxu0 0.0
  %472 = vmatpush1.msra.mxu0 0.0
  %473 = vmatprep.subr.mxu0 0.0
  %474 = vmatpush1.msra.mxu0 0.0
  %475 = vmatprep.subr.mxu0 0.0
  %476 = vmatpush1.msra.mxu0 0.0
  %477 = vmatprep.subr.mxu0 0.0
  %478 = vmatpush1.msra.mxu0 0.0
  %479 = vmatprep.subr.mxu0 0.0
  %480 = vmatpush1.msra.mxu0 0.0
  %481 = vmatprep.subr.mxu0 0.0
  %482 = vmatpush1.msra.mxu0 0.0
  %483 = vmatprep.subr.mxu0 0.0
  %484 = vmatpush1.msra.mxu0 0.0
  %485 = vmatprep.subr.mxu0 0.0
  %486 = vmatpush1.msra.mxu0 0.0
  %487 = vmatprep.subr.mxu0 0.0
  %488 = vmatpush1.msra.mxu0 0.0
  %489 = vmatprep.subr.mxu0 0.0
  %490 = vmatpush1.msra.mxu0 0.0
  %491 = vmatprep.subr.mxu0 0.0
  %492 = vmatpush1.msra.mxu0 %v266
  %493 = vmatprep.subr.mxu0 0.0
  %494 = vmatpush2.msra.mxu0 0.0
  %495 = vmatprep.subr.mxu0 0.0
  %496 = vmatpush2.msra.mxu0 0.0
  %497 = vmatprep.subr.mxu0 0.0
  %498 = vmatpush2.msra.mxu0 0.0
  %499 = vmatprep.subr.mxu0 0.0
  %500 = vmatpush2.msra.mxu0 0.0
  %501 = vmatprep.subr.mxu0 0.0
  %502 = vmatpush2.msra.mxu0 0.0
  %503 = vmatprep.subr.mxu0 0.0
  %504 = vmatpush2.msra.mxu0 0.0
  %505 = vmatprep.subr.mxu0 0.0
  %506 = vmatpush2.msra.mxu0 0.0
  %507 = vmatprep.subr.mxu0 0.0
  %508 = vmatpush2.msra.mxu0 0.0
  %509 = vmatprep.subr.mxu0 0.0
  %510 = vmatpush2.msra.mxu0 0.0
  %511 = vmatprep.subr.mxu0 0.0
  %512 = vmatpush2.msra.mxu0 0.0
  %513 = vmatprep.subr.mxu0 0.0
  %514 = vmatpush2.msra.mxu0 0.0
  %515 = vmatprep.subr.mxu0 0.0
  %516 = vmatpush2.msra.mxu0 0.0
  %517 = vmatprep.subr.mxu0 0.0
  %518 = vmatpush2.msra.mxu0 0.0
  %519 = vmatprep.subr.mxu0 0.0
  %520 = vmatpush2.msra.mxu0 0.0
  %521 = vmatprep.subr.mxu0 0.0
  %522 = vmatpush2.msra.mxu0 0.0
  %523 = vmatprep.subr.mxu0 0.0
  %524 = vmatpush2.msra.mxu0 0.0
  %525 = vmatprep.mubr.f32.mxu0 0.0
  %526 = vmatmul.mubr.f32.gmra.mxu0 %v414
  %v527 = vpop.f32.mrf.mxu0
  %v528 = vadd.f32 %v335, %v527
  %v529 = vpop.f32.mrf.mxu0
  %530 = vmatprep.mubr.f32.mxu0 0.0
  %531 = vmatmul.mubr.f32.gmra.mxu0 %v417
  %v532 = vpop.f32.mrf.mxu0
  %v533 = vadd.f32 %v340, %v532
  %v534 = vpop.f32.mrf.mxu0
  %535 = vmatprep.mubr.f32.mxu0 0.0
  %536 = vmatmul.mubr.f32.gmra.mxu0 %v420
  %v537 = vpop.f32.mrf.mxu0
  %v538 = vadd.f32 %v345, %v537
  %v539 = vpop.f32.mrf.mxu0
  %540 = vmatprep.mubr.f32.mxu0 0.0
  %541 = vmatmul.mubr.f32.gmra.mxu0 %v423
  %v542 = vpop.f32.mrf.mxu0
  %v543 = vadd.f32 %v350, %v542
  %v544 = vpop.f32.mrf.mxu0
  %545 = vmatprep.mubr.f32.mxu0 0.0
  %546 = vmatmul.mubr.f32.gmra.mxu0 %v426
  %v547 = vpop.f32.mrf.mxu0
  %v548 = vadd.f32 %v355, %v547
  %v549 = vpop.f32.mrf.mxu0
  %550 = vmatprep.mubr.f32.mxu0 0.0
  %551 = vmatmul.mubr.f32.gmra.mxu0 %v429
  %v552 = vpop.f32.mrf.mxu0
  %v553 = vadd.f32 %v360, %v552
  %v554 = vpop.f32.mrf.mxu0
  %555 = vmatprep.mubr.f32.mxu0 0.0
  %556 = vmatmul.mubr.f32.gmra.mxu0 %v432
  %v557 = vpop.f32.mrf.mxu0
  %v558 = vadd.f32 %v365, %v557
  %v559 = vpop.f32.mrf.mxu0
  %560 = vmatprep.mubr.f32.mxu0 0.0
  %561 = vmatmul.mubr.f32.gmra.mxu0 %v435
  %v562 = vpop.f32.mrf.mxu0
  %v563 = vadd.f32 %v370, %v562
  %v564 = vpop.f32.mrf.mxu0
  %565 = vmatprep.mubr.f32.mxu0 0.0
  %566 = vmatmul.mubr.f32.gmra.mxu0 %v438
  %v567 = vpop.f32.mrf.mxu0
  %v568 = vadd.f32 %v375, %v567
  %v569 = vpop.f32.mrf.mxu0
  %570 = vmatprep.mubr.f32.mxu0 0.0
  %571 = vmatmul.mubr.f32.gmra.mxu0 %v441
  %v572 = vpop.f32.mrf.mxu0
  %v573 = vadd.f32 %v380, %v572
  %v574 = vpop.f32.mrf.mxu0
  %575 = vmatprep.mubr.f32.mxu0 0.0
  %576 = vmatmul.mubr.f32.gmra.mxu0 %v444
  %v577 = vpop.f32.mrf.mxu0
  %v578 = vadd.f32 %v385, %v577
  %v579 = vpop.f32.mrf.mxu0
  %580 = vmatprep.mubr.f32.mxu0 0.0
  %581 = vmatmul.mubr.f32.gmra.mxu0 %v447
  %v582 = vpop.f32.mrf.mxu0
  %v583 = vadd.f32 %v390, %v582
  %v584 = vpop.f32.mrf.mxu0
  %585 = vmatprep.mubr.f32.mxu0 0.0
  %586 = vmatmul.mubr.f32.gmra.mxu0 %v450
  %v587 = vpop.f32.mrf.mxu0
  %v588 = vadd.f32 %v395, %v587
  %v589 = vpop.f32.mrf.mxu0
  %590 = vmatprep.mubr.f32.mxu0 0.0
  %591 = vmatmul.mubr.f32.gmra.mxu0 %v453
  %v592 = vpop.f32.mrf.mxu0
  %v593 = vadd.f32 %v400, %v592
  %v594 = vpop.f32.mrf.mxu0
  %595 = vmatprep.mubr.f32.mxu0 0.0
  %596 = vmatmul.mubr.f32.gmra.mxu0 %v456
  %v597 = vpop.f32.mrf.mxu0
  %v598 = vadd.f32 %v405, %v597
  %v599 = vpop.f32.mrf.mxu0
  %600 = vmatprep.mubr.f32.mxu0 0.0
  %601 = vmatmul.mubr.f32.gmra.mxu0 %v459
  %v602 = vpop.f32.mrf.mxu0
  %v603 = vadd.f32 %v410, %v602
  %v604 = vpop.f32.mrf.mxu0
  %605 = vdwg.mxu0
  %v606 = vld [vmem:[%s0 + $0x80] sm:$0xff]
  %v607 = vld [vmem:[%s0 + $0x88] sm:$0xff]
  %v608 = vld [vmem:[%s0 + $0x90] sm:$0xff]
  %v609 = vld [vmem:[%s0 + $0x98] sm:$0xff]
  %v610 = vld [vmem:[%s0 + $0xa0] sm:$0xff]
  %v611 = vld [vmem:[%s0 + $0xa8] sm:$0xff]
  %v612 = vld [vmem:[%s0 + $0xb0] sm:$0xff]
  %v613 = vld [vmem:[%s0 + $0xb8] sm:$0xff]
  %v614 = vld [vmem:[%s0 + $0xc0] sm:$0xff]
  %v615 = vld [vmem:[%s0 + $0xc8] sm:$0xff]
  %v616 = vld [vmem:[%s0 + $0xd0] sm:$0xff]
  %v617 = vld [vmem:[%s0 + $0xd8] sm:$0xff]
  %v618 = vld [vmem:[%s0 + $0xe0] sm:$0xff]
  %v619 = vld [vmem:[%s0 + $0xe8] sm:$0xff]
  %v620 = vld [vmem:[%s0 + $0xf0] sm:$0xff]
  %v621 = vld [vmem:[%s0 + $0xf8] sm:$0xff]
  %v622 = vld [vmem:[%s1 + $0x80] sm:$0xff]
  %v623 = vld [vmem:[%s1 + $0x88] sm:$0xff]
  %v624 = vld [vmem:[%s1 + $0x90] sm:$0xff]
  %v625 = vld [vmem:[%s1 + $0x98] sm:$0xff]
  %v626 = vld [vmem:[%s1 + $0xa0] sm:$0xff]
  %v627 = vld [vmem:[%s1 + $0xa8] sm:$0xff]
  %v628 = vld [vmem:[%s1 + $0xb0] sm:$0xff]
  %v629 = vld [vmem:[%s1 + $0xb8] sm:$0xff]
  %v630 = vld [vmem:[%s1 + $0xc0] sm:$0xff]
  %v631 = vld [vmem:[%s1 + $0xc8] sm:$0xff]
  %v632 = vld [vmem:[%s1 + $0xd0] sm:$0xff]
  %v633 = vld [vmem:[%s1 + $0xd8] sm:$0xff]
  %v634 = vld [vmem:[%s1 + $0xe0] sm:$0xff]
  %v635 = vld [vmem:[%s1 + $0xe8] sm:$0xff]
  %v636 = vld [vmem:[%s1 + $0xf0] sm:$0xff]
  %v637 = vld [vmem:[%s1 + $0xf8] sm:$0xff]
  %v639 = vsel %vm56, %v606, 0
  %v642 = vsel %vm56, %v607, 0
  %v645 = vsel %vm56, %v608, 0
  %v648 = vsel %vm56, %v609, 0
  %v651 = vsel %vm56, %v610, 0
  %v654 = vsel %vm56, %v611, 0
  %v657 = vsel %vm56, %v612, 0
  %v660 = vsel %vm56, %v613, 0
  %v663 = vsel %vm56, %v614, 0
  %v666 = vsel %vm56, %v615, 0
  %v669 = vsel %vm56, %v616, 0
  %v672 = vsel %vm56, %v617, 0
  %v675 = vsel %vm56, %v618, 0
  %v678 = vsel %vm56, %v619, 0
  %v681 = vsel %vm56, %v620, 0
  %v684 = vsel %vm56, %v621, 0
  %686 = vmatprep.subr.mxu0 0.0
  %687 = vmatpush1.msra.mxu0 0.0
  %688 = vmatprep.subr.mxu0 0.0
  %689 = vmatpush1.msra.mxu0 0.0
  %690 = vmatprep.subr.mxu0 0.0
  %691 = vmatpush1.msra.mxu0 0.0
  %692 = vmatprep.subr.mxu0 0.0
  %693 = vmatpush1.msra.mxu0 0.0
  %694 = vmatprep.subr.mxu0 0.0
  %695 = vmatpush1.msra.mxu0 0.0
  %696 = vmatprep.subr.mxu0 0.0
  %697 = vmatpush1.msra.mxu0 0.0
  %698 = vmatprep.subr.mxu0 0.0
  %699 = vmatpush1.msra.mxu0 0.0
  %700 = vmatprep.subr.mxu0 0.0
  %701 = vmatpush1.msra.mxu0 0.0
  %702 = vmatprep.subr.mxu0 0.0
  %703 = vmatpush1.msra.mxu0 0.0
  %704 = vmatprep.subr.mxu0 0.0
  %705 = vmatpush1.msra.mxu0 0.0
  %706 = vmatprep.subr.mxu0 0.0
  %707 = vmatpush1.msra.mxu0 0.0
  %708 = vmatprep.subr.mxu0 0.0
  %709 = vmatpush1.msra.mxu0 0.0
  %710 = vmatprep.subr.mxu0 0.0
  %711 = vmatpush1.msra.mxu0 0.0
  %712 = vmatprep.subr.mxu0 0.0
  %713 = vmatpush1.msra.mxu0 0.0
  %714 = vmatprep.subr.mxu0 0.0
  %715 = vmatpush1.msra.mxu0 0.0
  %716 = vmatprep.subr.mxu0 0.0
  %717 = vmatpush1.msra.mxu0 %v39
  %718 = vmatprep.subr.mxu0 0.0
  %719 = vmatpush2.msra.mxu0 0.0
  %720 = vmatprep.subr.mxu0 0.0
  %721 = vmatpush2.msra.mxu0 0.0
  %722 = vmatprep.subr.mxu0 0.0
  %723 = vmatpush2.msra.mxu0 0.0
  %724 = vmatprep.subr.mxu0 0.0
  %725 = vmatpush2.msra.mxu0 0.0
  %726 = vmatprep.subr.mxu0 0.0
  %727 = vmatpush2.msra.mxu0 0.0
  %728 = vmatprep.subr.mxu0 0.0
  %729 = vmatpush2.msra.mxu0 0.0
  %730 = vmatprep.subr.mxu0 0.0
  %731 = vmatpush2.msra.mxu0 0.0
  %732 = vmatprep.subr.mxu0 0.0
  %733 = vmatpush2.msra.mxu0 0.0
  %734 = vmatprep.subr.mxu0 0.0
  %735 = vmatpush2.msra.mxu0 0.0
  %736 = vmatprep.subr.mxu0 0.0
  %737 = vmatpush2.msra.mxu0 0.0
  %738 = vmatprep.subr.mxu0 0.0
  %739 = vmatpush2.msra.mxu0 0.0
  %740 = vmatprep.subr.mxu0 0.0
  %741 = vmatpush2.msra.mxu0 0.0
  %742 = vmatprep.subr.mxu0 0.0
  %743 = vmatpush2.msra.mxu0 0.0
  %744 = vmatprep.subr.mxu0 0.0
  %745 = vmatpush2.msra.mxu0 0.0
  %746 = vmatprep.subr.mxu0 0.0
  %747 = vmatpush2.msra.mxu0 0.0
  %748 = vmatprep.subr.mxu0 0.0
  %749 = vmatpush2.msra.mxu0 0.0
  %750 = vmatprep.mubr.f32.mxu0 0.0
  %751 = vmatmul.mubr.f32.gmra.mxu0 %v639
  %v752 = vpop.f32.mrf.mxu0
  %v753 = vadd.f32 %v622, %v752
  %v754 = vpop.f32.mrf.mxu0
  %755 = vmatprep.mubr.f32.mxu0 0.0
  %756 = vmatmul.mubr.f32.gmra.mxu0 %v642
  %v757 = vpop.f32.mrf.mxu0
  %v758 = vadd.f32 %v623, %v757
  %v759 = vpop.f32.mrf.mxu0
  %760 = vmatprep.mubr.f32.mxu0 0.0
  %761 = vmatmul.mubr.f32.gmra.mxu0 %v645
  %v762 = vpop.f32.mrf.mxu0
  %v763 = vadd.f32 %v624, %v762
  %v764 = vpop.f32.mrf.mxu0
  %765 = vmatprep.mubr.f32.mxu0 0.0
  %766 = vmatmul.mubr.f32.gmra.mxu0 %v648
  %v767 = vpop.f32.mrf.mxu0
  %v768 = vadd.f32 %v625, %v767
  %v769 = vpop.f32.mrf.mxu0
  %770 = vmatprep.mubr.f32.mxu0 0.0
  %771 = vmatmul.mubr.f32.gmra.mxu0 %v651
  %v772 = vpop.f32.mrf.mxu0
  %v773 = vadd.f32 %v626, %v772
  %v774 = vpop.f32.mrf.mxu0
  %775 = vmatprep.mubr.f32.mxu0 0.0
  %776 = vmatmul.mubr.f32.gmra.mxu0 %v654
  %v777 = vpop.f32.mrf.mxu0
  %v778 = vadd.f32 %v627, %v777
  %v779 = vpop.f32.mrf.mxu0
  %780 = vmatprep.mubr.f32.mxu0 0.0
  %781 = vmatmul.mubr.f32.gmra.mxu0 %v657
  %v782 = vpop.f32.mrf.mxu0
  %v783 = vadd.f32 %v628, %v782
  %v784 = vpop.f32.mrf.mxu0
  %785 = vmatprep.mubr.f32.mxu0 0.0
  %786 = vmatmul.mubr.f32.gmra.mxu0 %v660
  %v787 = vpop.f32.mrf.mxu0
  %v788 = vadd.f32 %v629, %v787
  %v789 = vpop.f32.mrf.mxu0
  %790 = vmatprep.mubr.f32.mxu0 0.0
  %791 = vmatmul.mubr.f32.gmra.mxu0 %v663
  %v792 = vpop.f32.mrf.mxu0
  %v793 = vadd.f32 %v630, %v792
  %v794 = vpop.f32.mrf.mxu0
  %795 = vmatprep.mubr.f32.mxu0 0.0
  %796 = vmatmul.mubr.f32.gmra.mxu0 %v666
  %v797 = vpop.f32.mrf.mxu0
  %v798 = vadd.f32 %v631, %v797
  %v799 = vpop.f32.mrf.mxu0
  %800 = vmatprep.mubr.f32.mxu0 0.0
  %801 = vmatmul.mubr.f32.gmra.mxu0 %v669
  %v802 = vpop.f32.mrf.mxu0
  %v803 = vadd.f32 %v632, %v802
  %v804 = vpop.f32.mrf.mxu0
  %805 = vmatprep.mubr.f32.mxu0 0.0
  %806 = vmatmul.mubr.f32.gmra.mxu0 %v672
  %v807 = vpop.f32.mrf.mxu0
  %v808 = vadd.f32 %v633, %v807
  %v809 = vpop.f32.mrf.mxu0
  %810 = vmatprep.mubr.f32.mxu0 0.0
  %811 = vmatmul.mubr.f32.gmra.mxu0 %v675
  %v812 = vpop.f32.mrf.mxu0
  %v813 = vadd.f32 %v634, %v812
  %v814 = vpop.f32.mrf.mxu0
  %815 = vmatprep.mubr.f32.mxu0 0.0
  %816 = vmatmul.mubr.f32.gmra.mxu0 %v678
  %v817 = vpop.f32.mrf.mxu0
  %v818 = vadd.f32 %v635, %v817
  %v819 = vpop.f32.mrf.mxu0
  %820 = vmatprep.mubr.f32.mxu0 0.0
  %821 = vmatmul.mubr.f32.gmra.mxu0 %v681
  %v822 = vpop.f32.mrf.mxu0
  %v823 = vadd.f32 %v636, %v822
  %v824 = vpop.f32.mrf.mxu0
  %825 = vmatprep.mubr.f32.mxu0 0.0
  %826 = vmatmul.mubr.f32.gmra.mxu0 %v684
  %v827 = vpop.f32.mrf.mxu0
  %v828 = vadd.f32 %v637, %v827
  %v829 = vpop.f32.mrf.mxu0
  %830 = vdwg.mxu0
  %v831 = vmax.f32 %v753, 0.0
  %v832 = vmax.f32 %v758, 0.0
  %v833 = vmax.f32 %v763, 0.0
  %v834 = vmax.f32 %v768, 0.0
  %v835 = vmax.f32 %v773, 0.0
  %v836 = vmax.f32 %v778, 0.0
  %v837 = vmax.f32 %v783, 0.0
  %v838 = vmax.f32 %v788, 0.0
  %v839 = vmax.f32 %v793, 0.0
  %v840 = vmax.f32 %v798, 0.0
  %v841 = vmax.f32 %v803, 0.0
  %v842 = vmax.f32 %v808, 0.0
  %v843 = vmax.f32 %v813, 0.0
  %v844 = vmax.f32 %v818, 0.0
  %v845 = vmax.f32 %v823, 0.0
  %v846 = vmax.f32 %v828, 0.0
  %v847 = vld [vmem:[%s3 + $0x8] sm:$0xff]
  %v849 = vsel %vm56, %v831, 0
  %v852 = vsel %vm56, %v832, 0
  %v855 = vsel %vm56, %v833, 0
  %v858 = vsel %vm56, %v834, 0
  %v861 = vsel %vm56, %v835, 0
  %v864 = vsel %vm56, %v836, 0
  %v867 = vsel %vm56, %v837, 0
  %v870 = vsel %vm56, %v838, 0
  %v873 = vsel %vm56, %v839, 0
  %v876 = vsel %vm56, %v840, 0
  %v879 = vsel %vm56, %v841, 0
  %v882 = vsel %vm56, %v842, 0
  %v885 = vsel %vm56, %v843, 0
  %v888 = vsel %vm56, %v844, 0
  %v891 = vsel %vm56, %v845, 0
  %v894 = vsel %vm56, %v846, 0
  %896 = vmatprep.subr.mxu0 0.0
  %897 = vmatpush1.msra.mxu0 0.0
  %898 = vmatprep.subr.mxu0 0.0
  %899 = vmatpush1.msra.mxu0 0.0
  %900 = vmatprep.subr.mxu0 0.0
  %901 = vmatpush1.msra.mxu0 0.0
  %902 = vmatprep.subr.mxu0 0.0
  %903 = vmatpush1.msra.mxu0 0.0
  %904 = vmatprep.subr.mxu0 0.0
  %905 = vmatpush1.msra.mxu0 0.0
  %906 = vmatprep.subr.mxu0 0.0
  %907 = vmatpush1.msra.mxu0 0.0
  %908 = vmatprep.subr.mxu0 0.0
  %909 = vmatpush1.msra.mxu0 0.0
  %910 = vmatprep.subr.mxu0 0.0
  %911 = vmatpush1.msra.mxu0 0.0
  %912 = vmatprep.subr.mxu0 0.0
  %913 = vmatpush1.msra.mxu0 0.0
  %914 = vmatprep.subr.mxu0 0.0
  %915 = vmatpush1.msra.mxu0 0.0
  %916 = vmatprep.subr.mxu0 0.0
  %917 = vmatpush1.msra.mxu0 0.0
  %918 = vmatprep.subr.mxu0 0.0
  %919 = vmatpush1.msra.mxu0 0.0
  %920 = vmatprep.subr.mxu0 0.0
  %921 = vmatpush1.msra.mxu0 0.0
  %922 = vmatprep.subr.mxu0 0.0
  %923 = vmatpush1.msra.mxu0 0.0
  %924 = vmatprep.subr.mxu0 0.0
  %925 = vmatpush1.msra.mxu0 0.0
  %926 = vmatprep.subr.mxu0 0.0
  %927 = vmatpush1.msra.mxu0 %v847
  %928 = vmatprep.subr.mxu0 0.0
  %929 = vmatpush2.msra.mxu0 0.0
  %930 = vmatprep.subr.mxu0 0.0
  %931 = vmatpush2.msra.mxu0 0.0
  %932 = vmatprep.subr.mxu0 0.0
  %933 = vmatpush2.msra.mxu0 0.0
  %934 = vmatprep.subr.mxu0 0.0
  %935 = vmatpush2.msra.mxu0 0.0
  %936 = vmatprep.subr.mxu0 0.0
  %937 = vmatpush2.msra.mxu0 0.0
  %938 = vmatprep.subr.mxu0 0.0
  %939 = vmatpush2.msra.mxu0 0.0
  %940 = vmatprep.subr.mxu0 0.0
  %941 = vmatpush2.msra.mxu0 0.0
  %942 = vmatprep.subr.mxu0 0.0
  %943 = vmatpush2.msra.mxu0 0.0
  %944 = vmatprep.subr.mxu0 0.0
  %945 = vmatpush2.msra.mxu0 0.0
  %946 = vmatprep.subr.mxu0 0.0
  %947 = vmatpush2.msra.mxu0 0.0
  %948 = vmatprep.subr.mxu0 0.0
  %949 = vmatpush2.msra.mxu0 0.0
  %950 = vmatprep.subr.mxu0 0.0
  %951 = vmatpush2.msra.mxu0 0.0
  %952 = vmatprep.subr.mxu0 0.0
  %953 = vmatpush2.msra.mxu0 0.0
  %954 = vmatprep.subr.mxu0 0.0
  %955 = vmatpush2.msra.mxu0 0.0
  %956 = vmatprep.subr.mxu0 0.0
  %957 = vmatpush2.msra.mxu0 0.0
  %958 = vmatprep.subr.mxu0 0.0
  %959 = vmatpush2.msra.mxu0 0.0
  %960 = vmatprep.mubr.f32.mxu0 0.0
  %961 = vmatmul.mubr.f32.gmra.mxu0 %v849
  %v962 = vpop.f32.mrf.mxu0
  %v963 = vadd.f32 0.0, %v962
  %v964 = vpop.f32.mrf.mxu0
  %965 = vmatprep.mubr.f32.mxu0 0.0
  %966 = vmatmul.mubr.f32.gmra.mxu0 %v852
  %v967 = vpop.f32.mrf.mxu0
  %v968 = vadd.f32 0.0, %v967
  %v969 = vpop.f32.mrf.mxu0
  %970 = vmatprep.mubr.f32.mxu0 0.0
  %971 = vmatmul.mubr.f32.gmra.mxu0 %v855
  %v972 = vpop.f32.mrf.mxu0
  %v973 = vadd.f32 0.0, %v972
  %v974 = vpop.f32.mrf.mxu0
  %975 = vmatprep.mubr.f32.mxu0 0.0
  %976 = vmatmul.mubr.f32.gmra.mxu0 %v858
  %v977 = vpop.f32.mrf.mxu0
  %v978 = vadd.f32 0.0, %v977
  %v979 = vpop.f32.mrf.mxu0
  %980 = vmatprep.mubr.f32.mxu0 0.0
  %981 = vmatmul.mubr.f32.gmra.mxu0 %v861
  %v982 = vpop.f32.mrf.mxu0
  %v983 = vadd.f32 0.0, %v982
  %v984 = vpop.f32.mrf.mxu0
  %985 = vmatprep.mubr.f32.mxu0 0.0
  %986 = vmatmul.mubr.f32.gmra.mxu0 %v864
  %v987 = vpop.f32.mrf.mxu0
  %v988 = vadd.f32 0.0, %v987
  %v989 = vpop.f32.mrf.mxu0
  %990 = vmatprep.mubr.f32.mxu0 0.0
  %991 = vmatmul.mubr.f32.gmra.mxu0 %v867
  %v992 = vpop.f32.mrf.mxu0
  %v993 = vadd.f32 0.0, %v992
  %v994 = vpop.f32.mrf.mxu0
  %995 = vmatprep.mubr.f32.mxu0 0.0
  %996 = vmatmul.mubr.f32.gmra.mxu0 %v870
  %v997 = vpop.f32.mrf.mxu0
  %v998 = vadd.f32 0.0, %v997
  %v999 = vpop.f32.mrf.mxu0
  %1000 = vmatprep.mubr.f32.mxu0 0.0
  %1001 = vmatmul.mubr.f32.gmra.mxu0 %v873
  %v1002 = vpop.f32.mrf.mxu0
  %v1003 = vadd.f32 0.0, %v1002
  %v1004 = vpop.f32.mrf.mxu0
  %1005 = vmatprep.mubr.f32.mxu0 0.0
  %1006 = vmatmul.mubr.f32.gmra.mxu0 %v876
  %v1007 = vpop.f32.mrf.mxu0
  %v1008 = vadd.f32 0.0, %v1007
  %v1009 = vpop.f32.mrf.mxu0
  %1010 = vmatprep.mubr.f32.mxu0 0.0
  %1011 = vmatmul.mubr.f32.gmra.mxu0 %v879
  %v1012 = vpop.f32.mrf.mxu0
  %v1013 = vadd.f32 0.0, %v1012
  %v1014 = vpop.f32.mrf.mxu0
  %1015 = vmatprep.mubr.f32.mxu0 0.0
  %1016 = vmatmul.mubr.f32.gmra.mxu0 %v882
  %v1017 = vpop.f32.mrf.mxu0
  %v1018 = vadd.f32 0.0, %v1017
  %v1019 = vpop.f32.mrf.mxu0
  %1020 = vmatprep.mubr.f32.mxu0 0.0
  %1021 = vmatmul.mubr.f32.gmra.mxu0 %v885
  %v1022 = vpop.f32.mrf.mxu0
  %v1023 = vadd.f32 0.0, %v1022
  %v1024 = vpop.f32.mrf.mxu0
  %1025 = vmatprep.mubr.f32.mxu0 0.0
  %1026 = vmatmul.mubr.f32.gmra.mxu0 %v888
  %v1027 = vpop.f32.mrf.mxu0
  %v1028 = vadd.f32 0.0, %v1027
  %v1029 = vpop.f32.mrf.mxu0
  %1030 = vmatprep.mubr.f32.mxu0 0.0
  %1031 = vmatmul.mubr.f32.gmra.mxu0 %v891
  %v1032 = vpop.f32.mrf.mxu0
  %v1033 = vadd.f32 0.0, %v1032
  %v1034 = vpop.f32.mrf.mxu0
  %1035 = vmatprep.mubr.f32.mxu0 0.0
  %1036 = vmatmul.mubr.f32.gmra.mxu0 %v894
  %v1037 = vpop.f32.mrf.mxu0
  %v1038 = vadd.f32 0.0, %v1037
  %v1039 = vpop.f32.mrf.mxu0
  %1040 = vdwg.mxu0
  %v1041 = vadd.f32 %v528, %v963
  %v1042 = vadd.f32 %v533, %v968
  %v1043 = vadd.f32 %v538, %v973
  %v1044 = vadd.f32 %v543, %v978
  %v1045 = vadd.f32 %v548, %v983
  %v1046 = vadd.f32 %v553, %v988
  %v1047 = vadd.f32 %v558, %v993
  %v1048 = vadd.f32 %v563, %v998
  %v1049 = vadd.f32 %v568, %v1003
  %v1050 = vadd.f32 %v573, %v1008
  %v1051 = vadd.f32 %v578, %v1013
  %v1052 = vadd.f32 %v583, %v1018
  %v1053 = vadd.f32 %v588, %v1023
  %v1054 = vadd.f32 %v593, %v1028
  %v1055 = vadd.f32 %v598, %v1033
  %v1056 = vadd.f32 %v603, %v1038
  %v1057 = vld [vmem:[%s4 + $0x8] sm:$0xff]
  %1058 = vmatprep.subr.mxu0 0.0
  %1059 = vmatpush1.msra.mxu0 0.0
  %1060 = vmatprep.subr.mxu0 0.0
  %1061 = vmatpush1.msra.mxu0 0.0
  %1062 = vmatprep.subr.mxu0 0.0
  %1063 = vmatpush1.msra.mxu0 0.0
  %1064 = vmatprep.subr.mxu0 0.0
  %1065 = vmatpush1.msra.mxu0 0.0
  %1066 = vmatprep.subr.mxu0 0.0
  %1067 = vmatpush1.msra.mxu0 0.0
  %1068 = vmatprep.subr.mxu0 0.0
  %1069 = vmatpush1.msra.mxu0 0.0
  %1070 = vmatprep.subr.mxu0 0.0
  %1071 = vmatpush1.msra.mxu0 0.0
  %1072 = vmatprep.subr.mxu0 0.0
  %1073 = vmatpush1.msra.mxu0 0.0
  %1074 = vmatprep.subr.mxu0 0.0
  %1075 = vmatpush1.msra.mxu0 0.0
  %1076 = vmatprep.subr.mxu0 0.0
  %1077 = vmatpush1.msra.mxu0 0.0
  %1078 = vmatprep.subr.mxu0 0.0
  %1079 = vmatpush1.msra.mxu0 0.0
  %1080 = vmatprep.subr.mxu0 0.0
  %1081 = vmatpush1.msra.mxu0 0.0
  %1082 = vmatprep.subr.mxu0 0.0
  %1083 = vmatpush1.msra.mxu0 0.0
  %1084 = vmatprep.subr.mxu0 0.0
  %1085 = vmatpush1.msra.mxu0 0.0
  %1086 = vmatprep.subr.mxu0 0.0
  %1087 = vmatpush1.msra.mxu0 0.0
  %1088 = vmatprep.subr.mxu0 0.0
  %1089 = vmatpush1.msra.mxu0 %v1057
  %1090 = vmatprep.subr.mxu0 0.0
  %1091 = vmatpush2.msra.mxu0 0.0
  %1092 = vmatprep.subr.mxu0 0.0
  %1093 = vmatpush2.msra.mxu0 0.0
  %1094 = vmatprep.subr.mxu0 0.0
  %1095 = vmatpush2.msra.mxu0 0.0
  %1096 = vmatprep.subr.mxu0 0.0
  %1097 = vmatpush2.msra.mxu0 0.0
  %1098 = vmatprep.subr.mxu0 0.0
  %1099 = vmatpush2.msra.mxu0 0.0
  %1100 = vmatprep.subr.mxu0 0.0
  %1101 = vmatpush2.msra.mxu0 0.0
  %1102 = vmatprep.subr.mxu0 0.0
  %1103 = vmatpush2.msra.mxu0 0.0
  %1104 = vmatprep.subr.mxu0 0.0
  %1105 = vmatpush2.msra.mxu0 0.0
  %1106 = vmatprep.subr.mxu0 0.0
  %1107 = vmatpush2.msra.mxu0 0.0
  %1108 = vmatprep.subr.mxu0 0.0
  %1109 = vmatpush2.msra.mxu0 0.0
  %1110 = vmatprep.subr.mxu0 0.0
  %1111 = vmatpush2.msra.mxu0 0.0
  %1112 = vmatprep.subr.mxu0 0.0
  %1113 = vmatpush2.msra.mxu0 0.0
  %1114 = vmatprep.subr.mxu0 0.0
  %1115 = vmatpush2.msra.mxu0 0.0
  %1116 = vmatprep.subr.mxu0 0.0
  %1117 = vmatpush2.msra.mxu0 0.0
  %1118 = vmatprep.subr.mxu0 0.0
  %1119 = vmatpush2.msra.mxu0 0.0
  %1120 = vmatprep.subr.mxu0 0.0
  %1121 = vmatpush2.msra.mxu0 0.0
  %1122 = vmatprep.mubr.f32.mxu0 0.0
  %1123 = vmatmul.mubr.f32.gmra.mxu0 %v639
  %v1124 = vpop.f32.mrf.mxu0
  %v1125 = vadd.f32 0.0, %v1124
  %v1126 = vpop.f32.mrf.mxu0
  %1127 = vmatprep.mubr.f32.mxu0 0.0
  %1128 = vmatmul.mubr.f32.gmra.mxu0 %v642
  %v1129 = vpop.f32.mrf.mxu0
  %v1130 = vadd.f32 0.0, %v1129
  %v1131 = vpop.f32.mrf.mxu0
  %1132 = vmatprep.mubr.f32.mxu0 0.0
  %1133 = vmatmul.mubr.f32.gmra.mxu0 %v645
  %v1134 = vpop.f32.mrf.mxu0
  %v1135 = vadd.f32 0.0, %v1134
  %v1136 = vpop.f32.mrf.mxu0
  %1137 = vmatprep.mubr.f32.mxu0 0.0
  %1138 = vmatmul.mubr.f32.gmra.mxu0 %v648
  %v1139 = vpop.f32.mrf.mxu0
  %v1140 = vadd.f32 0.0, %v1139
  %v1141 = vpop.f32.mrf.mxu0
  %1142 = vmatprep.mubr.f32.mxu0 0.0
  %1143 = vmatmul.mubr.f32.gmra.mxu0 %v651
  %v1144 = vpop.f32.mrf.mxu0
  %v1145 = vadd.f32 0.0, %v1144
  %v1146 = vpop.f32.mrf.mxu0
  %1147 = vmatprep.mubr.f32.mxu0 0.0
  %1148 = vmatmul.mubr.f32.gmra.mxu0 %v654
  %v1149 = vpop.f32.mrf.mxu0
  %v1150 = vadd.f32 0.0, %v1149
  %v1151 = vpop.f32.mrf.mxu0
  %1152 = vmatprep.mubr.f32.mxu0 0.0
  %1153 = vmatmul.mubr.f32.gmra.mxu0 %v657
  %v1154 = vpop.f32.mrf.mxu0
  %v1155 = vadd.f32 0.0, %v1154
  %v1156 = vpop.f32.mrf.mxu0
  %1157 = vmatprep.mubr.f32.mxu0 0.0
  %1158 = vmatmul.mubr.f32.gmra.mxu0 %v660
  %v1159 = vpop.f32.mrf.mxu0
  %v1160 = vadd.f32 0.0, %v1159
  %v1161 = vpop.f32.mrf.mxu0
  %1162 = vmatprep.mubr.f32.mxu0 0.0
  %1163 = vmatmul.mubr.f32.gmra.mxu0 %v663
  %v1164 = vpop.f32.mrf.mxu0
  %v1165 = vadd.f32 0.0, %v1164
  %v1166 = vpop.f32.mrf.mxu0
  %1167 = vmatprep.mubr.f32.mxu0 0.0
  %1168 = vmatmul.mubr.f32.gmra.mxu0 %v666
  %v1169 = vpop.f32.mrf.mxu0
  %v1170 = vadd.f32 0.0, %v1169
  %v1171 = vpop.f32.mrf.mxu0
  %1172 = vmatprep.mubr.f32.mxu0 0.0
  %1173 = vmatmul.mubr.f32.gmra.mxu0 %v669
  %v1174 = vpop.f32.mrf.mxu0
  %v1175 = vadd.f32 0.0, %v1174
  %v1176 = vpop.f32.mrf.mxu0
  %1177 = vmatprep.mubr.f32.mxu0 0.0
  %1178 = vmatmul.mubr.f32.gmra.mxu0 %v672
  %v1179 = vpop.f32.mrf.mxu0
  %v1180 = vadd.f32 0.0, %v1179
  %v1181 = vpop.f32.mrf.mxu0
  %1182 = vmatprep.mubr.f32.mxu0 0.0
  %1183 = vmatmul.mubr.f32.gmra.mxu0 %v675
  %v1184 = vpop.f32.mrf.mxu0
  %v1185 = vadd.f32 0.0, %v1184
  %v1186 = vpop.f32.mrf.mxu0
  %1187 = vmatprep.mubr.f32.mxu0 0.0
  %1188 = vmatmul.mubr.f32.gmra.mxu0 %v678
  %v1189 = vpop.f32.mrf.mxu0
  %v1190 = vadd.f32 0.0, %v1189
  %v1191 = vpop.f32.mrf.mxu0
  %1192 = vmatprep.mubr.f32.mxu0 0.0
  %1193 = vmatmul.mubr.f32.gmra.mxu0 %v681
  %v1194 = vpop.f32.mrf.mxu0
  %v1195 = vadd.f32 0.0, %v1194
  %v1196 = vpop.f32.mrf.mxu0
  %1197 = vmatprep.mubr.f32.mxu0 0.0
  %1198 = vmatmul.mubr.f32.gmra.mxu0 %v684
  %v1199 = vpop.f32.mrf.mxu0
  %v1200 = vadd.f32 0.0, %v1199
  %v1201 = vpop.f32.mrf.mxu0
  %1202 = vdwg.mxu0
  %v1203 = vadd.f32 %v1041, %v1125
  %v1204 = vadd.f32 %v1042, %v1130
  %v1205 = vadd.f32 %v1043, %v1135
  %v1206 = vadd.f32 %v1044, %v1140
  %v1207 = vadd.f32 %v1045, %v1145
  %v1208 = vadd.f32 %v1046, %v1150
  %v1209 = vadd.f32 %v1047, %v1155
  %v1210 = vadd.f32 %v1048, %v1160
  %v1211 = vadd.f32 %v1049, %v1165
  %v1212 = vadd.f32 %v1050, %v1170
  %v1213 = vadd.f32 %v1051, %v1175
  %v1214 = vadd.f32 %v1052, %v1180
  %v1215 = vadd.f32 %v1053, %v1185
  %v1216 = vadd.f32 %v1054, %v1190
  %v1217 = vadd.f32 %v1055, %v1195
  %v1218 = vadd.f32 %v1056, %v1200
  %v1219 = vld [vmem:[%s0 + $0x100] sm:$0xff]
  %v1220 = vld [vmem:[%s0 + $0x108] sm:$0xff]
  %v1221 = vld [vmem:[%s0 + $0x110] sm:$0xff]
  %v1222 = vld [vmem:[%s0 + $0x118] sm:$0xff]
  %v1223 = vld [vmem:[%s0 + $0x120] sm:$0xff]
  %v1224 = vld [vmem:[%s0 + $0x128] sm:$0xff]
  %v1225 = vld [vmem:[%s0 + $0x130] sm:$0xff]
  %v1226 = vld [vmem:[%s0 + $0x138] sm:$0xff]
  %v1227 = vld [vmem:[%s0 + $0x140] sm:$0xff]
  %v1228 = vld [vmem:[%s0 + $0x148] sm:$0xff]
  %v1229 = vld [vmem:[%s0 + $0x150] sm:$0xff]
  %v1230 = vld [vmem:[%s0 + $0x158] sm:$0xff]
  %v1231 = vld [vmem:[%s0 + $0x160] sm:$0xff]
  %v1232 = vld [vmem:[%s0 + $0x168] sm:$0xff]
  %v1233 = vld [vmem:[%s0 + $0x170] sm:$0xff]
  %v1234 = vld [vmem:[%s0 + $0x178] sm:$0xff]
  %v1235 = vld [vmem:[%s1 + $0x100] sm:$0xff]
  %v1236 = vld [vmem:[%s1 + $0x108] sm:$0xff]
  %v1237 = vld [vmem:[%s1 + $0x110] sm:$0xff]
  %v1238 = vld [vmem:[%s1 + $0x118] sm:$0xff]
  %v1239 = vld [vmem:[%s1 + $0x120] sm:$0xff]
  %v1240 = vld [vmem:[%s1 + $0x128] sm:$0xff]
  %v1241 = vld [vmem:[%s1 + $0x130] sm:$0xff]
  %v1242 = vld [vmem:[%s1 + $0x138] sm:$0xff]
  %v1243 = vld [vmem:[%s1 + $0x140] sm:$0xff]
  %v1244 = vld [vmem:[%s1 + $0x148] sm:$0xff]
  %v1245 = vld [vmem:[%s1 + $0x150] sm:$0xff]
  %v1246 = vld [vmem:[%s1 + $0x158] sm:$0xff]
  %v1247 = vld [vmem:[%s1 + $0x160] sm:$0xff]
  %v1248 = vld [vmem:[%s1 + $0x168] sm:$0xff]
  %v1249 = vld [vmem:[%s1 + $0x170] sm:$0xff]
  %v1250 = vld [vmem:[%s1 + $0x178] sm:$0xff]
  %v1252 = vsel %vm56, %v1219, 0
  %v1255 = vsel %vm56, %v1220, 0
  %v1258 = vsel %vm56, %v1221, 0
  %v1261 = vsel %vm56, %v1222, 0
  %v1264 = vsel %vm56, %v1223, 0
  %v1267 = vsel %vm56, %v1224, 0
  %v1270 = vsel %vm56, %v1225, 0
  %v1273 = vsel %vm56, %v1226, 0
  %v1276 = vsel %vm56, %v1227, 0
  %v1279 = vsel %vm56, %v1228, 0
  %v1282 = vsel %vm56, %v1229, 0
  %v1285 = vsel %vm56, %v1230, 0
  %v1288 = vsel %vm56, %v1231, 0
  %v1291 = vsel %vm56, %v1232, 0
  %v1294 = vsel %vm56, %v1233, 0
  %v1297 = vsel %vm56, %v1234, 0
  %1299 = vmatprep.subr.mxu0 0.0
  %1300 = vmatpush1.msra.mxu0 0.0
  %1301 = vmatprep.subr.mxu0 0.0
  %1302 = vmatpush1.msra.mxu0 0.0
  %1303 = vmatprep.subr.mxu0 0.0
  %1304 = vmatpush1.msra.mxu0 0.0
  %1305 = vmatprep.subr.mxu0 0.0
  %1306 = vmatpush1.msra.mxu0 0.0
  %1307 = vmatprep.subr.mxu0 0.0
  %1308 = vmatpush1.msra.mxu0 0.0
  %1309 = vmatprep.subr.mxu0 0.0
  %1310 = vmatpush1.msra.mxu0 0.0
  %1311 = vmatprep.subr.mxu0 0.0
  %1312 = vmatpush1.msra.mxu0 0.0
  %1313 = vmatprep.subr.mxu0 0.0
  %1314 = vmatpush1.msra.mxu0 0.0
  %1315 = vmatprep.subr.mxu0 0.0
  %1316 = vmatpush1.msra.mxu0 0.0
  %1317 = vmatprep.subr.mxu0 0.0
  %1318 = vmatpush1.msra.mxu0 0.0
  %1319 = vmatprep.subr.mxu0 0.0
  %1320 = vmatpush1.msra.mxu0 0.0
  %1321 = vmatprep.subr.mxu0 0.0
  %1322 = vmatpush1.msra.mxu0 0.0
  %1323 = vmatprep.subr.mxu0 0.0
  %1324 = vmatpush1.msra.mxu0 0.0
  %1325 = vmatprep.subr.mxu0 0.0
  %1326 = vmatpush1.msra.mxu0 0.0
  %1327 = vmatprep.subr.mxu0 0.0
  %1328 = vmatpush1.msra.mxu0 0.0
  %1329 = vmatprep.subr.mxu0 0.0
  %1330 = vmatpush1.msra.mxu0 %v39
  %1331 = vmatprep.subr.mxu0 0.0
  %1332 = vmatpush2.msra.mxu0 0.0
  %1333 = vmatprep.subr.mxu0 0.0
  %1334 = vmatpush2.msra.mxu0 0.0
  %1335 = vmatprep.subr.mxu0 0.0
  %1336 = vmatpush2.msra.mxu0 0.0
  %1337 = vmatprep.subr.mxu0 0.0
  %1338 = vmatpush2.msra.mxu0 0.0
  %1339 = vmatprep.subr.mxu0 0.0
  %1340 = vmatpush2.msra.mxu0 0.0
  %1341 = vmatprep.subr.mxu0 0.0
  %1342 = vmatpush2.msra.mxu0 0.0
  %1343 = vmatprep.subr.mxu0 0.0
  %1344 = vmatpush2.msra.mxu0 0.0
  %1345 = vmatprep.subr.mxu0 0.0
  %1346 = vmatpush2.msra.mxu0 0.0
  %1347 = vmatprep.subr.mxu0 0.0
  %1348 = vmatpush2.msra.mxu0 0.0
  %1349 = vmatprep.subr.mxu0 0.0
  %1350 = vmatpush2.msra.mxu0 0.0
  %1351 = vmatprep.subr.mxu0 0.0
  %1352 = vmatpush2.msra.mxu0 0.0
  %1353 = vmatprep.subr.mxu0 0.0
  %1354 = vmatpush2.msra.mxu0 0.0
  %1355 = vmatprep.subr.mxu0 0.0
  %1356 = vmatpush2.msra.mxu0 0.0
  %1357 = vmatprep.subr.mxu0 0.0
  %1358 = vmatpush2.msra.mxu0 0.0
  %1359 = vmatprep.subr.mxu0 0.0
  %1360 = vmatpush2.msra.mxu0 0.0
  %1361 = vmatprep.subr.mxu0 0.0
  %1362 = vmatpush2.msra.mxu0 0.0
  %1363 = vmatprep.mubr.f32.mxu0 0.0
  %1364 = vmatmul.mubr.f32.gmra.mxu0 %v1252
  %v1365 = vpop.f32.mrf.mxu0
  %v1366 = vadd.f32 %v1235, %v1365
  %v1367 = vpop.f32.mrf.mxu0
  %1368 = vmatprep.mubr.f32.mxu0 0.0
  %1369 = vmatmul.mubr.f32.gmra.mxu0 %v1255
  %v1370 = vpop.f32.mrf.mxu0
  %v1371 = vadd.f32 %v1236, %v1370
  %v1372 = vpop.f32.mrf.mxu0
  %1373 = vmatprep.mubr.f32.mxu0 0.0
  %1374 = vmatmul.mubr.f32.gmra.mxu0 %v1258
  %v1375 = vpop.f32.mrf.mxu0
  %v1376 = vadd.f32 %v1237, %v1375
  %v1377 = vpop.f32.mrf.mxu0
  %1378 = vmatprep.mubr.f32.mxu0 0.0
  %1379 = vmatmul.mubr.f32.gmra.mxu0 %v1261
  %v1380 = vpop.f32.mrf.mxu0
  %v1381 = vadd.f32 %v1238, %v1380
  %v1382 = vpop.f32.mrf.mxu0
  %1383 = vmatprep.mubr.f32.mxu0 0.0
  %1384 = vmatmul.mubr.f32.gmra.mxu0 %v1264
  %v1385 = vpop.f32.mrf.mxu0
  %v1386 = vadd.f32 %v1239, %v1385
  %v1387 = vpop.f32.mrf.mxu0
  %1388 = vmatprep.mubr.f32.mxu0 0.0
  %1389 = vmatmul.mubr.f32.gmra.mxu0 %v1267
  %v1390 = vpop.f32.mrf.mxu0
  %v1391 = vadd.f32 %v1240, %v1390
  %v1392 = vpop.f32.mrf.mxu0
  %1393 = vmatprep.mubr.f32.mxu0 0.0
  %1394 = vmatmul.mubr.f32.gmra.mxu0 %v1270
  %v1395 = vpop.f32.mrf.mxu0
  %v1396 = vadd.f32 %v1241, %v1395
  %v1397 = vpop.f32.mrf.mxu0
  %1398 = vmatprep.mubr.f32.mxu0 0.0
  %1399 = vmatmul.mubr.f32.gmra.mxu0 %v1273
  %v1400 = vpop.f32.mrf.mxu0
  %v1401 = vadd.f32 %v1242, %v1400
  %v1402 = vpop.f32.mrf.mxu0
  %1403 = vmatprep.mubr.f32.mxu0 0.0
  %1404 = vmatmul.mubr.f32.gmra.mxu0 %v1276
  %v1405 = vpop.f32.mrf.mxu0
  %v1406 = vadd.f32 %v1243, %v1405
  %v1407 = vpop.f32.mrf.mxu0
  %1408 = vmatprep.mubr.f32.mxu0 0.0
  %1409 = vmatmul.mubr.f32.gmra.mxu0 %v1279
  %v1410 = vpop.f32.mrf.mxu0
  %v1411 = vadd.f32 %v1244, %v1410
  %v1412 = vpop.f32.mrf.mxu0
  %1413 = vmatprep.mubr.f32.mxu0 0.0
  %1414 = vmatmul.mubr.f32.gmra.mxu0 %v1282
  %v1415 = vpop.f32.mrf.mxu0
  %v1416 = vadd.f32 %v1245, %v1415
  %v1417 = vpop.f32.mrf.mxu0
  %1418 = vmatprep.mubr.f32.mxu0 0.0
  %1419 = vmatmul.mubr.f32.gmra.mxu0 %v1285
  %v1420 = vpop.f32.mrf.mxu0
  %v1421 = vadd.f32 %v1246, %v1420
  %v1422 = vpop.f32.mrf.mxu0
  %1423 = vmatprep.mubr.f32.mxu0 0.0
  %1424 = vmatmul.mubr.f32.gmra.mxu0 %v1288
  %v1425 = vpop.f32.mrf.mxu0
  %v1426 = vadd.f32 %v1247, %v1425
  %v1427 = vpop.f32.mrf.mxu0
  %1428 = vmatprep.mubr.f32.mxu0 0.0
  %1429 = vmatmul.mubr.f32.gmra.mxu0 %v1291
  %v1430 = vpop.f32.mrf.mxu0
  %v1431 = vadd.f32 %v1248, %v1430
  %v1432 = vpop.f32.mrf.mxu0
  %1433 = vmatprep.mubr.f32.mxu0 0.0
  %1434 = vmatmul.mubr.f32.gmra.mxu0 %v1294
  %v1435 = vpop.f32.mrf.mxu0
  %v1436 = vadd.f32 %v1249, %v1435
  %v1437 = vpop.f32.mrf.mxu0
  %1438 = vmatprep.mubr.f32.mxu0 0.0
  %1439 = vmatmul.mubr.f32.gmra.mxu0 %v1297
  %v1440 = vpop.f32.mrf.mxu0
  %v1441 = vadd.f32 %v1250, %v1440
  %v1442 = vpop.f32.mrf.mxu0
  %1443 = vdwg.mxu0
  %v1444 = vmax.f32 %v1366, 0.0
  %v1445 = vmax.f32 %v1371, 0.0
  %v1446 = vmax.f32 %v1376, 0.0
  %v1447 = vmax.f32 %v1381, 0.0
  %v1448 = vmax.f32 %v1386, 0.0
  %v1449 = vmax.f32 %v1391, 0.0
  %v1450 = vmax.f32 %v1396, 0.0
  %v1451 = vmax.f32 %v1401, 0.0
  %v1452 = vmax.f32 %v1406, 0.0
  %v1453 = vmax.f32 %v1411, 0.0
  %v1454 = vmax.f32 %v1416, 0.0
  %v1455 = vmax.f32 %v1421, 0.0
  %v1456 = vmax.f32 %v1426, 0.0
  %v1457 = vmax.f32 %v1431, 0.0
  %v1458 = vmax.f32 %v1436, 0.0
  %v1459 = vmax.f32 %v1441, 0.0
  %v1460 = vld [vmem:[%s3 + $0x10] sm:$0xff]
  %v1462 = vsel %vm56, %v1444, 0
  %v1465 = vsel %vm56, %v1445, 0
  %v1468 = vsel %vm56, %v1446, 0
  %v1471 = vsel %vm56, %v1447, 0
  %v1474 = vsel %vm56, %v1448, 0
  %v1477 = vsel %vm56, %v1449, 0
  %v1480 = vsel %vm56, %v1450, 0
  %v1483 = vsel %vm56, %v1451, 0
  %v1486 = vsel %vm56, %v1452, 0
  %v1489 = vsel %vm56, %v1453, 0
  %v1492 = vsel %vm56, %v1454, 0
  %v1495 = vsel %vm56, %v1455, 0
  %v1498 = vsel %vm56, %v1456, 0
  %v1501 = vsel %vm56, %v1457, 0
  %v1504 = vsel %vm56, %v1458, 0
  %v1507 = vsel %vm56, %v1459, 0
  %1509 = vmatprep.subr.mxu0 0.0
  %1510 = vmatpush1.msra.mxu0 0.0
  %1511 = vmatprep.subr.mxu0 0.0
  %1512 = vmatpush1.msra.mxu0 0.0
  %1513 = vmatprep.subr.mxu0 0.0
  %1514 = vmatpush1.msra.mxu0 0.0
  %1515 = vmatprep.subr.mxu0 0.0
  %1516 = vmatpush1.msra.mxu0 0.0
  %1517 = vmatprep.subr.mxu0 0.0
  %1518 = vmatpush1.msra.mxu0 0.0
  %1519 = vmatprep.subr.mxu0 0.0
  %1520 = vmatpush1.msra.mxu0 0.0
  %1521 = vmatprep.subr.mxu0 0.0
  %1522 = vmatpush1.msra.mxu0 0.0
  %1523 = vmatprep.subr.mxu0 0.0
  %1524 = vmatpush1.msra.mxu0 0.0
  %1525 = vmatprep.subr.mxu0 0.0
  %1526 = vmatpush1.msra.mxu0 0.0
  %1527 = vmatprep.subr.mxu0 0.0
  %1528 = vmatpush1.msra.mxu0 0.0
  %1529 = vmatprep.subr.mxu0 0.0
  %1530 = vmatpush1.msra.mxu0 0.0
  %1531 = vmatprep.subr.mxu0 0.0
  %1532 = vmatpush1.msra.mxu0 0.0
  %1533 = vmatprep.subr.mxu0 0.0
  %1534 = vmatpush1.msra.mxu0 0.0
  %1535 = vmatprep.subr.mxu0 0.0
  %1536 = vmatpush1.msra.mxu0 0.0
  %1537 = vmatprep.subr.mxu0 0.0
  %1538 = vmatpush1.msra.mxu0 0.0
  %1539 = vmatprep.subr.mxu0 0.0
  %1540 = vmatpush1.msra.mxu0 %v1460
  %1541 = vmatprep.subr.mxu0 0.0
  %1542 = vmatpush2.msra.mxu0 0.0
  %1543 = vmatprep.subr.mxu0 0.0
  %1544 = vmatpush2.msra.mxu0 0.0
  %1545 = vmatprep.subr.mxu0 0.0
  %1546 = vmatpush2.msra.mxu0 0.0
  %1547 = vmatprep.subr.mxu0 0.0
  %1548 = vmatpush2.msra.mxu0 0.0
  %1549 = vmatprep.subr.mxu0 0.0
  %1550 = vmatpush2.msra.mxu0 0.0
  %1551 = vmatprep.subr.mxu0 0.0
  %1552 = vmatpush2.msra.mxu0 0.0
  %1553 = vmatprep.subr.mxu0 0.0
  %1554 = vmatpush2.msra.mxu0 0.0
  %1555 = vmatprep.subr.mxu0 0.0
  %1556 = vmatpush2.msra.mxu0 0.0
  %1557 = vmatprep.subr.mxu0 0.0
  %1558 = vmatpush2.msra.mxu0 0.0
  %1559 = vmatprep.subr.mxu0 0.0
  %1560 = vmatpush2.msra.mxu0 0.0
  %1561 = vmatprep.subr.mxu0 0.0
  %1562 = vmatpush2.msra.mxu0 0.0
  %1563 = vmatprep.subr.mxu0 0.0
  %1564 = vmatpush2.msra.mxu0 0.0
  %1565 = vmatprep.subr.mxu0 0.0
  %1566 = vmatpush2.msra.mxu0 0.0
  %1567 = vmatprep.subr.mxu0 0.0
  %1568 = vmatpush2.msra.mxu0 0.0
  %1569 = vmatprep.subr.mxu0 0.0
  %1570 = vmatpush2.msra.mxu0 0.0
  %1571 = vmatprep.subr.mxu0 0.0
  %1572 = vmatpush2.msra.mxu0 0.0
  %1573 = vmatprep.mubr.f32.mxu0 0.0
  %1574 = vmatmul.mubr.f32.gmra.mxu0 %v1462
  %v1575 = vpop.f32.mrf.mxu0
  %v1576 = vadd.f32 0.0, %v1575
  %v1577 = vpop.f32.mrf.mxu0
  %1578 = vmatprep.mubr.f32.mxu0 0.0
  %1579 = vmatmul.mubr.f32.gmra.mxu0 %v1465
  %v1580 = vpop.f32.mrf.mxu0
  %v1581 = vadd.f32 0.0, %v1580
  %v1582 = vpop.f32.mrf.mxu0
  %1583 = vmatprep.mubr.f32.mxu0 0.0
  %1584 = vmatmul.mubr.f32.gmra.mxu0 %v1468
  %v1585 = vpop.f32.mrf.mxu0
  %v1586 = vadd.f32 0.0, %v1585
  %v1587 = vpop.f32.mrf.mxu0
  %1588 = vmatprep.mubr.f32.mxu0 0.0
  %1589 = vmatmul.mubr.f32.gmra.mxu0 %v1471
  %v1590 = vpop.f32.mrf.mxu0
  %v1591 = vadd.f32 0.0, %v1590
  %v1592 = vpop.f32.mrf.mxu0
  %1593 = vmatprep.mubr.f32.mxu0 0.0
  %1594 = vmatmul.mubr.f32.gmra.mxu0 %v1474
  %v1595 = vpop.f32.mrf.mxu0
  %v1596 = vadd.f32 0.0, %v1595
  %v1597 = vpop.f32.mrf.mxu0
  %1598 = vmatprep.mubr.f32.mxu0 0.0
  %1599 = vmatmul.mubr.f32.gmra.mxu0 %v1477
  %v1600 = vpop.f32.mrf.mxu0
  %v1601 = vadd.f32 0.0, %v1600
  %v1602 = vpop.f32.mrf.mxu0
  %1603 = vmatprep.mubr.f32.mxu0 0.0
  %1604 = vmatmul.mubr.f32.gmra.mxu0 %v1480
  %v1605 = vpop.f32.mrf.mxu0
  %v1606 = vadd.f32 0.0, %v1605
  %v1607 = vpop.f32.mrf.mxu0
  %1608 = vmatprep.mubr.f32.mxu0 0.0
  %1609 = vmatmul.mubr.f32.gmra.mxu0 %v1483
  %v1610 = vpop.f32.mrf.mxu0
  %v1611 = vadd.f32 0.0, %v1610
  %v1612 = vpop.f32.mrf.mxu0
  %1613 = vmatprep.mubr.f32.mxu0 0.0
  %1614 = vmatmul.mubr.f32.gmra.mxu0 %v1486
  %v1615 = vpop.f32.mrf.mxu0
  %v1616 = vadd.f32 0.0, %v1615
  %v1617 = vpop.f32.mrf.mxu0
  %1618 = vmatprep.mubr.f32.mxu0 0.0
  %1619 = vmatmul.mubr.f32.gmra.mxu0 %v1489
  %v1620 = vpop.f32.mrf.mxu0
  %v1621 = vadd.f32 0.0, %v1620
  %v1622 = vpop.f32.mrf.mxu0
  %1623 = vmatprep.mubr.f32.mxu0 0.0
  %1624 = vmatmul.mubr.f32.gmra.mxu0 %v1492
  %v1625 = vpop.f32.mrf.mxu0
  %v1626 = vadd.f32 0.0, %v1625
  %v1627 = vpop.f32.mrf.mxu0
  %1628 = vmatprep.mubr.f32.mxu0 0.0
  %1629 = vmatmul.mubr.f32.gmra.mxu0 %v1495
  %v1630 = vpop.f32.mrf.mxu0
  %v1631 = vadd.f32 0.0, %v1630
  %v1632 = vpop.f32.mrf.mxu0
  %1633 = vmatprep.mubr.f32.mxu0 0.0
  %1634 = vmatmul.mubr.f32.gmra.mxu0 %v1498
  %v1635 = vpop.f32.mrf.mxu0
  %v1636 = vadd.f32 0.0, %v1635
  %v1637 = vpop.f32.mrf.mxu0
  %1638 = vmatprep.mubr.f32.mxu0 0.0
  %1639 = vmatmul.mubr.f32.gmra.mxu0 %v1501
  %v1640 = vpop.f32.mrf.mxu0
  %v1641 = vadd.f32 0.0, %v1640
  %v1642 = vpop.f32.mrf.mxu0
  %1643 = vmatprep.mubr.f32.mxu0 0.0
  %1644 = vmatmul.mubr.f32.gmra.mxu0 %v1504
  %v1645 = vpop.f32.mrf.mxu0
  %v1646 = vadd.f32 0.0, %v1645
  %v1647 = vpop.f32.mrf.mxu0
  %1648 = vmatprep.mubr.f32.mxu0 0.0
  %1649 = vmatmul.mubr.f32.gmra.mxu0 %v1507
  %v1650 = vpop.f32.mrf.mxu0
  %v1651 = vadd.f32 0.0, %v1650
  %v1652 = vpop.f32.mrf.mxu0
  %1653 = vdwg.mxu0
  %v1654 = vadd.f32 %v1203, %v1576
  %v1655 = vadd.f32 %v1204, %v1581
  %v1656 = vadd.f32 %v1205, %v1586
  %v1657 = vadd.f32 %v1206, %v1591
  %v1658 = vadd.f32 %v1207, %v1596
  %v1659 = vadd.f32 %v1208, %v1601
  %v1660 = vadd.f32 %v1209, %v1606
  %v1661 = vadd.f32 %v1210, %v1611
  %v1662 = vadd.f32 %v1211, %v1616
  %v1663 = vadd.f32 %v1212, %v1621
  %v1664 = vadd.f32 %v1213, %v1626
  %v1665 = vadd.f32 %v1214, %v1631
  %v1666 = vadd.f32 %v1215, %v1636
  %v1667 = vadd.f32 %v1216, %v1641
  %v1668 = vadd.f32 %v1217, %v1646
  %v1669 = vadd.f32 %v1218, %v1651
  %v1670 = vld [vmem:[%s4 + $0x10] sm:$0xff]
  %1671 = vmatprep.subr.mxu0 0.0
  %1672 = vmatpush1.msra.mxu0 0.0
  %1673 = vmatprep.subr.mxu0 0.0
  %1674 = vmatpush1.msra.mxu0 0.0
  %1675 = vmatprep.subr.mxu0 0.0
  %1676 = vmatpush1.msra.mxu0 0.0
  %1677 = vmatprep.subr.mxu0 0.0
  %1678 = vmatpush1.msra.mxu0 0.0
  %1679 = vmatprep.subr.mxu0 0.0
  %1680 = vmatpush1.msra.mxu0 0.0
  %1681 = vmatprep.subr.mxu0 0.0
  %1682 = vmatpush1.msra.mxu0 0.0
  %1683 = vmatprep.subr.mxu0 0.0
  %1684 = vmatpush1.msra.mxu0 0.0
  %1685 = vmatprep.subr.mxu0 0.0
  %1686 = vmatpush1.msra.mxu0 0.0
  %1687 = vmatprep.subr.mxu0 0.0
  %1688 = vmatpush1.msra.mxu0 0.0
  %1689 = vmatprep.subr.mxu0 0.0
  %1690 = vmatpush1.msra.mxu0 0.0
  %1691 = vmatprep.subr.mxu0 0.0
  %1692 = vmatpush1.msra.mxu0 0.0
  %1693 = vmatprep.subr.mxu0 0.0
  %1694 = vmatpush1.msra.mxu0 0.0
  %1695 = vmatprep.subr.mxu0 0.0
  %1696 = vmatpush1.msra.mxu0 0.0
  %1697 = vmatprep.subr.mxu0 0.0
  %1698 = vmatpush1.msra.mxu0 0.0
  %1699 = vmatprep.subr.mxu0 0.0
  %1700 = vmatpush1.msra.mxu0 0.0
  %1701 = vmatprep.subr.mxu0 0.0
  %1702 = vmatpush1.msra.mxu0 %v1670
  %1703 = vmatprep.subr.mxu0 0.0
  %1704 = vmatpush2.msra.mxu0 0.0
  %1705 = vmatprep.subr.mxu0 0.0
  %1706 = vmatpush2.msra.mxu0 0.0
  %1707 = vmatprep.subr.mxu0 0.0
  %1708 = vmatpush2.msra.mxu0 0.0
  %1709 = vmatprep.subr.mxu0 0.0
  %1710 = vmatpush2.msra.mxu0 0.0
  %1711 = vmatprep.subr.mxu0 0.0
  %1712 = vmatpush2.msra.mxu0 0.0
  %1713 = vmatprep.subr.mxu0 0.0
  %1714 = vmatpush2.msra.mxu0 0.0
  %1715 = vmatprep.subr.mxu0 0.0
  %1716 = vmatpush2.msra.mxu0 0.0
  %1717 = vmatprep.subr.mxu0 0.0
  %1718 = vmatpush2.msra.mxu0 0.0
  %1719 = vmatprep.subr.mxu0 0.0
  %1720 = vmatpush2.msra.mxu0 0.0
  %1721 = vmatprep.subr.mxu0 0.0
  %1722 = vmatpush2.msra.mxu0 0.0
  %1723 = vmatprep.subr.mxu0 0.0
  %1724 = vmatpush2.msra.mxu0 0.0
  %1725 = vmatprep.subr.mxu0 0.0
  %1726 = vmatpush2.msra.mxu0 0.0
  %1727 = vmatprep.subr.mxu0 0.0
  %1728 = vmatpush2.msra.mxu0 0.0
  %1729 = vmatprep.subr.mxu0 0.0
  %1730 = vmatpush2.msra.mxu0 0.0
  %1731 = vmatprep.subr.mxu0 0.0
  %1732 = vmatpush2.msra.mxu0 0.0
  %1733 = vmatprep.subr.mxu0 0.0
  %1734 = vmatpush2.msra.mxu0 0.0
  %1735 = vmatprep.mubr.f32.mxu0 0.0
  %1736 = vmatmul.mubr.f32.gmra.mxu0 %v1252
  %v1737 = vpop.f32.mrf.mxu0
  %v1738 = vadd.f32 0.0, %v1737
  %v1739 = vpop.f32.mrf.mxu0
  %1740 = vmatprep.mubr.f32.mxu0 0.0
  %1741 = vmatmul.mubr.f32.gmra.mxu0 %v1255
  %v1742 = vpop.f32.mrf.mxu0
  %v1743 = vadd.f32 0.0, %v1742
  %v1744 = vpop.f32.mrf.mxu0
  %1745 = vmatprep.mubr.f32.mxu0 0.0
  %1746 = vmatmul.mubr.f32.gmra.mxu0 %v1258
  %v1747 = vpop.f32.mrf.mxu0
  %v1748 = vadd.f32 0.0, %v1747
  %v1749 = vpop.f32.mrf.mxu0
  %1750 = vmatprep.mubr.f32.mxu0 0.0
  %1751 = vmatmul.mubr.f32.gmra.mxu0 %v1261
  %v1752 = vpop.f32.mrf.mxu0
  %v1753 = vadd.f32 0.0, %v1752
  %v1754 = vpop.f32.mrf.mxu0
  %1755 = vmatprep.mubr.f32.mxu0 0.0
  %1756 = vmatmul.mubr.f32.gmra.mxu0 %v1264
  %v1757 = vpop.f32.mrf.mxu0
  %v1758 = vadd.f32 0.0, %v1757
  %v1759 = vpop.f32.mrf.mxu0
  %1760 = vmatprep.mubr.f32.mxu0 0.0
  %1761 = vmatmul.mubr.f32.gmra.mxu0 %v1267
  %v1762 = vpop.f32.mrf.mxu0
  %v1763 = vadd.f32 0.0, %v1762
  %v1764 = vpop.f32.mrf.mxu0
  %1765 = vmatprep.mubr.f32.mxu0 0.0
  %1766 = vmatmul.mubr.f32.gmra.mxu0 %v1270
  %v1767 = vpop.f32.mrf.mxu0
  %v1768 = vadd.f32 0.0, %v1767
  %v1769 = vpop.f32.mrf.mxu0
  %1770 = vmatprep.mubr.f32.mxu0 0.0
  %1771 = vmatmul.mubr.f32.gmra.mxu0 %v1273
  %v1772 = vpop.f32.mrf.mxu0
  %v1773 = vadd.f32 0.0, %v1772
  %v1774 = vpop.f32.mrf.mxu0
  %1775 = vmatprep.mubr.f32.mxu0 0.0
  %1776 = vmatmul.mubr.f32.gmra.mxu0 %v1276
  %v1777 = vpop.f32.mrf.mxu0
  %v1778 = vadd.f32 0.0, %v1777
  %v1779 = vpop.f32.mrf.mxu0
  %1780 = vmatprep.mubr.f32.mxu0 0.0
  %1781 = vmatmul.mubr.f32.gmra.mxu0 %v1279
  %v1782 = vpop.f32.mrf.mxu0
  %v1783 = vadd.f32 0.0, %v1782
  %v1784 = vpop.f32.mrf.mxu0
  %1785 = vmatprep.mubr.f32.mxu0 0.0
  %1786 = vmatmul.mubr.f32.gmra.mxu0 %v1282
  %v1787 = vpop.f32.mrf.mxu0
  %v1788 = vadd.f32 0.0, %v1787
  %v1789 = vpop.f32.mrf.mxu0
  %1790 = vmatprep.mubr.f32.mxu0 0.0
  %1791 = vmatmul.mubr.f32.gmra.mxu0 %v1285
  %v1792 = vpop.f32.mrf.mxu0
  %v1793 = vadd.f32 0.0, %v1792
  %v1794 = vpop.f32.mrf.mxu0
  %1795 = vmatprep.mubr.f32.mxu0 0.0
  %1796 = vmatmul.mubr.f32.gmra.mxu0 %v1288
  %v1797 = vpop.f32.mrf.mxu0
  %v1798 = vadd.f32 0.0, %v1797
  %v1799 = vpop.f32.mrf.mxu0
  %1800 = vmatprep.mubr.f32.mxu0 0.0
  %1801 = vmatmul.mubr.f32.gmra.mxu0 %v1291
  %v1802 = vpop.f32.mrf.mxu0
  %v1803 = vadd.f32 0.0, %v1802
  %v1804 = vpop.f32.mrf.mxu0
  %1805 = vmatprep.mubr.f32.mxu0 0.0
  %1806 = vmatmul.mubr.f32.gmra.mxu0 %v1294
  %v1807 = vpop.f32.mrf.mxu0
  %v1808 = vadd.f32 0.0, %v1807
  %v1809 = vpop.f32.mrf.mxu0
  %1810 = vmatprep.mubr.f32.mxu0 0.0
  %1811 = vmatmul.mubr.f32.gmra.mxu0 %v1297
  %v1812 = vpop.f32.mrf.mxu0
  %v1813 = vadd.f32 0.0, %v1812
  %v1814 = vpop.f32.mrf.mxu0
  %1815 = vdwg.mxu0
  %v1816 = vadd.f32 %v1654, %v1738
  %v1817 = vadd.f32 %v1655, %v1743
  %v1818 = vadd.f32 %v1656, %v1748
  %v1819 = vadd.f32 %v1657, %v1753
  %v1820 = vadd.f32 %v1658, %v1758
  %v1821 = vadd.f32 %v1659, %v1763
  %v1822 = vadd.f32 %v1660, %v1768
  %v1823 = vadd.f32 %v1661, %v1773
  %v1824 = vadd.f32 %v1662, %v1778
  %v1825 = vadd.f32 %v1663, %v1783
  %v1826 = vadd.f32 %v1664, %v1788
  %v1827 = vadd.f32 %v1665, %v1793
  %v1828 = vadd.f32 %v1666, %v1798
  %v1829 = vadd.f32 %v1667, %v1803
  %v1830 = vadd.f32 %v1668, %v1808
  %v1831 = vadd.f32 %v1669, %v1813
  %v1832 = vld [vmem:[%s0 + $0x180] sm:$0xff]
  %v1833 = vld [vmem:[%s0 + $0x188] sm:$0xff]
  %v1834 = vld [vmem:[%s0 + $0x190] sm:$0xff]
  %v1835 = vld [vmem:[%s0 + $0x198] sm:$0xff]
  %v1836 = vld [vmem:[%s0 + $0x1a0] sm:$0xff]
  %v1837 = vld [vmem:[%s0 + $0x1a8] sm:$0xff]
  %v1838 = vld [vmem:[%s0 + $0x1b0] sm:$0xff]
  %v1839 = vld [vmem:[%s0 + $0x1b8] sm:$0xff]
  %v1840 = vld [vmem:[%s0 + $0x1c0] sm:$0xff]
  %v1841 = vld [vmem:[%s0 + $0x1c8] sm:$0xff]
  %v1842 = vld [vmem:[%s0 + $0x1d0] sm:$0xff]
  %v1843 = vld [vmem:[%s0 + $0x1d8] sm:$0xff]
  %v1844 = vld [vmem:[%s0 + $0x1e0] sm:$0xff]
  %v1845 = vld [vmem:[%s0 + $0x1e8] sm:$0xff]
  %v1846 = vld [vmem:[%s0 + $0x1f0] sm:$0xff]
  %v1847 = vld [vmem:[%s0 + $0x1f8] sm:$0xff]
  %v1848 = vld [vmem:[%s1 + $0x180] sm:$0xff]
  %v1849 = vld [vmem:[%s1 + $0x188] sm:$0xff]
  %v1850 = vld [vmem:[%s1 + $0x190] sm:$0xff]
  %v1851 = vld [vmem:[%s1 + $0x198] sm:$0xff]
  %v1852 = vld [vmem:[%s1 + $0x1a0] sm:$0xff]
  %v1853 = vld [vmem:[%s1 + $0x1a8] sm:$0xff]
  %v1854 = vld [vmem:[%s1 + $0x1b0] sm:$0xff]
  %v1855 = vld [vmem:[%s1 + $0x1b8] sm:$0xff]
  %v1856 = vld [vmem:[%s1 + $0x1c0] sm:$0xff]
  %v1857 = vld [vmem:[%s1 + $0x1c8] sm:$0xff]
  %v1858 = vld [vmem:[%s1 + $0x1d0] sm:$0xff]
  %v1859 = vld [vmem:[%s1 + $0x1d8] sm:$0xff]
  %v1860 = vld [vmem:[%s1 + $0x1e0] sm:$0xff]
  %v1861 = vld [vmem:[%s1 + $0x1e8] sm:$0xff]
  %v1862 = vld [vmem:[%s1 + $0x1f0] sm:$0xff]
  %v1863 = vld [vmem:[%s1 + $0x1f8] sm:$0xff]
  %v1865 = vsel %vm56, %v1832, 0
  %v1868 = vsel %vm56, %v1833, 0
  %v1871 = vsel %vm56, %v1834, 0
  %v1874 = vsel %vm56, %v1835, 0
  %v1877 = vsel %vm56, %v1836, 0
  %v1880 = vsel %vm56, %v1837, 0
  %v1883 = vsel %vm56, %v1838, 0
  %v1886 = vsel %vm56, %v1839, 0
  %v1889 = vsel %vm56, %v1840, 0
  %v1892 = vsel %vm56, %v1841, 0
  %v1895 = vsel %vm56, %v1842, 0
  %v1898 = vsel %vm56, %v1843, 0
  %v1901 = vsel %vm56, %v1844, 0
  %v1904 = vsel %vm56, %v1845, 0
  %v1907 = vsel %vm56, %v1846, 0
  %v1910 = vsel %vm56, %v1847, 0
  %1912 = vmatprep.subr.mxu0 0.0
  %1913 = vmatpush1.msra.mxu0 0.0
  %1914 = vmatprep.subr.mxu0 0.0
  %1915 = vmatpush1.msra.mxu0 0.0
  %1916 = vmatprep.subr.mxu0 0.0
  %1917 = vmatpush1.msra.mxu0 0.0
  %1918 = vmatprep.subr.mxu0 0.0
  %1919 = vmatpush1.msra.mxu0 0.0
  %1920 = vmatprep.subr.mxu0 0.0
  %1921 = vmatpush1.msra.mxu0 0.0
  %1922 = vmatprep.subr.mxu0 0.0
  %1923 = vmatpush1.msra.mxu0 0.0
  %1924 = vmatprep.subr.mxu0 0.0
  %1925 = vmatpush1.msra.mxu0 0.0
  %1926 = vmatprep.subr.mxu0 0.0
  %1927 = vmatpush1.msra.mxu0 0.0
  %1928 = vmatprep.subr.mxu0 0.0
  %1929 = vmatpush1.msra.mxu0 0.0
  %1930 = vmatprep.subr.mxu0 0.0
  %1931 = vmatpush1.msra.mxu0 0.0
  %1932 = vmatprep.subr.mxu0 0.0
  %1933 = vmatpush1.msra.mxu0 0.0
  %1934 = vmatprep.subr.mxu0 0.0
  %1935 = vmatpush1.msra.mxu0 0.0
  %1936 = vmatprep.subr.mxu0 0.0
  %1937 = vmatpush1.msra.mxu0 0.0
  %1938 = vmatprep.subr.mxu0 0.0
  %1939 = vmatpush1.msra.mxu0 0.0
  %1940 = vmatprep.subr.mxu0 0.0
  %1941 = vmatpush1.msra.mxu0 0.0
  %1942 = vmatprep.subr.mxu0 0.0
  %1943 = vmatpush1.msra.mxu0 %v39
  %1944 = vmatprep.subr.mxu0 0.0
  %1945 = vmatpush2.msra.mxu0 0.0
  %1946 = vmatprep.subr.mxu0 0.0
  %1947 = vmatpush2.msra.mxu0 0.0
  %1948 = vmatprep.subr.mxu0 0.0
  %1949 = vmatpush2.msra.mxu0 0.0
  %1950 = vmatprep.subr.mxu0 0.0
  %1951 = vmatpush2.msra.mxu0 0.0
  %1952 = vmatprep.subr.mxu0 0.0
  %1953 = vmatpush2.msra.mxu0 0.0
  %1954 = vmatprep.subr.mxu0 0.0
  %1955 = vmatpush2.msra.mxu0 0.0
  %1956 = vmatprep.subr.mxu0 0.0
  %1957 = vmatpush2.msra.mxu0 0.0
  %1958 = vmatprep.subr.mxu0 0.0
  %1959 = vmatpush2.msra.mxu0 0.0
  %1960 = vmatprep.subr.mxu0 0.0
  %1961 = vmatpush2.msra.mxu0 0.0
  %1962 = vmatprep.subr.mxu0 0.0
  %1963 = vmatpush2.msra.mxu0 0.0
  %1964 = vmatprep.subr.mxu0 0.0
  %1965 = vmatpush2.msra.mxu0 0.0
  %1966 = vmatprep.subr.mxu0 0.0
  %1967 = vmatpush2.msra.mxu0 0.0
  %1968 = vmatprep.subr.mxu0 0.0
  %1969 = vmatpush2.msra.mxu0 0.0
  %1970 = vmatprep.subr.mxu0 0.0
  %1971 = vmatpush2.msra.mxu0 0.0
  %1972 = vmatprep.subr.mxu0 0.0
  %1973 = vmatpush2.msra.mxu0 0.0
  %1974 = vmatprep.subr.mxu0 0.0
  %1975 = vmatpush2.msra.mxu0 0.0
  %1976 = vmatprep.mubr.f32.mxu0 0.0
  %1977 = vmatmul.mubr.f32.gmra.mxu0 %v1865
  %v1978 = vpop.f32.mrf.mxu0
  %v1979 = vadd.f32 %v1848, %v1978
  %v1980 = vpop.f32.mrf.mxu0
  %1981 = vmatprep.mubr.f32.mxu0 0.0
  %1982 = vmatmul.mubr.f32.gmra.mxu0 %v1868
  %v1983 = vpop.f32.mrf.mxu0
  %v1984 = vadd.f32 %v1849, %v1983
  %v1985 = vpop.f32.mrf.mxu0
  %1986 = vmatprep.mubr.f32.mxu0 0.0
  %1987 = vmatmul.mubr.f32.gmra.mxu0 %v1871
  %v1988 = vpop.f32.mrf.mxu0
  %v1989 = vadd.f32 %v1850, %v1988
  %v1990 = vpop.f32.mrf.mxu0
  %1991 = vmatprep.mubr.f32.mxu0 0.0
  %1992 = vmatmul.mubr.f32.gmra.mxu0 %v1874
  %v1993 = vpop.f32.mrf.mxu0
  %v1994 = vadd.f32 %v1851, %v1993
  %v1995 = vpop.f32.mrf.mxu0
  %1996 = vmatprep.mubr.f32.mxu0 0.0
  %1997 = vmatmul.mubr.f32.gmra.mxu0 %v1877
  %v1998 = vpop.f32.mrf.mxu0
  %v1999 = vadd.f32 %v1852, %v1998
  %v2000 = vpop.f32.mrf.mxu0
  %2001 = vmatprep.mubr.f32.mxu0 0.0
  %2002 = vmatmul.mubr.f32.gmra.mxu0 %v1880
  %v2003 = vpop.f32.mrf.mxu0
  %v2004 = vadd.f32 %v1853, %v2003
  %v2005 = vpop.f32.mrf.mxu0
  %2006 = vmatprep.mubr.f32.mxu0 0.0
  %2007 = vmatmul.mubr.f32.gmra.mxu0 %v1883
  %v2008 = vpop.f32.mrf.mxu0
  %v2009 = vadd.f32 %v1854, %v2008
  %v2010 = vpop.f32.mrf.mxu0
  %2011 = vmatprep.mubr.f32.mxu0 0.0
  %2012 = vmatmul.mubr.f32.gmra.mxu0 %v1886
  %v2013 = vpop.f32.mrf.mxu0
  %v2014 = vadd.f32 %v1855, %v2013
  %v2015 = vpop.f32.mrf.mxu0
  %2016 = vmatprep.mubr.f32.mxu0 0.0
  %2017 = vmatmul.mubr.f32.gmra.mxu0 %v1889
  %v2018 = vpop.f32.mrf.mxu0
  %v2019 = vadd.f32 %v1856, %v2018
  %v2020 = vpop.f32.mrf.mxu0
  %2021 = vmatprep.mubr.f32.mxu0 0.0
  %2022 = vmatmul.mubr.f32.gmra.mxu0 %v1892
  %v2023 = vpop.f32.mrf.mxu0
  %v2024 = vadd.f32 %v1857, %v2023
  %v2025 = vpop.f32.mrf.mxu0
  %2026 = vmatprep.mubr.f32.mxu0 0.0
  %2027 = vmatmul.mubr.f32.gmra.mxu0 %v1895
  %v2028 = vpop.f32.mrf.mxu0
  %v2029 = vadd.f32 %v1858, %v2028
  %v2030 = vpop.f32.mrf.mxu0
  %2031 = vmatprep.mubr.f32.mxu0 0.0
  %2032 = vmatmul.mubr.f32.gmra.mxu0 %v1898
  %v2033 = vpop.f32.mrf.mxu0
  %v2034 = vadd.f32 %v1859, %v2033
  %v2035 = vpop.f32.mrf.mxu0
  %2036 = vmatprep.mubr.f32.mxu0 0.0
  %2037 = vmatmul.mubr.f32.gmra.mxu0 %v1901
  %v2038 = vpop.f32.mrf.mxu0
  %v2039 = vadd.f32 %v1860, %v2038
  %v2040 = vpop.f32.mrf.mxu0
  %2041 = vmatprep.mubr.f32.mxu0 0.0
  %2042 = vmatmul.mubr.f32.gmra.mxu0 %v1904
  %v2043 = vpop.f32.mrf.mxu0
  %v2044 = vadd.f32 %v1861, %v2043
  %v2045 = vpop.f32.mrf.mxu0
  %2046 = vmatprep.mubr.f32.mxu0 0.0
  %2047 = vmatmul.mubr.f32.gmra.mxu0 %v1907
  %v2048 = vpop.f32.mrf.mxu0
  %v2049 = vadd.f32 %v1862, %v2048
  %v2050 = vpop.f32.mrf.mxu0
  %2051 = vmatprep.mubr.f32.mxu0 0.0
  %2052 = vmatmul.mubr.f32.gmra.mxu0 %v1910
  %v2053 = vpop.f32.mrf.mxu0
  %v2054 = vadd.f32 %v1863, %v2053
  %v2055 = vpop.f32.mrf.mxu0
  %2056 = vdwg.mxu0
  %v2057 = vmax.f32 %v1979, 0.0
  %v2058 = vmax.f32 %v1984, 0.0
  %v2059 = vmax.f32 %v1989, 0.0
  %v2060 = vmax.f32 %v1994, 0.0
  %v2061 = vmax.f32 %v1999, 0.0
  %v2062 = vmax.f32 %v2004, 0.0
  %v2063 = vmax.f32 %v2009, 0.0
  %v2064 = vmax.f32 %v2014, 0.0
  %v2065 = vmax.f32 %v2019, 0.0
  %v2066 = vmax.f32 %v2024, 0.0
  %v2067 = vmax.f32 %v2029, 0.0
  %v2068 = vmax.f32 %v2034, 0.0
  %v2069 = vmax.f32 %v2039, 0.0
  %v2070 = vmax.f32 %v2044, 0.0
  %v2071 = vmax.f32 %v2049, 0.0
  %v2072 = vmax.f32 %v2054, 0.0
  %v2073 = vld [vmem:[%s3 + $0x18] sm:$0xff]
  %v2075 = vsel %vm56, %v2057, 0
  %v2078 = vsel %vm56, %v2058, 0
  %v2081 = vsel %vm56, %v2059, 0
  %v2084 = vsel %vm56, %v2060, 0
  %v2087 = vsel %vm56, %v2061, 0
  %v2090 = vsel %vm56, %v2062, 0
  %v2093 = vsel %vm56, %v2063, 0
  %v2096 = vsel %vm56, %v2064, 0
  %v2099 = vsel %vm56, %v2065, 0
  %v2102 = vsel %vm56, %v2066, 0
  %v2105 = vsel %vm56, %v2067, 0
  %v2108 = vsel %vm56, %v2068, 0
  %v2111 = vsel %vm56, %v2069, 0
  %v2114 = vsel %vm56, %v2070, 0
  %v2117 = vsel %vm56, %v2071, 0
  %v2120 = vsel %vm56, %v2072, 0
  %2122 = vmatprep.subr.mxu0 0.0
  %2123 = vmatpush1.msra.mxu0 0.0
  %2124 = vmatprep.subr.mxu0 0.0
  %2125 = vmatpush1.msra.mxu0 0.0
  %2126 = vmatprep.subr.mxu0 0.0
  %2127 = vmatpush1.msra.mxu0 0.0
  %2128 = vmatprep.subr.mxu0 0.0
  %2129 = vmatpush1.msra.mxu0 0.0
  %2130 = vmatprep.subr.mxu0 0.0
  %2131 = vmatpush1.msra.mxu0 0.0
  %2132 = vmatprep.subr.mxu0 0.0
  %2133 = vmatpush1.msra.mxu0 0.0
  %2134 = vmatprep.subr.mxu0 0.0
  %2135 = vmatpush1.msra.mxu0 0.0
  %2136 = vmatprep.subr.mxu0 0.0
  %2137 = vmatpush1.msra.mxu0 0.0
  %2138 = vmatprep.subr.mxu0 0.0
  %2139 = vmatpush1.msra.mxu0 0.0
  %2140 = vmatprep.subr.mxu0 0.0
  %2141 = vmatpush1.msra.mxu0 0.0
  %2142 = vmatprep.subr.mxu0 0.0
  %2143 = vmatpush1.msra.mxu0 0.0
  %2144 = vmatprep.subr.mxu0 0.0
  %2145 = vmatpush1.msra.mxu0 0.0
  %2146 = vmatprep.subr.mxu0 0.0
  %2147 = vmatpush1.msra.mxu0 0.0
  %2148 = vmatprep.subr.mxu0 0.0
  %2149 = vmatpush1.msra.mxu0 0.0
  %2150 = vmatprep.subr.mxu0 0.0
  %2151 = vmatpush1.msra.mxu0 0.0
  %2152 = vmatprep.subr.mxu0 0.0
  %2153 = vmatpush1.msra.mxu0 %v2073
  %2154 = vmatprep.subr.mxu0 0.0
  %2155 = vmatpush2.msra.mxu0 0.0
  %2156 = vmatprep.subr.mxu0 0.0
  %2157 = vmatpush2.msra.mxu0 0.0
  %2158 = vmatprep.subr.mxu0 0.0
  %2159 = vmatpush2.msra.mxu0 0.0
  %2160 = vmatprep.subr.mxu0 0.0
  %2161 = vmatpush2.msra.mxu0 0.0
  %2162 = vmatprep.subr.mxu0 0.0
  %2163 = vmatpush2.msra.mxu0 0.0
  %2164 = vmatprep.subr.mxu0 0.0
  %2165 = vmatpush2.msra.mxu0 0.0
  %2166 = vmatprep.subr.mxu0 0.0
  %2167 = vmatpush2.msra.mxu0 0.0
  %2168 = vmatprep.subr.mxu0 0.0
  %2169 = vmatpush2.msra.mxu0 0.0
  %2170 = vmatprep.subr.mxu0 0.0
  %2171 = vmatpush2.msra.mxu0 0.0
  %2172 = vmatprep.subr.mxu0 0.0
  %2173 = vmatpush2.msra.mxu0 0.0
  %2174 = vmatprep.subr.mxu0 0.0
  %2175 = vmatpush2.msra.mxu0 0.0
  %2176 = vmatprep.subr.mxu0 0.0
  %2177 = vmatpush2.msra.mxu0 0.0
  %2178 = vmatprep.subr.mxu0 0.0
  %2179 = vmatpush2.msra.mxu0 0.0
  %2180 = vmatprep.subr.mxu0 0.0
  %2181 = vmatpush2.msra.mxu0 0.0
  %2182 = vmatprep.subr.mxu0 0.0
  %2183 = vmatpush2.msra.mxu0 0.0
  %2184 = vmatprep.subr.mxu0 0.0
  %2185 = vmatpush2.msra.mxu0 0.0
  %2186 = vmatprep.mubr.f32.mxu0 0.0
  %2187 = vmatmul.mubr.f32.gmra.mxu0 %v2075
  %v2188 = vpop.f32.mrf.mxu0
  %v2189 = vadd.f32 0.0, %v2188
  %v2190 = vpop.f32.mrf.mxu0
  %2191 = vmatprep.mubr.f32.mxu0 0.0
  %2192 = vmatmul.mubr.f32.gmra.mxu0 %v2078
  %v2193 = vpop.f32.mrf.mxu0
  %v2194 = vadd.f32 0.0, %v2193
  %v2195 = vpop.f32.mrf.mxu0
  %2196 = vmatprep.mubr.f32.mxu0 0.0
  %2197 = vmatmul.mubr.f32.gmra.mxu0 %v2081
  %v2198 = vpop.f32.mrf.mxu0
  %v2199 = vadd.f32 0.0, %v2198
  %v2200 = vpop.f32.mrf.mxu0
  %2201 = vmatprep.mubr.f32.mxu0 0.0
  %2202 = vmatmul.mubr.f32.gmra.mxu0 %v2084
  %v2203 = vpop.f32.mrf.mxu0
  %v2204 = vadd.f32 0.0, %v2203
  %v2205 = vpop.f32.mrf.mxu0
  %2206 = vmatprep.mubr.f32.mxu0 0.0
  %2207 = vmatmul.mubr.f32.gmra.mxu0 %v2087
  %v2208 = vpop.f32.mrf.mxu0
  %v2209 = vadd.f32 0.0, %v2208
  %v2210 = vpop.f32.mrf.mxu0
  %2211 = vmatprep.mubr.f32.mxu0 0.0
  %2212 = vmatmul.mubr.f32.gmra.mxu0 %v2090
  %v2213 = vpop.f32.mrf.mxu0
  %v2214 = vadd.f32 0.0, %v2213
  %v2215 = vpop.f32.mrf.mxu0
  %2216 = vmatprep.mubr.f32.mxu0 0.0
  %2217 = vmatmul.mubr.f32.gmra.mxu0 %v2093
  %v2218 = vpop.f32.mrf.mxu0
  %v2219 = vadd.f32 0.0, %v2218
  %v2220 = vpop.f32.mrf.mxu0
  %2221 = vmatprep.mubr.f32.mxu0 0.0
  %2222 = vmatmul.mubr.f32.gmra.mxu0 %v2096
  %v2223 = vpop.f32.mrf.mxu0
  %v2224 = vadd.f32 0.0, %v2223
  %v2225 = vpop.f32.mrf.mxu0
  %2226 = vmatprep.mubr.f32.mxu0 0.0
  %2227 = vmatmul.mubr.f32.gmra.mxu0 %v2099
  %v2228 = vpop.f32.mrf.mxu0
  %v2229 = vadd.f32 0.0, %v2228
  %v2230 = vpop.f32.mrf.mxu0
  %2231 = vmatprep.mubr.f32.mxu0 0.0
  %2232 = vmatmul.mubr.f32.gmra.mxu0 %v2102
  %v2233 = vpop.f32.mrf.mxu0
  %v2234 = vadd.f32 0.0, %v2233
  %v2235 = vpop.f32.mrf.mxu0
  %2236 = vmatprep.mubr.f32.mxu0 0.0
  %2237 = vmatmul.mubr.f32.gmra.mxu0 %v2105
  %v2238 = vpop.f32.mrf.mxu0
  %v2239 = vadd.f32 0.0, %v2238
  %v2240 = vpop.f32.mrf.mxu0
  %2241 = vmatprep.mubr.f32.mxu0 0.0
  %2242 = vmatmul.mubr.f32.gmra.mxu0 %v2108
  %v2243 = vpop.f32.mrf.mxu0
  %v2244 = vadd.f32 0.0, %v2243
  %v2245 = vpop.f32.mrf.mxu0
  %2246 = vmatprep.mubr.f32.mxu0 0.0
  %2247 = vmatmul.mubr.f32.gmra.mxu0 %v2111
  %v2248 = vpop.f32.mrf.mxu0
  %v2249 = vadd.f32 0.0, %v2248
  %v2250 = vpop.f32.mrf.mxu0
  %2251 = vmatprep.mubr.f32.mxu0 0.0
  %2252 = vmatmul.mubr.f32.gmra.mxu0 %v2114
  %v2253 = vpop.f32.mrf.mxu0
  %v2254 = vadd.f32 0.0, %v2253
  %v2255 = vpop.f32.mrf.mxu0
  %2256 = vmatprep.mubr.f32.mxu0 0.0
  %2257 = vmatmul.mubr.f32.gmra.mxu0 %v2117
  %v2258 = vpop.f32.mrf.mxu0
  %v2259 = vadd.f32 0.0, %v2258
  %v2260 = vpop.f32.mrf.mxu0
  %2261 = vmatprep.mubr.f32.mxu0 0.0
  %2262 = vmatmul.mubr.f32.gmra.mxu0 %v2120
  %v2263 = vpop.f32.mrf.mxu0
  %v2264 = vadd.f32 0.0, %v2263
  %v2265 = vpop.f32.mrf.mxu0
  %2266 = vdwg.mxu0
  %v2267 = vadd.f32 %v1816, %v2189
  %v2268 = vadd.f32 %v1817, %v2194
  %v2269 = vadd.f32 %v1818, %v2199
  %v2270 = vadd.f32 %v1819, %v2204
  %v2271 = vadd.f32 %v1820, %v2209
  %v2272 = vadd.f32 %v1821, %v2214
  %v2273 = vadd.f32 %v1822, %v2219
  %v2274 = vadd.f32 %v1823, %v2224
  %v2275 = vadd.f32 %v1824, %v2229
  %v2276 = vadd.f32 %v1825, %v2234
  %v2277 = vadd.f32 %v1826, %v2239
  %v2278 = vadd.f32 %v1827, %v2244
  %v2279 = vadd.f32 %v1828, %v2249
  %v2280 = vadd.f32 %v1829, %v2254
  %v2281 = vadd.f32 %v1830, %v2259
  %v2282 = vadd.f32 %v1831, %v2264
  %v2283 = vld [vmem:[%s4 + $0x18] sm:$0xff]
  %2284 = vmatprep.subr.mxu0 0.0
  %2285 = vmatpush1.msra.mxu0 0.0
  %2286 = vmatprep.subr.mxu0 0.0
  %2287 = vmatpush1.msra.mxu0 0.0
  %2288 = vmatprep.subr.mxu0 0.0
  %2289 = vmatpush1.msra.mxu0 0.0
  %2290 = vmatprep.subr.mxu0 0.0
  %2291 = vmatpush1.msra.mxu0 0.0
  %2292 = vmatprep.subr.mxu0 0.0
  %2293 = vmatpush1.msra.mxu0 0.0
  %2294 = vmatprep.subr.mxu0 0.0
  %2295 = vmatpush1.msra.mxu0 0.0
  %2296 = vmatprep.subr.mxu0 0.0
  %2297 = vmatpush1.msra.mxu0 0.0
  %2298 = vmatprep.subr.mxu0 0.0
  %2299 = vmatpush1.msra.mxu0 0.0
  %2300 = vmatprep.subr.mxu0 0.0
  %2301 = vmatpush1.msra.mxu0 0.0
  %2302 = vmatprep.subr.mxu0 0.0
  %2303 = vmatpush1.msra.mxu0 0.0
  %2304 = vmatprep.subr.mxu0 0.0
  %2305 = vmatpush1.msra.mxu0 0.0
  %2306 = vmatprep.subr.mxu0 0.0
  %2307 = vmatpush1.msra.mxu0 0.0
  %2308 = vmatprep.subr.mxu0 0.0
  %2309 = vmatpush1.msra.mxu0 0.0
  %2310 = vmatprep.subr.mxu0 0.0
  %2311 = vmatpush1.msra.mxu0 0.0
  %2312 = vmatprep.subr.mxu0 0.0
  %2313 = vmatpush1.msra.mxu0 0.0
  %2314 = vmatprep.subr.mxu0 0.0
  %2315 = vmatpush1.msra.mxu0 %v2283
  %2316 = vmatprep.subr.mxu0 0.0
  %2317 = vmatpush2.msra.mxu0 0.0
  %2318 = vmatprep.subr.mxu0 0.0
  %2319 = vmatpush2.msra.mxu0 0.0
  %2320 = vmatprep.subr.mxu0 0.0
  %2321 = vmatpush2.msra.mxu0 0.0
  %2322 = vmatprep.subr.mxu0 0.0
  %2323 = vmatpush2.msra.mxu0 0.0
  %2324 = vmatprep.subr.mxu0 0.0
  %2325 = vmatpush2.msra.mxu0 0.0
  %2326 = vmatprep.subr.mxu0 0.0
  %2327 = vmatpush2.msra.mxu0 0.0
  %2328 = vmatprep.subr.mxu0 0.0
  %2329 = vmatpush2.msra.mxu0 0.0
  %2330 = vmatprep.subr.mxu0 0.0
  %2331 = vmatpush2.msra.mxu0 0.0
  %2332 = vmatprep.subr.mxu0 0.0
  %2333 = vmatpush2.msra.mxu0 0.0
  %2334 = vmatprep.subr.mxu0 0.0
  %2335 = vmatpush2.msra.mxu0 0.0
  %2336 = vmatprep.subr.mxu0 0.0
  %2337 = vmatpush2.msra.mxu0 0.0
  %2338 = vmatprep.subr.mxu0 0.0
  %2339 = vmatpush2.msra.mxu0 0.0
  %2340 = vmatprep.subr.mxu0 0.0
  %2341 = vmatpush2.msra.mxu0 0.0
  %2342 = vmatprep.subr.mxu0 0.0
  %2343 = vmatpush2.msra.mxu0 0.0
  %2344 = vmatprep.subr.mxu0 0.0
  %2345 = vmatpush2.msra.mxu0 0.0
  %2346 = vmatprep.subr.mxu0 0.0
  %2347 = vmatpush2.msra.mxu0 0.0
  %2348 = vmatprep.mubr.f32.mxu0 0.0
  %2349 = vmatmul.mubr.f32.gmra.mxu0 %v1865
  %v2350 = vpop.f32.mrf.mxu0
  %v2351 = vadd.f32 0.0, %v2350
  %v2352 = vpop.f32.mrf.mxu0
  %2353 = vmatprep.mubr.f32.mxu0 0.0
  %2354 = vmatmul.mubr.f32.gmra.mxu0 %v1868
  %v2355 = vpop.f32.mrf.mxu0
  %v2356 = vadd.f32 0.0, %v2355
  %v2357 = vpop.f32.mrf.mxu0
  %2358 = vmatprep.mubr.f32.mxu0 0.0
  %2359 = vmatmul.mubr.f32.gmra.mxu0 %v1871
  %v2360 = vpop.f32.mrf.mxu0
  %v2361 = vadd.f32 0.0, %v2360
  %v2362 = vpop.f32.mrf.mxu0
  %2363 = vmatprep.mubr.f32.mxu0 0.0
  %2364 = vmatmul.mubr.f32.gmra.mxu0 %v1874
  %v2365 = vpop.f32.mrf.mxu0
  %v2366 = vadd.f32 0.0, %v2365
  %v2367 = vpop.f32.mrf.mxu0
  %2368 = vmatprep.mubr.f32.mxu0 0.0
  %2369 = vmatmul.mubr.f32.gmra.mxu0 %v1877
  %v2370 = vpop.f32.mrf.mxu0
  %v2371 = vadd.f32 0.0, %v2370
  %v2372 = vpop.f32.mrf.mxu0
  %2373 = vmatprep.mubr.f32.mxu0 0.0
  %2374 = vmatmul.mubr.f32.gmra.mxu0 %v1880
  %v2375 = vpop.f32.mrf.mxu0
  %v2376 = vadd.f32 0.0, %v2375
  %v2377 = vpop.f32.mrf.mxu0
  %2378 = vmatprep.mubr.f32.mxu0 0.0
  %2379 = vmatmul.mubr.f32.gmra.mxu0 %v1883
  %v2380 = vpop.f32.mrf.mxu0
  %v2381 = vadd.f32 0.0, %v2380
  %v2382 = vpop.f32.mrf.mxu0
  %2383 = vmatprep.mubr.f32.mxu0 0.0
  %2384 = vmatmul.mubr.f32.gmra.mxu0 %v1886
  %v2385 = vpop.f32.mrf.mxu0
  %v2386 = vadd.f32 0.0, %v2385
  %v2387 = vpop.f32.mrf.mxu0
  %2388 = vmatprep.mubr.f32.mxu0 0.0
  %2389 = vmatmul.mubr.f32.gmra.mxu0 %v1889
  %v2390 = vpop.f32.mrf.mxu0
  %v2391 = vadd.f32 0.0, %v2390
  %v2392 = vpop.f32.mrf.mxu0
  %2393 = vmatprep.mubr.f32.mxu0 0.0
  %2394 = vmatmul.mubr.f32.gmra.mxu0 %v1892
  %v2395 = vpop.f32.mrf.mxu0
  %v2396 = vadd.f32 0.0, %v2395
  %v2397 = vpop.f32.mrf.mxu0
  %2398 = vmatprep.mubr.f32.mxu0 0.0
  %2399 = vmatmul.mubr.f32.gmra.mxu0 %v1895
  %v2400 = vpop.f32.mrf.mxu0
  %v2401 = vadd.f32 0.0, %v2400
  %v2402 = vpop.f32.mrf.mxu0
  %2403 = vmatprep.mubr.f32.mxu0 0.0
  %2404 = vmatmul.mubr.f32.gmra.mxu0 %v1898
  %v2405 = vpop.f32.mrf.mxu0
  %v2406 = vadd.f32 0.0, %v2405
  %v2407 = vpop.f32.mrf.mxu0
  %2408 = vmatprep.mubr.f32.mxu0 0.0
  %2409 = vmatmul.mubr.f32.gmra.mxu0 %v1901
  %v2410 = vpop.f32.mrf.mxu0
  %v2411 = vadd.f32 0.0, %v2410
  %v2412 = vpop.f32.mrf.mxu0
  %2413 = vmatprep.mubr.f32.mxu0 0.0
  %2414 = vmatmul.mubr.f32.gmra.mxu0 %v1904
  %v2415 = vpop.f32.mrf.mxu0
  %v2416 = vadd.f32 0.0, %v2415
  %v2417 = vpop.f32.mrf.mxu0
  %2418 = vmatprep.mubr.f32.mxu0 0.0
  %2419 = vmatmul.mubr.f32.gmra.mxu0 %v1907
  %v2420 = vpop.f32.mrf.mxu0
  %v2421 = vadd.f32 0.0, %v2420
  %v2422 = vpop.f32.mrf.mxu0
  %2423 = vmatprep.mubr.f32.mxu0 0.0
  %2424 = vmatmul.mubr.f32.gmra.mxu0 %v1910
  %v2425 = vpop.f32.mrf.mxu0
  %v2426 = vadd.f32 0.0, %v2425
  %v2427 = vpop.f32.mrf.mxu0
  %2428 = vdwg.mxu0
  %v2429 = vadd.f32 %v2267, %v2351
  %v2430 = vadd.f32 %v2268, %v2356
  %v2431 = vadd.f32 %v2269, %v2361
  %v2432 = vadd.f32 %v2270, %v2366
  %v2433 = vadd.f32 %v2271, %v2371
  %v2434 = vadd.f32 %v2272, %v2376
  %v2435 = vadd.f32 %v2273, %v2381
  %v2436 = vadd.f32 %v2274, %v2386
  %v2437 = vadd.f32 %v2275, %v2391
  %v2438 = vadd.f32 %v2276, %v2396
  %v2439 = vadd.f32 %v2277, %v2401
  %v2440 = vadd.f32 %v2278, %v2406
  %v2441 = vadd.f32 %v2279, %v2411
  %v2442 = vadd.f32 %v2280, %v2416
  %v2443 = vadd.f32 %v2281, %v2421
  %v2444 = vadd.f32 %v2282, %v2426
  %v2445 = vld [vmem:[%s0 + $0x200] sm:$0xff]
  %v2446 = vld [vmem:[%s0 + $0x208] sm:$0xff]
  %v2447 = vld [vmem:[%s0 + $0x210] sm:$0xff]
  %v2448 = vld [vmem:[%s0 + $0x218] sm:$0xff]
  %v2449 = vld [vmem:[%s0 + $0x220] sm:$0xff]
  %v2450 = vld [vmem:[%s0 + $0x228] sm:$0xff]
  %v2451 = vld [vmem:[%s0 + $0x230] sm:$0xff]
  %v2452 = vld [vmem:[%s0 + $0x238] sm:$0xff]
  %v2453 = vld [vmem:[%s0 + $0x240] sm:$0xff]
  %v2454 = vld [vmem:[%s0 + $0x248] sm:$0xff]
  %v2455 = vld [vmem:[%s0 + $0x250] sm:$0xff]
  %v2456 = vld [vmem:[%s0 + $0x258] sm:$0xff]
  %v2457 = vld [vmem:[%s0 + $0x260] sm:$0xff]
  %v2458 = vld [vmem:[%s0 + $0x268] sm:$0xff]
  %v2459 = vld [vmem:[%s0 + $0x270] sm:$0xff]
  %v2460 = vld [vmem:[%s0 + $0x278] sm:$0xff]
  %v2461 = vld [vmem:[%s1 + $0x200] sm:$0xff]
  %v2462 = vld [vmem:[%s1 + $0x208] sm:$0xff]
  %v2463 = vld [vmem:[%s1 + $0x210] sm:$0xff]
  %v2464 = vld [vmem:[%s1 + $0x218] sm:$0xff]
  %v2465 = vld [vmem:[%s1 + $0x220] sm:$0xff]
  %v2466 = vld [vmem:[%s1 + $0x228] sm:$0xff]
  %v2467 = vld [vmem:[%s1 + $0x230] sm:$0xff]
  %v2468 = vld [vmem:[%s1 + $0x238] sm:$0xff]
  %v2469 = vld [vmem:[%s1 + $0x240] sm:$0xff]
  %v2470 = vld [vmem:[%s1 + $0x248] sm:$0xff]
  %v2471 = vld [vmem:[%s1 + $0x250] sm:$0xff]
  %v2472 = vld [vmem:[%s1 + $0x258] sm:$0xff]
  %v2473 = vld [vmem:[%s1 + $0x260] sm:$0xff]
  %v2474 = vld [vmem:[%s1 + $0x268] sm:$0xff]
  %v2475 = vld [vmem:[%s1 + $0x270] sm:$0xff]
  %v2476 = vld [vmem:[%s1 + $0x278] sm:$0xff]
  %v2478 = vsel %vm56, %v2445, 0
  %v2481 = vsel %vm56, %v2446, 0
  %v2484 = vsel %vm56, %v2447, 0
  %v2487 = vsel %vm56, %v2448, 0
  %v2490 = vsel %vm56, %v2449, 0
  %v2493 = vsel %vm56, %v2450, 0
  %v2496 = vsel %vm56, %v2451, 0
  %v2499 = vsel %vm56, %v2452, 0
  %v2502 = vsel %vm56, %v2453, 0
  %v2505 = vsel %vm56, %v2454, 0
  %v2508 = vsel %vm56, %v2455, 0
  %v2511 = vsel %vm56, %v2456, 0
  %v2514 = vsel %vm56, %v2457, 0
  %v2517 = vsel %vm56, %v2458, 0
  %v2520 = vsel %vm56, %v2459, 0
  %v2523 = vsel %vm56, %v2460, 0
  %2525 = vmatprep.subr.mxu0 0.0
  %2526 = vmatpush1.msra.mxu0 0.0
  %2527 = vmatprep.subr.mxu0 0.0
  %2528 = vmatpush1.msra.mxu0 0.0
  %2529 = vmatprep.subr.mxu0 0.0
  %2530 = vmatpush1.msra.mxu0 0.0
  %2531 = vmatprep.subr.mxu0 0.0
  %2532 = vmatpush1.msra.mxu0 0.0
  %2533 = vmatprep.subr.mxu0 0.0
  %2534 = vmatpush1.msra.mxu0 0.0
  %2535 = vmatprep.subr.mxu0 0.0
  %2536 = vmatpush1.msra.mxu0 0.0
  %2537 = vmatprep.subr.mxu0 0.0
  %2538 = vmatpush1.msra.mxu0 0.0
  %2539 = vmatprep.subr.mxu0 0.0
  %2540 = vmatpush1.msra.mxu0 0.0
  %2541 = vmatprep.subr.mxu0 0.0
  %2542 = vmatpush1.msra.mxu0 0.0
  %2543 = vmatprep.subr.mxu0 0.0
  %2544 = vmatpush1.msra.mxu0 0.0
  %2545 = vmatprep.subr.mxu0 0.0
  %2546 = vmatpush1.msra.mxu0 0.0
  %2547 = vmatprep.subr.mxu0 0.0
  %2548 = vmatpush1.msra.mxu0 0.0
  %2549 = vmatprep.subr.mxu0 0.0
  %2550 = vmatpush1.msra.mxu0 0.0
  %2551 = vmatprep.subr.mxu0 0.0
  %2552 = vmatpush1.msra.mxu0 0.0
  %2553 = vmatprep.subr.mxu0 0.0
  %2554 = vmatpush1.msra.mxu0 0.0
  %2555 = vmatprep.subr.mxu0 0.0
  %2556 = vmatpush1.msra.mxu0 %v39
  %2557 = vmatprep.subr.mxu0 0.0
  %2558 = vmatpush2.msra.mxu0 0.0
  %2559 = vmatprep.subr.mxu0 0.0
  %2560 = vmatpush2.msra.mxu0 0.0
  %2561 = vmatprep.subr.mxu0 0.0
  %2562 = vmatpush2.msra.mxu0 0.0
  %2563 = vmatprep.subr.mxu0 0.0
  %2564 = vmatpush2.msra.mxu0 0.0
  %2565 = vmatprep.subr.mxu0 0.0
  %2566 = vmatpush2.msra.mxu0 0.0
  %2567 = vmatprep.subr.mxu0 0.0
  %2568 = vmatpush2.msra.mxu0 0.0
  %2569 = vmatprep.subr.mxu0 0.0
  %2570 = vmatpush2.msra.mxu0 0.0
  %2571 = vmatprep.subr.mxu0 0.0
  %2572 = vmatpush2.msra.mxu0 0.0
  %2573 = vmatprep.subr.mxu0 0.0
  %2574 = vmatpush2.msra.mxu0 0.0
  %2575 = vmatprep.subr.mxu0 0.0
  %2576 = vmatpush2.msra.mxu0 0.0
  %2577 = vmatprep.subr.mxu0 0.0
  %2578 = vmatpush2.msra.mxu0 0.0
  %2579 = vmatprep.subr.mxu0 0.0
  %2580 = vmatpush2.msra.mxu0 0.0
  %2581 = vmatprep.subr.mxu0 0.0
  %2582 = vmatpush2.msra.mxu0 0.0
  %2583 = vmatprep.subr.mxu0 0.0
  %2584 = vmatpush2.msra.mxu0 0.0
  %2585 = vmatprep.subr.mxu0 0.0
  %2586 = vmatpush2.msra.mxu0 0.0
  %2587 = vmatprep.subr.mxu0 0.0
  %2588 = vmatpush2.msra.mxu0 0.0
  %2589 = vmatprep.mubr.f32.mxu0 0.0
  %2590 = vmatmul.mubr.f32.gmra.mxu0 %v2478
  %v2591 = vpop.f32.mrf.mxu0
  %v2592 = vadd.f32 %v2461, %v2591
  %v2593 = vpop.f32.mrf.mxu0
  %2594 = vmatprep.mubr.f32.mxu0 0.0
  %2595 = vmatmul.mubr.f32.gmra.mxu0 %v2481
  %v2596 = vpop.f32.mrf.mxu0
  %v2597 = vadd.f32 %v2462, %v2596
  %v2598 = vpop.f32.mrf.mxu0
  %2599 = vmatprep.mubr.f32.mxu0 0.0
  %2600 = vmatmul.mubr.f32.gmra.mxu0 %v2484
  %v2601 = vpop.f32.mrf.mxu0
  %v2602 = vadd.f32 %v2463, %v2601
  %v2603 = vpop.f32.mrf.mxu0
  %2604 = vmatprep.mubr.f32.mxu0 0.0
  %2605 = vmatmul.mubr.f32.gmra.mxu0 %v2487
  %v2606 = vpop.f32.mrf.mxu0
  %v2607 = vadd.f32 %v2464, %v2606
  %v2608 = vpop.f32.mrf.mxu0
  %2609 = vmatprep.mubr.f32.mxu0 0.0
  %2610 = vmatmul.mubr.f32.gmra.mxu0 %v2490
  %v2611 = vpop.f32.mrf.mxu0
  %v2612 = vadd.f32 %v2465, %v2611
  %v2613 = vpop.f32.mrf.mxu0
  %2614 = vmatprep.mubr.f32.mxu0 0.0
  %2615 = vmatmul.mubr.f32.gmra.mxu0 %v2493
  %v2616 = vpop.f32.mrf.mxu0
  %v2617 = vadd.f32 %v2466, %v2616
  %v2618 = vpop.f32.mrf.mxu0
  %2619 = vmatprep.mubr.f32.mxu0 0.0
  %2620 = vmatmul.mubr.f32.gmra.mxu0 %v2496
  %v2621 = vpop.f32.mrf.mxu0
  %v2622 = vadd.f32 %v2467, %v2621
  %v2623 = vpop.f32.mrf.mxu0
  %2624 = vmatprep.mubr.f32.mxu0 0.0
  %2625 = vmatmul.mubr.f32.gmra.mxu0 %v2499
  %v2626 = vpop.f32.mrf.mxu0
  %v2627 = vadd.f32 %v2468, %v2626
  %v2628 = vpop.f32.mrf.mxu0
  %2629 = vmatprep.mubr.f32.mxu0 0.0
  %2630 = vmatmul.mubr.f32.gmra.mxu0 %v2502
  %v2631 = vpop.f32.mrf.mxu0
  %v2632 = vadd.f32 %v2469, %v2631
  %v2633 = vpop.f32.mrf.mxu0
  %2634 = vmatprep.mubr.f32.mxu0 0.0
  %2635 = vmatmul.mubr.f32.gmra.mxu0 %v2505
  %v2636 = vpop.f32.mrf.mxu0
  %v2637 = vadd.f32 %v2470, %v2636
  %v2638 = vpop.f32.mrf.mxu0
  %2639 = vmatprep.mubr.f32.mxu0 0.0
  %2640 = vmatmul.mubr.f32.gmra.mxu0 %v2508
  %v2641 = vpop.f32.mrf.mxu0
  %v2642 = vadd.f32 %v2471, %v2641
  %v2643 = vpop.f32.mrf.mxu0
  %2644 = vmatprep.mubr.f32.mxu0 0.0
  %2645 = vmatmul.mubr.f32.gmra.mxu0 %v2511
  %v2646 = vpop.f32.mrf.mxu0
  %v2647 = vadd.f32 %v2472, %v2646
  %v2648 = vpop.f32.mrf.mxu0
  %2649 = vmatprep.mubr.f32.mxu0 0.0
  %2650 = vmatmul.mubr.f32.gmra.mxu0 %v2514
  %v2651 = vpop.f32.mrf.mxu0
  %v2652 = vadd.f32 %v2473, %v2651
  %v2653 = vpop.f32.mrf.mxu0
  %2654 = vmatprep.mubr.f32.mxu0 0.0
  %2655 = vmatmul.mubr.f32.gmra.mxu0 %v2517
  %v2656 = vpop.f32.mrf.mxu0
  %v2657 = vadd.f32 %v2474, %v2656
  %v2658 = vpop.f32.mrf.mxu0
  %2659 = vmatprep.mubr.f32.mxu0 0.0
  %2660 = vmatmul.mubr.f32.gmra.mxu0 %v2520
  %v2661 = vpop.f32.mrf.mxu0
  %v2662 = vadd.f32 %v2475, %v2661
  %v2663 = vpop.f32.mrf.mxu0
  %2664 = vmatprep.mubr.f32.mxu0 0.0
  %2665 = vmatmul.mubr.f32.gmra.mxu0 %v2523
  %v2666 = vpop.f32.mrf.mxu0
  %v2667 = vadd.f32 %v2476, %v2666
  %v2668 = vpop.f32.mrf.mxu0
  %2669 = vdwg.mxu0
  %v2670 = vmax.f32 %v2592, 0.0
  %v2671 = vmax.f32 %v2597, 0.0
  %v2672 = vmax.f32 %v2602, 0.0
  %v2673 = vmax.f32 %v2607, 0.0
  %v2674 = vmax.f32 %v2612, 0.0
  %v2675 = vmax.f32 %v2617, 0.0
  %v2676 = vmax.f32 %v2622, 0.0
  %v2677 = vmax.f32 %v2627, 0.0
  %v2678 = vmax.f32 %v2632, 0.0
  %v2679 = vmax.f32 %v2637, 0.0
  %v2680 = vmax.f32 %v2642, 0.0
  %v2681 = vmax.f32 %v2647, 0.0
  %v2682 = vmax.f32 %v2652, 0.0
  %v2683 = vmax.f32 %v2657, 0.0
  %v2684 = vmax.f32 %v2662, 0.0
  %v2685 = vmax.f32 %v2667, 0.0
  %v2686 = vld [vmem:[%s3 + $0x20] sm:$0xff]
  %v2688 = vsel %vm56, %v2670, 0
  %v2691 = vsel %vm56, %v2671, 0
  %v2694 = vsel %vm56, %v2672, 0
  %v2697 = vsel %vm56, %v2673, 0
  %v2700 = vsel %vm56, %v2674, 0
  %v2703 = vsel %vm56, %v2675, 0
  %v2706 = vsel %vm56, %v2676, 0
  %v2709 = vsel %vm56, %v2677, 0
  %v2712 = vsel %vm56, %v2678, 0
  %v2715 = vsel %vm56, %v2679, 0
  %v2718 = vsel %vm56, %v2680, 0
  %v2721 = vsel %vm56, %v2681, 0
  %v2724 = vsel %vm56, %v2682, 0
  %v2727 = vsel %vm56, %v2683, 0
  %v2730 = vsel %vm56, %v2684, 0
  %v2733 = vsel %vm56, %v2685, 0
  %2735 = vmatprep.subr.mxu0 0.0
  %2736 = vmatpush1.msra.mxu0 0.0
  %2737 = vmatprep.subr.mxu0 0.0
  %2738 = vmatpush1.msra.mxu0 0.0
  %2739 = vmatprep.subr.mxu0 0.0
  %2740 = vmatpush1.msra.mxu0 0.0
  %2741 = vmatprep.subr.mxu0 0.0
  %2742 = vmatpush1.msra.mxu0 0.0
  %2743 = vmatprep.subr.mxu0 0.0
  %2744 = vmatpush1.msra.mxu0 0.0
  %2745 = vmatprep.subr.mxu0 0.0
  %2746 = vmatpush1.msra.mxu0 0.0
  %2747 = vmatprep.subr.mxu0 0.0
  %2748 = vmatpush1.msra.mxu0 0.0
  %2749 = vmatprep.subr.mxu0 0.0
  %2750 = vmatpush1.msra.mxu0 0.0
  %2751 = vmatprep.subr.mxu0 0.0
  %2752 = vmatpush1.msra.mxu0 0.0
  %2753 = vmatprep.subr.mxu0 0.0
  %2754 = vmatpush1.msra.mxu0 0.0
  %2755 = vmatprep.subr.mxu0 0.0
  %2756 = vmatpush1.msra.mxu0 0.0
  %2757 = vmatprep.subr.mxu0 0.0
  %2758 = vmatpush1.msra.mxu0 0.0
  %2759 = vmatprep.subr.mxu0 0.0
  %2760 = vmatpush1.msra.mxu0 0.0
  %2761 = vmatprep.subr.mxu0 0.0
  %2762 = vmatpush1.msra.mxu0 0.0
  %2763 = vmatprep.subr.mxu0 0.0
  %2764 = vmatpush1.msra.mxu0 0.0
  %2765 = vmatprep.subr.mxu0 0.0
  %2766 = vmatpush1.msra.mxu0 %v2686
  %2767 = vmatprep.subr.mxu0 0.0
  %2768 = vmatpush2.msra.mxu0 0.0
  %2769 = vmatprep.subr.mxu0 0.0
  %2770 = vmatpush2.msra.mxu0 0.0
  %2771 = vmatprep.subr.mxu0 0.0
  %2772 = vmatpush2.msra.mxu0 0.0
  %2773 = vmatprep.subr.mxu0 0.0
  %2774 = vmatpush2.msra.mxu0 0.0
  %2775 = vmatprep.subr.mxu0 0.0
  %2776 = vmatpush2.msra.mxu0 0.0
  %2777 = vmatprep.subr.mxu0 0.0
  %2778 = vmatpush2.msra.mxu0 0.0
  %2779 = vmatprep.subr.mxu0 0.0
  %2780 = vmatpush2.msra.mxu0 0.0
  %2781 = vmatprep.subr.mxu0 0.0
  %2782 = vmatpush2.msra.mxu0 0.0
  %2783 = vmatprep.subr.mxu0 0.0
  %2784 = vmatpush2.msra.mxu0 0.0
  %2785 = vmatprep.subr.mxu0 0.0
  %2786 = vmatpush2.msra.mxu0 0.0
  %2787 = vmatprep.subr.mxu0 0.0
  %2788 = vmatpush2.msra.mxu0 0.0
  %2789 = vmatprep.subr.mxu0 0.0
  %2790 = vmatpush2.msra.mxu0 0.0
  %2791 = vmatprep.subr.mxu0 0.0
  %2792 = vmatpush2.msra.mxu0 0.0
  %2793 = vmatprep.subr.mxu0 0.0
  %2794 = vmatpush2.msra.mxu0 0.0
  %2795 = vmatprep.subr.mxu0 0.0
  %2796 = vmatpush2.msra.mxu0 0.0
  %2797 = vmatprep.subr.mxu0 0.0
  %2798 = vmatpush2.msra.mxu0 0.0
  %2799 = vmatprep.mubr.f32.mxu0 0.0
  %2800 = vmatmul.mubr.f32.gmra.mxu0 %v2688
  %v2801 = vpop.f32.mrf.mxu0
  %v2802 = vadd.f32 0.0, %v2801
  %v2803 = vpop.f32.mrf.mxu0
  %2804 = vmatprep.mubr.f32.mxu0 0.0
  %2805 = vmatmul.mubr.f32.gmra.mxu0 %v2691
  %v2806 = vpop.f32.mrf.mxu0
  %v2807 = vadd.f32 0.0, %v2806
  %v2808 = vpop.f32.mrf.mxu0
  %2809 = vmatprep.mubr.f32.mxu0 0.0
  %2810 = vmatmul.mubr.f32.gmra.mxu0 %v2694
  %v2811 = vpop.f32.mrf.mxu0
  %v2812 = vadd.f32 0.0, %v2811
  %v2813 = vpop.f32.mrf.mxu0
  %2814 = vmatprep.mubr.f32.mxu0 0.0
  %2815 = vmatmul.mubr.f32.gmra.mxu0 %v2697
  %v2816 = vpop.f32.mrf.mxu0
  %v2817 = vadd.f32 0.0, %v2816
  %v2818 = vpop.f32.mrf.mxu0
  %2819 = vmatprep.mubr.f32.mxu0 0.0
  %2820 = vmatmul.mubr.f32.gmra.mxu0 %v2700
  %v2821 = vpop.f32.mrf.mxu0
  %v2822 = vadd.f32 0.0, %v2821
  %v2823 = vpop.f32.mrf.mxu0
  %2824 = vmatprep.mubr.f32.mxu0 0.0
  %2825 = vmatmul.mubr.f32.gmra.mxu0 %v2703
  %v2826 = vpop.f32.mrf.mxu0
  %v2827 = vadd.f32 0.0, %v2826
  %v2828 = vpop.f32.mrf.mxu0
  %2829 = vmatprep.mubr.f32.mxu0 0.0
  %2830 = vmatmul.mubr.f32.gmra.mxu0 %v2706
  %v2831 = vpop.f32.mrf.mxu0
  %v2832 = vadd.f32 0.0, %v2831
  %v2833 = vpop.f32.mrf.mxu0
  %2834 = vmatprep.mubr.f32.mxu0 0.0
  %2835 = vmatmul.mubr.f32.gmra.mxu0 %v2709
  %v2836 = vpop.f32.mrf.mxu0
  %v2837 = vadd.f32 0.0, %v2836
  %v2838 = vpop.f32.mrf.mxu0
  %2839 = vmatprep.mubr.f32.mxu0 0.0
  %2840 = vmatmul.mubr.f32.gmra.mxu0 %v2712
  %v2841 = vpop.f32.mrf.mxu0
  %v2842 = vadd.f32 0.0, %v2841
  %v2843 = vpop.f32.mrf.mxu0
  %2844 = vmatprep.mubr.f32.mxu0 0.0
  %2845 = vmatmul.mubr.f32.gmra.mxu0 %v2715
  %v2846 = vpop.f32.mrf.mxu0
  %v2847 = vadd.f32 0.0, %v2846
  %v2848 = vpop.f32.mrf.mxu0
  %2849 = vmatprep.mubr.f32.mxu0 0.0
  %2850 = vmatmul.mubr.f32.gmra.mxu0 %v2718
  %v2851 = vpop.f32.mrf.mxu0
  %v2852 = vadd.f32 0.0, %v2851
  %v2853 = vpop.f32.mrf.mxu0
  %2854 = vmatprep.mubr.f32.mxu0 0.0
  %2855 = vmatmul.mubr.f32.gmra.mxu0 %v2721
  %v2856 = vpop.f32.mrf.mxu0
  %v2857 = vadd.f32 0.0, %v2856
  %v2858 = vpop.f32.mrf.mxu0
  %2859 = vmatprep.mubr.f32.mxu0 0.0
  %2860 = vmatmul.mubr.f32.gmra.mxu0 %v2724
  %v2861 = vpop.f32.mrf.mxu0
  %v2862 = vadd.f32 0.0, %v2861
  %v2863 = vpop.f32.mrf.mxu0
  %2864 = vmatprep.mubr.f32.mxu0 0.0
  %2865 = vmatmul.mubr.f32.gmra.mxu0 %v2727
  %v2866 = vpop.f32.mrf.mxu0
  %v2867 = vadd.f32 0.0, %v2866
  %v2868 = vpop.f32.mrf.mxu0
  %2869 = vmatprep.mubr.f32.mxu0 0.0
  %2870 = vmatmul.mubr.f32.gmra.mxu0 %v2730
  %v2871 = vpop.f32.mrf.mxu0
  %v2872 = vadd.f32 0.0, %v2871
  %v2873 = vpop.f32.mrf.mxu0
  %2874 = vmatprep.mubr.f32.mxu0 0.0
  %2875 = vmatmul.mubr.f32.gmra.mxu0 %v2733
  %v2876 = vpop.f32.mrf.mxu0
  %v2877 = vadd.f32 0.0, %v2876
  %v2878 = vpop.f32.mrf.mxu0
  %2879 = vdwg.mxu0
  %v2880 = vadd.f32 %v2429, %v2802
  %v2881 = vadd.f32 %v2430, %v2807
  %v2882 = vadd.f32 %v2431, %v2812
  %v2883 = vadd.f32 %v2432, %v2817
  %v2884 = vadd.f32 %v2433, %v2822
  %v2885 = vadd.f32 %v2434, %v2827
  %v2886 = vadd.f32 %v2435, %v2832
  %v2887 = vadd.f32 %v2436, %v2837
  %v2888 = vadd.f32 %v2437, %v2842
  %v2889 = vadd.f32 %v2438, %v2847
  %v2890 = vadd.f32 %v2439, %v2852
  %v2891 = vadd.f32 %v2440, %v2857
  %v2892 = vadd.f32 %v2441, %v2862
  %v2893 = vadd.f32 %v2442, %v2867
  %v2894 = vadd.f32 %v2443, %v2872
  %v2895 = vadd.f32 %v2444, %v2877
  %v2896 = vld [vmem:[%s4 + $0x20] sm:$0xff]
  %2897 = vmatprep.subr.mxu0 0.0
  %2898 = vmatpush1.msra.mxu0 0.0
  %2899 = vmatprep.subr.mxu0 0.0
  %2900 = vmatpush1.msra.mxu0 0.0
  %2901 = vmatprep.subr.mxu0 0.0
  %2902 = vmatpush1.msra.mxu0 0.0
  %2903 = vmatprep.subr.mxu0 0.0
  %2904 = vmatpush1.msra.mxu0 0.0
  %2905 = vmatprep.subr.mxu0 0.0
  %2906 = vmatpush1.msra.mxu0 0.0
  %2907 = vmatprep.subr.mxu0 0.0
  %2908 = vmatpush1.msra.mxu0 0.0
  %2909 = vmatprep.subr.mxu0 0.0
  %2910 = vmatpush1.msra.mxu0 0.0
  %2911 = vmatprep.subr.mxu0 0.0
  %2912 = vmatpush1.msra.mxu0 0.0
  %2913 = vmatprep.subr.mxu0 0.0
  %2914 = vmatpush1.msra.mxu0 0.0
  %2915 = vmatprep.subr.mxu0 0.0
  %2916 = vmatpush1.msra.mxu0 0.0
  %2917 = vmatprep.subr.mxu0 0.0
  %2918 = vmatpush1.msra.mxu0 0.0
  %2919 = vmatprep.subr.mxu0 0.0
  %2920 = vmatpush1.msra.mxu0 0.0
  %2921 = vmatprep.subr.mxu0 0.0
  %2922 = vmatpush1.msra.mxu0 0.0
  %2923 = vmatprep.subr.mxu0 0.0
  %2924 = vmatpush1.msra.mxu0 0.0
  %2925 = vmatprep.subr.mxu0 0.0
  %2926 = vmatpush1.msra.mxu0 0.0
  %2927 = vmatprep.subr.mxu0 0.0
  %2928 = vmatpush1.msra.mxu0 %v2896
  %2929 = vmatprep.subr.mxu0 0.0
  %2930 = vmatpush2.msra.mxu0 0.0
  %2931 = vmatprep.subr.mxu0 0.0
  %2932 = vmatpush2.msra.mxu0 0.0
  %2933 = vmatprep.subr.mxu0 0.0
  %2934 = vmatpush2.msra.mxu0 0.0
  %2935 = vmatprep.subr.mxu0 0.0
  %2936 = vmatpush2.msra.mxu0 0.0
  %2937 = vmatprep.subr.mxu0 0.0
  %2938 = vmatpush2.msra.mxu0 0.0
  %2939 = vmatprep.subr.mxu0 0.0
  %2940 = vmatpush2.msra.mxu0 0.0
  %2941 = vmatprep.subr.mxu0 0.0
  %2942 = vmatpush2.msra.mxu0 0.0
  %2943 = vmatprep.subr.mxu0 0.0
  %2944 = vmatpush2.msra.mxu0 0.0
  %2945 = vmatprep.subr.mxu0 0.0
  %2946 = vmatpush2.msra.mxu0 0.0
  %2947 = vmatprep.subr.mxu0 0.0
  %2948 = vmatpush2.msra.mxu0 0.0
  %2949 = vmatprep.subr.mxu0 0.0
  %2950 = vmatpush2.msra.mxu0 0.0
  %2951 = vmatprep.subr.mxu0 0.0
  %2952 = vmatpush2.msra.mxu0 0.0
  %2953 = vmatprep.subr.mxu0 0.0
  %2954 = vmatpush2.msra.mxu0 0.0
  %2955 = vmatprep.subr.mxu0 0.0
  %2956 = vmatpush2.msra.mxu0 0.0
  %2957 = vmatprep.subr.mxu0 0.0
  %2958 = vmatpush2.msra.mxu0 0.0
  %2959 = vmatprep.subr.mxu0 0.0
  %2960 = vmatpush2.msra.mxu0 0.0
  %2961 = vmatprep.mubr.f32.mxu0 0.0
  %2962 = vmatmul.mubr.f32.gmra.mxu0 %v2478
  %v2963 = vpop.f32.mrf.mxu0
  %v2964 = vadd.f32 0.0, %v2963
  %v2965 = vpop.f32.mrf.mxu0
  %2966 = vmatprep.mubr.f32.mxu0 0.0
  %2967 = vmatmul.mubr.f32.gmra.mxu0 %v2481
  %v2968 = vpop.f32.mrf.mxu0
  %v2969 = vadd.f32 0.0, %v2968
  %v2970 = vpop.f32.mrf.mxu0
  %2971 = vmatprep.mubr.f32.mxu0 0.0
  %2972 = vmatmul.mubr.f32.gmra.mxu0 %v2484
  %v2973 = vpop.f32.mrf.mxu0
  %v2974 = vadd.f32 0.0, %v2973
  %v2975 = vpop.f32.mrf.mxu0
  %2976 = vmatprep.mubr.f32.mxu0 0.0
  %2977 = vmatmul.mubr.f32.gmra.mxu0 %v2487
  %v2978 = vpop.f32.mrf.mxu0
  %v2979 = vadd.f32 0.0, %v2978
  %v2980 = vpop.f32.mrf.mxu0
  %2981 = vmatprep.mubr.f32.mxu0 0.0
  %2982 = vmatmul.mubr.f32.gmra.mxu0 %v2490
  %v2983 = vpop.f32.mrf.mxu0
  %v2984 = vadd.f32 0.0, %v2983
  %v2985 = vpop.f32.mrf.mxu0
  %2986 = vmatprep.mubr.f32.mxu0 0.0
  %2987 = vmatmul.mubr.f32.gmra.mxu0 %v2493
  %v2988 = vpop.f32.mrf.mxu0
  %v2989 = vadd.f32 0.0, %v2988
  %v2990 = vpop.f32.mrf.mxu0
  %2991 = vmatprep.mubr.f32.mxu0 0.0
  %2992 = vmatmul.mubr.f32.gmra.mxu0 %v2496
  %v2993 = vpop.f32.mrf.mxu0
  %v2994 = vadd.f32 0.0, %v2993
  %v2995 = vpop.f32.mrf.mxu0
  %2996 = vmatprep.mubr.f32.mxu0 0.0
  %2997 = vmatmul.mubr.f32.gmra.mxu0 %v2499
  %v2998 = vpop.f32.mrf.mxu0
  %v2999 = vadd.f32 0.0, %v2998
  %v3000 = vpop.f32.mrf.mxu0
  %3001 = vmatprep.mubr.f32.mxu0 0.0
  %3002 = vmatmul.mubr.f32.gmra.mxu0 %v2502
  %v3003 = vpop.f32.mrf.mxu0
  %v3004 = vadd.f32 0.0, %v3003
  %v3005 = vpop.f32.mrf.mxu0
  %3006 = vmatprep.mubr.f32.mxu0 0.0
  %3007 = vmatmul.mubr.f32.gmra.mxu0 %v2505
  %v3008 = vpop.f32.mrf.mxu0
  %v3009 = vadd.f32 0.0, %v3008
  %v3010 = vpop.f32.mrf.mxu0
  %3011 = vmatprep.mubr.f32.mxu0 0.0
  %3012 = vmatmul.mubr.f32.gmra.mxu0 %v2508
  %v3013 = vpop.f32.mrf.mxu0
  %v3014 = vadd.f32 0.0, %v3013
  %v3015 = vpop.f32.mrf.mxu0
  %3016 = vmatprep.mubr.f32.mxu0 0.0
  %3017 = vmatmul.mubr.f32.gmra.mxu0 %v2511
  %v3018 = vpop.f32.mrf.mxu0
  %v3019 = vadd.f32 0.0, %v3018
  %v3020 = vpop.f32.mrf.mxu0
  %3021 = vmatprep.mubr.f32.mxu0 0.0
  %3022 = vmatmul.mubr.f32.gmra.mxu0 %v2514
  %v3023 = vpop.f32.mrf.mxu0
  %v3024 = vadd.f32 0.0, %v3023
  %v3025 = vpop.f32.mrf.mxu0
  %3026 = vmatprep.mubr.f32.mxu0 0.0
  %3027 = vmatmul.mubr.f32.gmra.mxu0 %v2517
  %v3028 = vpop.f32.mrf.mxu0
  %v3029 = vadd.f32 0.0, %v3028
  %v3030 = vpop.f32.mrf.mxu0
  %3031 = vmatprep.mubr.f32.mxu0 0.0
  %3032 = vmatmul.mubr.f32.gmra.mxu0 %v2520
  %v3033 = vpop.f32.mrf.mxu0
  %v3034 = vadd.f32 0.0, %v3033
  %v3035 = vpop.f32.mrf.mxu0
  %3036 = vmatprep.mubr.f32.mxu0 0.0
  %3037 = vmatmul.mubr.f32.gmra.mxu0 %v2523
  %v3038 = vpop.f32.mrf.mxu0
  %v3039 = vadd.f32 0.0, %v3038
  %v3040 = vpop.f32.mrf.mxu0
  %3041 = vdwg.mxu0
  %v3042 = vadd.f32 %v2880, %v2964
  %v3043 = vadd.f32 %v2881, %v2969
  %v3044 = vadd.f32 %v2882, %v2974
  %v3045 = vadd.f32 %v2883, %v2979
  %v3046 = vadd.f32 %v2884, %v2984
  %v3047 = vadd.f32 %v2885, %v2989
  %v3048 = vadd.f32 %v2886, %v2994
  %v3049 = vadd.f32 %v2887, %v2999
  %v3050 = vadd.f32 %v2888, %v3004
  %v3051 = vadd.f32 %v2889, %v3009
  %v3052 = vadd.f32 %v2890, %v3014
  %v3053 = vadd.f32 %v2891, %v3019
  %v3054 = vadd.f32 %v2892, %v3024
  %v3055 = vadd.f32 %v2893, %v3029
  %v3056 = vadd.f32 %v2894, %v3034
  %v3057 = vadd.f32 %v2895, %v3039
  %v3058 = vld [vmem:[%s0 + $0x280] sm:$0xff]
  %v3059 = vld [vmem:[%s0 + $0x288] sm:$0xff]
  %v3060 = vld [vmem:[%s0 + $0x290] sm:$0xff]
  %v3061 = vld [vmem:[%s0 + $0x298] sm:$0xff]
  %v3062 = vld [vmem:[%s0 + $0x2a0] sm:$0xff]
  %v3063 = vld [vmem:[%s0 + $0x2a8] sm:$0xff]
  %v3064 = vld [vmem:[%s0 + $0x2b0] sm:$0xff]
  %v3065 = vld [vmem:[%s0 + $0x2b8] sm:$0xff]
  %v3066 = vld [vmem:[%s0 + $0x2c0] sm:$0xff]
  %v3067 = vld [vmem:[%s0 + $0x2c8] sm:$0xff]
  %v3068 = vld [vmem:[%s0 + $0x2d0] sm:$0xff]
  %v3069 = vld [vmem:[%s0 + $0x2d8] sm:$0xff]
  %v3070 = vld [vmem:[%s0 + $0x2e0] sm:$0xff]
  %v3071 = vld [vmem:[%s0 + $0x2e8] sm:$0xff]
  %v3072 = vld [vmem:[%s0 + $0x2f0] sm:$0xff]
  %v3073 = vld [vmem:[%s0 + $0x2f8] sm:$0xff]
  %v3074 = vld [vmem:[%s1 + $0x280] sm:$0xff]
  %v3075 = vld [vmem:[%s1 + $0x288] sm:$0xff]
  %v3076 = vld [vmem:[%s1 + $0x290] sm:$0xff]
  %v3077 = vld [vmem:[%s1 + $0x298] sm:$0xff]
  %v3078 = vld [vmem:[%s1 + $0x2a0] sm:$0xff]
  %v3079 = vld [vmem:[%s1 + $0x2a8] sm:$0xff]
  %v3080 = vld [vmem:[%s1 + $0x2b0] sm:$0xff]
  %v3081 = vld [vmem:[%s1 + $0x2b8] sm:$0xff]
  %v3082 = vld [vmem:[%s1 + $0x2c0] sm:$0xff]
  %v3083 = vld [vmem:[%s1 + $0x2c8] sm:$0xff]
  %v3084 = vld [vmem:[%s1 + $0x2d0] sm:$0xff]
  %v3085 = vld [vmem:[%s1 + $0x2d8] sm:$0xff]
  %v3086 = vld [vmem:[%s1 + $0x2e0] sm:$0xff]
  %v3087 = vld [vmem:[%s1 + $0x2e8] sm:$0xff]
  %v3088 = vld [vmem:[%s1 + $0x2f0] sm:$0xff]
  %v3089 = vld [vmem:[%s1 + $0x2f8] sm:$0xff]
  %v3091 = vsel %vm56, %v3058, 0
  %v3094 = vsel %vm56, %v3059, 0
  %v3097 = vsel %vm56, %v3060, 0
  %v3100 = vsel %vm56, %v3061, 0
  %v3103 = vsel %vm56, %v3062, 0
  %v3106 = vsel %vm56, %v3063, 0
  %v3109 = vsel %vm56, %v3064, 0
  %v3112 = vsel %vm56, %v3065, 0
  %v3115 = vsel %vm56, %v3066, 0
  %v3118 = vsel %vm56, %v3067, 0
  %v3121 = vsel %vm56, %v3068, 0
  %v3124 = vsel %vm56, %v3069, 0
  %v3127 = vsel %vm56, %v3070, 0
  %v3130 = vsel %vm56, %v3071, 0
  %v3133 = vsel %vm56, %v3072, 0
  %v3136 = vsel %vm56, %v3073, 0
  %3138 = vmatprep.subr.mxu0 0.0
  %3139 = vmatpush1.msra.mxu0 0.0
  %3140 = vmatprep.subr.mxu0 0.0
  %3141 = vmatpush1.msra.mxu0 0.0
  %3142 = vmatprep.subr.mxu0 0.0
  %3143 = vmatpush1.msra.mxu0 0.0
  %3144 = vmatprep.subr.mxu0 0.0
  %3145 = vmatpush1.msra.mxu0 0.0
  %3146 = vmatprep.subr.mxu0 0.0
  %3147 = vmatpush1.msra.mxu0 0.0
  %3148 = vmatprep.subr.mxu0 0.0
  %3149 = vmatpush1.msra.mxu0 0.0
  %3150 = vmatprep.subr.mxu0 0.0
  %3151 = vmatpush1.msra.mxu0 0.0
  %3152 = vmatprep.subr.mxu0 0.0
  %3153 = vmatpush1.msra.mxu0 0.0
  %3154 = vmatprep.subr.mxu0 0.0
  %3155 = vmatpush1.msra.mxu0 0.0
  %3156 = vmatprep.subr.mxu0 0.0
  %3157 = vmatpush1.msra.mxu0 0.0
  %3158 = vmatprep.subr.mxu0 0.0
  %3159 = vmatpush1.msra.mxu0 0.0
  %3160 = vmatprep.subr.mxu0 0.0
  %3161 = vmatpush1.msra.mxu0 0.0
  %3162 = vmatprep.subr.mxu0 0.0
  %3163 = vmatpush1.msra.mxu0 0.0
  %3164 = vmatprep.subr.mxu0 0.0
  %3165 = vmatpush1.msra.mxu0 0.0
  %3166 = vmatprep.subr.mxu0 0.0
  %3167 = vmatpush1.msra.mxu0 0.0
  %3168 = vmatprep.subr.mxu0 0.0
  %3169 = vmatpush1.msra.mxu0 %v39
  %3170 = vmatprep.subr.mxu0 0.0
  %3171 = vmatpush2.msra.mxu0 0.0
  %3172 = vmatprep.subr.mxu0 0.0
  %3173 = vmatpush2.msra.mxu0 0.0
  %3174 = vmatprep.subr.mxu0 0.0
  %3175 = vmatpush2.msra.mxu0 0.0
  %3176 = vmatprep.subr.mxu0 0.0
  %3177 = vmatpush2.msra.mxu0 0.0
  %3178 = vmatprep.subr.mxu0 0.0
  %3179 = vmatpush2.msra.mxu0 0.0
  %3180 = vmatprep.subr.mxu0 0.0
  %3181 = vmatpush2.msra.mxu0 0.0
  %3182 = vmatprep.subr.mxu0 0.0
  %3183 = vmatpush2.msra.mxu0 0.0
  %3184 = vmatprep.subr.mxu0 0.0
  %3185 = vmatpush2.msra.mxu0 0.0
  %3186 = vmatprep.subr.mxu0 0.0
  %3187 = vmatpush2.msra.mxu0 0.0
  %3188 = vmatprep.subr.mxu0 0.0
  %3189 = vmatpush2.msra.mxu0 0.0
  %3190 = vmatprep.subr.mxu0 0.0
  %3191 = vmatpush2.msra.mxu0 0.0
  %3192 = vmatprep.subr.mxu0 0.0
  %3193 = vmatpush2.msra.mxu0 0.0
  %3194 = vmatprep.subr.mxu0 0.0
  %3195 = vmatpush2.msra.mxu0 0.0
  %3196 = vmatprep.subr.mxu0 0.0
  %3197 = vmatpush2.msra.mxu0 0.0
  %3198 = vmatprep.subr.mxu0 0.0
  %3199 = vmatpush2.msra.mxu0 0.0
  %3200 = vmatprep.subr.mxu0 0.0
  %3201 = vmatpush2.msra.mxu0 0.0
  %3202 = vmatprep.mubr.f32.mxu0 0.0
  %3203 = vmatmul.mubr.f32.gmra.mxu0 %v3091
  %v3204 = vpop.f32.mrf.mxu0
  %v3205 = vadd.f32 %v3074, %v3204
  %v3206 = vpop.f32.mrf.mxu0
  %3207 = vmatprep.mubr.f32.mxu0 0.0
  %3208 = vmatmul.mubr.f32.gmra.mxu0 %v3094
  %v3209 = vpop.f32.mrf.mxu0
  %v3210 = vadd.f32 %v3075, %v3209
  %v3211 = vpop.f32.mrf.mxu0
  %3212 = vmatprep.mubr.f32.mxu0 0.0
  %3213 = vmatmul.mubr.f32.gmra.mxu0 %v3097
  %v3214 = vpop.f32.mrf.mxu0
  %v3215 = vadd.f32 %v3076, %v3214
  %v3216 = vpop.f32.mrf.mxu0
  %3217 = vmatprep.mubr.f32.mxu0 0.0
  %3218 = vmatmul.mubr.f32.gmra.mxu0 %v3100
  %v3219 = vpop.f32.mrf.mxu0
  %v3220 = vadd.f32 %v3077, %v3219
  %v3221 = vpop.f32.mrf.mxu0
  %3222 = vmatprep.mubr.f32.mxu0 0.0
  %3223 = vmatmul.mubr.f32.gmra.mxu0 %v3103
  %v3224 = vpop.f32.mrf.mxu0
  %v3225 = vadd.f32 %v3078, %v3224
  %v3226 = vpop.f32.mrf.mxu0
  %3227 = vmatprep.mubr.f32.mxu0 0.0
  %3228 = vmatmul.mubr.f32.gmra.mxu0 %v3106
  %v3229 = vpop.f32.mrf.mxu0
  %v3230 = vadd.f32 %v3079, %v3229
  %v3231 = vpop.f32.mrf.mxu0
  %3232 = vmatprep.mubr.f32.mxu0 0.0
  %3233 = vmatmul.mubr.f32.gmra.mxu0 %v3109
  %v3234 = vpop.f32.mrf.mxu0
  %v3235 = vadd.f32 %v3080, %v3234
  %v3236 = vpop.f32.mrf.mxu0
  %3237 = vmatprep.mubr.f32.mxu0 0.0
  %3238 = vmatmul.mubr.f32.gmra.mxu0 %v3112
  %v3239 = vpop.f32.mrf.mxu0
  %v3240 = vadd.f32 %v3081, %v3239
  %v3241 = vpop.f32.mrf.mxu0
  %3242 = vmatprep.mubr.f32.mxu0 0.0
  %3243 = vmatmul.mubr.f32.gmra.mxu0 %v3115
  %v3244 = vpop.f32.mrf.mxu0
  %v3245 = vadd.f32 %v3082, %v3244
  %v3246 = vpop.f32.mrf.mxu0
  %3247 = vmatprep.mubr.f32.mxu0 0.0
  %3248 = vmatmul.mubr.f32.gmra.mxu0 %v3118
  %v3249 = vpop.f32.mrf.mxu0
  %v3250 = vadd.f32 %v3083, %v3249
  %v3251 = vpop.f32.mrf.mxu0
  %3252 = vmatprep.mubr.f32.mxu0 0.0
  %3253 = vmatmul.mubr.f32.gmra.mxu0 %v3121
  %v3254 = vpop.f32.mrf.mxu0
  %v3255 = vadd.f32 %v3084, %v3254
  %v3256 = vpop.f32.mrf.mxu0
  %3257 = vmatprep.mubr.f32.mxu0 0.0
  %3258 = vmatmul.mubr.f32.gmra.mxu0 %v3124
  %v3259 = vpop.f32.mrf.mxu0
  %v3260 = vadd.f32 %v3085, %v3259
  %v3261 = vpop.f32.mrf.mxu0
  %3262 = vmatprep.mubr.f32.mxu0 0.0
  %3263 = vmatmul.mubr.f32.gmra.mxu0 %v3127
  %v3264 = vpop.f32.mrf.mxu0
  %v3265 = vadd.f32 %v3086, %v3264
  %v3266 = vpop.f32.mrf.mxu0
  %3267 = vmatprep.mubr.f32.mxu0 0.0
  %3268 = vmatmul.mubr.f32.gmra.mxu0 %v3130
  %v3269 = vpop.f32.mrf.mxu0
  %v3270 = vadd.f32 %v3087, %v3269
  %v3271 = vpop.f32.mrf.mxu0
  %3272 = vmatprep.mubr.f32.mxu0 0.0
  %3273 = vmatmul.mubr.f32.gmra.mxu0 %v3133
  %v3274 = vpop.f32.mrf.mxu0
  %v3275 = vadd.f32 %v3088, %v3274
  %v3276 = vpop.f32.mrf.mxu0
  %3277 = vmatprep.mubr.f32.mxu0 0.0
  %3278 = vmatmul.mubr.f32.gmra.mxu0 %v3136
  %v3279 = vpop.f32.mrf.mxu0
  %v3280 = vadd.f32 %v3089, %v3279
  %v3281 = vpop.f32.mrf.mxu0
  %3282 = vdwg.mxu0
  %v3283 = vmax.f32 %v3205, 0.0
  %v3284 = vmax.f32 %v3210, 0.0
  %v3285 = vmax.f32 %v3215, 0.0
  %v3286 = vmax.f32 %v3220, 0.0
  %v3287 = vmax.f32 %v3225, 0.0
  %v3288 = vmax.f32 %v3230, 0.0
  %v3289 = vmax.f32 %v3235, 0.0
  %v3290 = vmax.f32 %v3240, 0.0
  %v3291 = vmax.f32 %v3245, 0.0
  %v3292 = vmax.f32 %v3250, 0.0
  %v3293 = vmax.f32 %v3255, 0.0
  %v3294 = vmax.f32 %v3260, 0.0
  %v3295 = vmax.f32 %v3265, 0.0
  %v3296 = vmax.f32 %v3270, 0.0
  %v3297 = vmax.f32 %v3275, 0.0
  %v3298 = vmax.f32 %v3280, 0.0
  %v3299 = vld [vmem:[%s3 + $0x28] sm:$0xff]
  %v3301 = vsel %vm56, %v3283, 0
  %v3304 = vsel %vm56, %v3284, 0
  %v3307 = vsel %vm56, %v3285, 0
  %v3310 = vsel %vm56, %v3286, 0
  %v3313 = vsel %vm56, %v3287, 0
  %v3316 = vsel %vm56, %v3288, 0
  %v3319 = vsel %vm56, %v3289, 0
  %v3322 = vsel %vm56, %v3290, 0
  %v3325 = vsel %vm56, %v3291, 0
  %v3328 = vsel %vm56, %v3292, 0
  %v3331 = vsel %vm56, %v3293, 0
  %v3334 = vsel %vm56, %v3294, 0
  %v3337 = vsel %vm56, %v3295, 0
  %v3340 = vsel %vm56, %v3296, 0
  %v3343 = vsel %vm56, %v3297, 0
  %v3346 = vsel %vm56, %v3298, 0
  %3348 = vmatprep.subr.mxu0 0.0
  %3349 = vmatpush1.msra.mxu0 0.0
  %3350 = vmatprep.subr.mxu0 0.0
  %3351 = vmatpush1.msra.mxu0 0.0
  %3352 = vmatprep.subr.mxu0 0.0
  %3353 = vmatpush1.msra.mxu0 0.0
  %3354 = vmatprep.subr.mxu0 0.0
  %3355 = vmatpush1.msra.mxu0 0.0
  %3356 = vmatprep.subr.mxu0 0.0
  %3357 = vmatpush1.msra.mxu0 0.0
  %3358 = vmatprep.subr.mxu0 0.0
  %3359 = vmatpush1.msra.mxu0 0.0
  %3360 = vmatprep.subr.mxu0 0.0
  %3361 = vmatpush1.msra.mxu0 0.0
  %3362 = vmatprep.subr.mxu0 0.0
  %3363 = vmatpush1.msra.mxu0 0.0
  %3364 = vmatprep.subr.mxu0 0.0
  %3365 = vmatpush1.msra.mxu0 0.0
  %3366 = vmatprep.subr.mxu0 0.0
  %3367 = vmatpush1.msra.mxu0 0.0
  %3368 = vmatprep.subr.mxu0 0.0
  %3369 = vmatpush1.msra.mxu0 0.0
  %3370 = vmatprep.subr.mxu0 0.0
  %3371 = vmatpush1.msra.mxu0 0.0
  %3372 = vmatprep.subr.mxu0 0.0
  %3373 = vmatpush1.msra.mxu0 0.0
  %3374 = vmatprep.subr.mxu0 0.0
  %3375 = vmatpush1.msra.mxu0 0.0
  %3376 = vmatprep.subr.mxu0 0.0
  %3377 = vmatpush1.msra.mxu0 0.0
  %3378 = vmatprep.subr.mxu0 0.0
  %3379 = vmatpush1.msra.mxu0 %v3299
  %3380 = vmatprep.subr.mxu0 0.0
  %3381 = vmatpush2.msra.mxu0 0.0
  %3382 = vmatprep.subr.mxu0 0.0
  %3383 = vmatpush2.msra.mxu0 0.0
  %3384 = vmatprep.subr.mxu0 0.0
  %3385 = vmatpush2.msra.mxu0 0.0
  %3386 = vmatprep.subr.mxu0 0.0
  %3387 = vmatpush2.msra.mxu0 0.0
  %3388 = vmatprep.subr.mxu0 0.0
  %3389 = vmatpush2.msra.mxu0 0.0
  %3390 = vmatprep.subr.mxu0 0.0
  %3391 = vmatpush2.msra.mxu0 0.0
  %3392 = vmatprep.subr.mxu0 0.0
  %3393 = vmatpush2.msra.mxu0 0.0
  %3394 = vmatprep.subr.mxu0 0.0
  %3395 = vmatpush2.msra.mxu0 0.0
  %3396 = vmatprep.subr.mxu0 0.0
  %3397 = vmatpush2.msra.mxu0 0.0
  %3398 = vmatprep.subr.mxu0 0.0
  %3399 = vmatpush2.msra.mxu0 0.0
  %3400 = vmatprep.subr.mxu0 0.0
  %3401 = vmatpush2.msra.mxu0 0.0
  %3402 = vmatprep.subr.mxu0 0.0
  %3403 = vmatpush2.msra.mxu0 0.0
  %3404 = vmatprep.subr.mxu0 0.0
  %3405 = vmatpush2.msra.mxu0 0.0
  %3406 = vmatprep.subr.mxu0 0.0
  %3407 = vmatpush2.msra.mxu0 0.0
  %3408 = vmatprep.subr.mxu0 0.0
  %3409 = vmatpush2.msra.mxu0 0.0
  %3410 = vmatprep.subr.mxu0 0.0
  %3411 = vmatpush2.msra.mxu0 0.0
  %3412 = vmatprep.mubr.f32.mxu0 0.0
  %3413 = vmatmul.mubr.f32.gmra.mxu0 %v3301
  %v3414 = vpop.f32.mrf.mxu0
  %v3415 = vadd.f32 0.0, %v3414
  %v3416 = vpop.f32.mrf.mxu0
  %3417 = vmatprep.mubr.f32.mxu0 0.0
  %3418 = vmatmul.mubr.f32.gmra.mxu0 %v3304
  %v3419 = vpop.f32.mrf.mxu0
  %v3420 = vadd.f32 0.0, %v3419
  %v3421 = vpop.f32.mrf.mxu0
  %3422 = vmatprep.mubr.f32.mxu0 0.0
  %3423 = vmatmul.mubr.f32.gmra.mxu0 %v3307
  %v3424 = vpop.f32.mrf.mxu0
  %v3425 = vadd.f32 0.0, %v3424
  %v3426 = vpop.f32.mrf.mxu0
  %3427 = vmatprep.mubr.f32.mxu0 0.0
  %3428 = vmatmul.mubr.f32.gmra.mxu0 %v3310
  %v3429 = vpop.f32.mrf.mxu0
  %v3430 = vadd.f32 0.0, %v3429
  %v3431 = vpop.f32.mrf.mxu0
  %3432 = vmatprep.mubr.f32.mxu0 0.0
  %3433 = vmatmul.mubr.f32.gmra.mxu0 %v3313
  %v3434 = vpop.f32.mrf.mxu0
  %v3435 = vadd.f32 0.0, %v3434
  %v3436 = vpop.f32.mrf.mxu0
  %3437 = vmatprep.mubr.f32.mxu0 0.0
  %3438 = vmatmul.mubr.f32.gmra.mxu0 %v3316
  %v3439 = vpop.f32.mrf.mxu0
  %v3440 = vadd.f32 0.0, %v3439
  %v3441 = vpop.f32.mrf.mxu0
  %3442 = vmatprep.mubr.f32.mxu0 0.0
  %3443 = vmatmul.mubr.f32.gmra.mxu0 %v3319
  %v3444 = vpop.f32.mrf.mxu0
  %v3445 = vadd.f32 0.0, %v3444
  %v3446 = vpop.f32.mrf.mxu0
  %3447 = vmatprep.mubr.f32.mxu0 0.0
  %3448 = vmatmul.mubr.f32.gmra.mxu0 %v3322
  %v3449 = vpop.f32.mrf.mxu0
  %v3450 = vadd.f32 0.0, %v3449
  %v3451 = vpop.f32.mrf.mxu0
  %3452 = vmatprep.mubr.f32.mxu0 0.0
  %3453 = vmatmul.mubr.f32.gmra.mxu0 %v3325
  %v3454 = vpop.f32.mrf.mxu0
  %v3455 = vadd.f32 0.0, %v3454
  %v3456 = vpop.f32.mrf.mxu0
  %3457 = vmatprep.mubr.f32.mxu0 0.0
  %3458 = vmatmul.mubr.f32.gmra.mxu0 %v3328
  %v3459 = vpop.f32.mrf.mxu0
  %v3460 = vadd.f32 0.0, %v3459
  %v3461 = vpop.f32.mrf.mxu0
  %3462 = vmatprep.mubr.f32.mxu0 0.0
  %3463 = vmatmul.mubr.f32.gmra.mxu0 %v3331
  %v3464 = vpop.f32.mrf.mxu0
  %v3465 = vadd.f32 0.0, %v3464
  %v3466 = vpop.f32.mrf.mxu0
  %3467 = vmatprep.mubr.f32.mxu0 0.0
  %3468 = vmatmul.mubr.f32.gmra.mxu0 %v3334
  %v3469 = vpop.f32.mrf.mxu0
  %v3470 = vadd.f32 0.0, %v3469
  %v3471 = vpop.f32.mrf.mxu0
  %3472 = vmatprep.mubr.f32.mxu0 0.0
  %3473 = vmatmul.mubr.f32.gmra.mxu0 %v3337
  %v3474 = vpop.f32.mrf.mxu0
  %v3475 = vadd.f32 0.0, %v3474
  %v3476 = vpop.f32.mrf.mxu0
  %3477 = vmatprep.mubr.f32.mxu0 0.0
  %3478 = vmatmul.mubr.f32.gmra.mxu0 %v3340
  %v3479 = vpop.f32.mrf.mxu0
  %v3480 = vadd.f32 0.0, %v3479
  %v3481 = vpop.f32.mrf.mxu0
  %3482 = vmatprep.mubr.f32.mxu0 0.0
  %3483 = vmatmul.mubr.f32.gmra.mxu0 %v3343
  %v3484 = vpop.f32.mrf.mxu0
  %v3485 = vadd.f32 0.0, %v3484
  %v3486 = vpop.f32.mrf.mxu0
  %3487 = vmatprep.mubr.f32.mxu0 0.0
  %3488 = vmatmul.mubr.f32.gmra.mxu0 %v3346
  %v3489 = vpop.f32.mrf.mxu0
  %v3490 = vadd.f32 0.0, %v3489
  %v3491 = vpop.f32.mrf.mxu0
  %3492 = vdwg.mxu0
  %v3493 = vadd.f32 %v3042, %v3415
  %v3494 = vadd.f32 %v3043, %v3420
  %v3495 = vadd.f32 %v3044, %v3425
  %v3496 = vadd.f32 %v3045, %v3430
  %v3497 = vadd.f32 %v3046, %v3435
  %v3498 = vadd.f32 %v3047, %v3440
  %v3499 = vadd.f32 %v3048, %v3445
  %v3500 = vadd.f32 %v3049, %v3450
  %v3501 = vadd.f32 %v3050, %v3455
  %v3502 = vadd.f32 %v3051, %v3460
  %v3503 = vadd.f32 %v3052, %v3465
  %v3504 = vadd.f32 %v3053, %v3470
  %v3505 = vadd.f32 %v3054, %v3475
  %v3506 = vadd.f32 %v3055, %v3480
  %v3507 = vadd.f32 %v3056, %v3485
  %v3508 = vadd.f32 %v3057, %v3490
  %v3509 = vld [vmem:[%s4 + $0x28] sm:$0xff]
  %3510 = vmatprep.subr.mxu0 0.0
  %3511 = vmatpush1.msra.mxu0 0.0
  %3512 = vmatprep.subr.mxu0 0.0
  %3513 = vmatpush1.msra.mxu0 0.0
  %3514 = vmatprep.subr.mxu0 0.0
  %3515 = vmatpush1.msra.mxu0 0.0
  %3516 = vmatprep.subr.mxu0 0.0
  %3517 = vmatpush1.msra.mxu0 0.0
  %3518 = vmatprep.subr.mxu0 0.0
  %3519 = vmatpush1.msra.mxu0 0.0
  %3520 = vmatprep.subr.mxu0 0.0
  %3521 = vmatpush1.msra.mxu0 0.0
  %3522 = vmatprep.subr.mxu0 0.0
  %3523 = vmatpush1.msra.mxu0 0.0
  %3524 = vmatprep.subr.mxu0 0.0
  %3525 = vmatpush1.msra.mxu0 0.0
  %3526 = vmatprep.subr.mxu0 0.0
  %3527 = vmatpush1.msra.mxu0 0.0
  %3528 = vmatprep.subr.mxu0 0.0
  %3529 = vmatpush1.msra.mxu0 0.0
  %3530 = vmatprep.subr.mxu0 0.0
  %3531 = vmatpush1.msra.mxu0 0.0
  %3532 = vmatprep.subr.mxu0 0.0
  %3533 = vmatpush1.msra.mxu0 0.0
  %3534 = vmatprep.subr.mxu0 0.0
  %3535 = vmatpush1.msra.mxu0 0.0
  %3536 = vmatprep.subr.mxu0 0.0
  %3537 = vmatpush1.msra.mxu0 0.0
  %3538 = vmatprep.subr.mxu0 0.0
  %3539 = vmatpush1.msra.mxu0 0.0
  %3540 = vmatprep.subr.mxu0 0.0
  %3541 = vmatpush1.msra.mxu0 %v3509
  %3542 = vmatprep.subr.mxu0 0.0
  %3543 = vmatpush2.msra.mxu0 0.0
  %3544 = vmatprep.subr.mxu0 0.0
  %3545 = vmatpush2.msra.mxu0 0.0
  %3546 = vmatprep.subr.mxu0 0.0
  %3547 = vmatpush2.msra.mxu0 0.0
  %3548 = vmatprep.subr.mxu0 0.0
  %3549 = vmatpush2.msra.mxu0 0.0
  %3550 = vmatprep.subr.mxu0 0.0
  %3551 = vmatpush2.msra.mxu0 0.0
  %3552 = vmatprep.subr.mxu0 0.0
  %3553 = vmatpush2.msra.mxu0 0.0
  %3554 = vmatprep.subr.mxu0 0.0
  %3555 = vmatpush2.msra.mxu0 0.0
  %3556 = vmatprep.subr.mxu0 0.0
  %3557 = vmatpush2.msra.mxu0 0.0
  %3558 = vmatprep.subr.mxu0 0.0
  %3559 = vmatpush2.msra.mxu0 0.0
  %3560 = vmatprep.subr.mxu0 0.0
  %3561 = vmatpush2.msra.mxu0 0.0
  %3562 = vmatprep.subr.mxu0 0.0
  %3563 = vmatpush2.msra.mxu0 0.0
  %3564 = vmatprep.subr.mxu0 0.0
  %3565 = vmatpush2.msra.mxu0 0.0
  %3566 = vmatprep.subr.mxu0 0.0
  %3567 = vmatpush2.msra.mxu0 0.0
  %3568 = vmatprep.subr.mxu0 0.0
  %3569 = vmatpush2.msra.mxu0 0.0
  %3570 = vmatprep.subr.mxu0 0.0
  %3571 = vmatpush2.msra.mxu0 0.0
  %3572 = vmatprep.subr.mxu0 0.0
  %3573 = vmatpush2.msra.mxu0 0.0
  %3574 = vmatprep.mubr.f32.mxu0 0.0
  %3575 = vmatmul.mubr.f32.gmra.mxu0 %v3091
  %v3576 = vpop.f32.mrf.mxu0
  %v3577 = vadd.f32 0.0, %v3576
  %v3578 = vpop.f32.mrf.mxu0
  %3579 = vmatprep.mubr.f32.mxu0 0.0
  %3580 = vmatmul.mubr.f32.gmra.mxu0 %v3094
  %v3581 = vpop.f32.mrf.mxu0
  %v3582 = vadd.f32 0.0, %v3581
  %v3583 = vpop.f32.mrf.mxu0
  %3584 = vmatprep.mubr.f32.mxu0 0.0
  %3585 = vmatmul.mubr.f32.gmra.mxu0 %v3097
  %v3586 = vpop.f32.mrf.mxu0
  %v3587 = vadd.f32 0.0, %v3586
  %v3588 = vpop.f32.mrf.mxu0
  %3589 = vmatprep.mubr.f32.mxu0 0.0
  %3590 = vmatmul.mubr.f32.gmra.mxu0 %v3100
  %v3591 = vpop.f32.mrf.mxu0
  %v3592 = vadd.f32 0.0, %v3591
  %v3593 = vpop.f32.mrf.mxu0
  %3594 = vmatprep.mubr.f32.mxu0 0.0
  %3595 = vmatmul.mubr.f32.gmra.mxu0 %v3103
  %v3596 = vpop.f32.mrf.mxu0
  %v3597 = vadd.f32 0.0, %v3596
  %v3598 = vpop.f32.mrf.mxu0
  %3599 = vmatprep.mubr.f32.mxu0 0.0
  %3600 = vmatmul.mubr.f32.gmra.mxu0 %v3106
  %v3601 = vpop.f32.mrf.mxu0
  %v3602 = vadd.f32 0.0, %v3601
  %v3603 = vpop.f32.mrf.mxu0
  %3604 = vmatprep.mubr.f32.mxu0 0.0
  %3605 = vmatmul.mubr.f32.gmra.mxu0 %v3109
  %v3606 = vpop.f32.mrf.mxu0
  %v3607 = vadd.f32 0.0, %v3606
  %v3608 = vpop.f32.mrf.mxu0
  %3609 = vmatprep.mubr.f32.mxu0 0.0
  %3610 = vmatmul.mubr.f32.gmra.mxu0 %v3112
  %v3611 = vpop.f32.mrf.mxu0
  %v3612 = vadd.f32 0.0, %v3611
  %v3613 = vpop.f32.mrf.mxu0
  %3614 = vmatprep.mubr.f32.mxu0 0.0
  %3615 = vmatmul.mubr.f32.gmra.mxu0 %v3115
  %v3616 = vpop.f32.mrf.mxu0
  %v3617 = vadd.f32 0.0, %v3616
  %v3618 = vpop.f32.mrf.mxu0
  %3619 = vmatprep.mubr.f32.mxu0 0.0
  %3620 = vmatmul.mubr.f32.gmra.mxu0 %v3118
  %v3621 = vpop.f32.mrf.mxu0
  %v3622 = vadd.f32 0.0, %v3621
  %v3623 = vpop.f32.mrf.mxu0
  %3624 = vmatprep.mubr.f32.mxu0 0.0
  %3625 = vmatmul.mubr.f32.gmra.mxu0 %v3121
  %v3626 = vpop.f32.mrf.mxu0
  %v3627 = vadd.f32 0.0, %v3626
  %v3628 = vpop.f32.mrf.mxu0
  %3629 = vmatprep.mubr.f32.mxu0 0.0
  %3630 = vmatmul.mubr.f32.gmra.mxu0 %v3124
  %v3631 = vpop.f32.mrf.mxu0
  %v3632 = vadd.f32 0.0, %v3631
  %v3633 = vpop.f32.mrf.mxu0
  %3634 = vmatprep.mubr.f32.mxu0 0.0
  %3635 = vmatmul.mubr.f32.gmra.mxu0 %v3127
  %v3636 = vpop.f32.mrf.mxu0
  %v3637 = vadd.f32 0.0, %v3636
  %v3638 = vpop.f32.mrf.mxu0
  %3639 = vmatprep.mubr.f32.mxu0 0.0
  %3640 = vmatmul.mubr.f32.gmra.mxu0 %v3130
  %v3641 = vpop.f32.mrf.mxu0
  %v3642 = vadd.f32 0.0, %v3641
  %v3643 = vpop.f32.mrf.mxu0
  %3644 = vmatprep.mubr.f32.mxu0 0.0
  %3645 = vmatmul.mubr.f32.gmra.mxu0 %v3133
  %v3646 = vpop.f32.mrf.mxu0
  %v3647 = vadd.f32 0.0, %v3646
  %v3648 = vpop.f32.mrf.mxu0
  %3649 = vmatprep.mubr.f32.mxu0 0.0
  %3650 = vmatmul.mubr.f32.gmra.mxu0 %v3136
  %v3651 = vpop.f32.mrf.mxu0
  %v3652 = vadd.f32 0.0, %v3651
  %v3653 = vpop.f32.mrf.mxu0
  %3654 = vdwg.mxu0
  %v3655 = vadd.f32 %v3493, %v3577
  %v3656 = vadd.f32 %v3494, %v3582
  %v3657 = vadd.f32 %v3495, %v3587
  %v3658 = vadd.f32 %v3496, %v3592
  %v3659 = vadd.f32 %v3497, %v3597
  %v3660 = vadd.f32 %v3498, %v3602
  %v3661 = vadd.f32 %v3499, %v3607
  %v3662 = vadd.f32 %v3500, %v3612
  %v3663 = vadd.f32 %v3501, %v3617
  %v3664 = vadd.f32 %v3502, %v3622
  %v3665 = vadd.f32 %v3503, %v3627
  %v3666 = vadd.f32 %v3504, %v3632
  %v3667 = vadd.f32 %v3505, %v3637
  %v3668 = vadd.f32 %v3506, %v3642
  %v3669 = vadd.f32 %v3507, %v3647
  %v3670 = vadd.f32 %v3508, %v3652
  %v3671 = vld [vmem:[%s0 + $0x300] sm:$0xff]
  %v3672 = vld [vmem:[%s0 + $0x308] sm:$0xff]
  %v3673 = vld [vmem:[%s0 + $0x310] sm:$0xff]
  %v3674 = vld [vmem:[%s0 + $0x318] sm:$0xff]
  %v3675 = vld [vmem:[%s0 + $0x320] sm:$0xff]
  %v3676 = vld [vmem:[%s0 + $0x328] sm:$0xff]
  %v3677 = vld [vmem:[%s0 + $0x330] sm:$0xff]
  %v3678 = vld [vmem:[%s0 + $0x338] sm:$0xff]
  %v3679 = vld [vmem:[%s0 + $0x340] sm:$0xff]
  %v3680 = vld [vmem:[%s0 + $0x348] sm:$0xff]
  %v3681 = vld [vmem:[%s0 + $0x350] sm:$0xff]
  %v3682 = vld [vmem:[%s0 + $0x358] sm:$0xff]
  %v3683 = vld [vmem:[%s0 + $0x360] sm:$0xff]
  %v3684 = vld [vmem:[%s0 + $0x368] sm:$0xff]
  %v3685 = vld [vmem:[%s0 + $0x370] sm:$0xff]
  %v3686 = vld [vmem:[%s0 + $0x378] sm:$0xff]
  %v3687 = vld [vmem:[%s1 + $0x300] sm:$0xff]
  %v3688 = vld [vmem:[%s1 + $0x308] sm:$0xff]
  %v3689 = vld [vmem:[%s1 + $0x310] sm:$0xff]
  %v3690 = vld [vmem:[%s1 + $0x318] sm:$0xff]
  %v3691 = vld [vmem:[%s1 + $0x320] sm:$0xff]
  %v3692 = vld [vmem:[%s1 + $0x328] sm:$0xff]
  %v3693 = vld [vmem:[%s1 + $0x330] sm:$0xff]
  %v3694 = vld [vmem:[%s1 + $0x338] sm:$0xff]
  %v3695 = vld [vmem:[%s1 + $0x340] sm:$0xff]
  %v3696 = vld [vmem:[%s1 + $0x348] sm:$0xff]
  %v3697 = vld [vmem:[%s1 + $0x350] sm:$0xff]
  %v3698 = vld [vmem:[%s1 + $0x358] sm:$0xff]
  %v3699 = vld [vmem:[%s1 + $0x360] sm:$0xff]
  %v3700 = vld [vmem:[%s1 + $0x368] sm:$0xff]
  %v3701 = vld [vmem:[%s1 + $0x370] sm:$0xff]
  %v3702 = vld [vmem:[%s1 + $0x378] sm:$0xff]
  %v3704 = vsel %vm56, %v3671, 0
  %v3707 = vsel %vm56, %v3672, 0
  %v3710 = vsel %vm56, %v3673, 0
  %v3713 = vsel %vm56, %v3674, 0
  %v3716 = vsel %vm56, %v3675, 0
  %v3719 = vsel %vm56, %v3676, 0
  %v3722 = vsel %vm56, %v3677, 0
  %v3725 = vsel %vm56, %v3678, 0
  %v3728 = vsel %vm56, %v3679, 0
  %v3731 = vsel %vm56, %v3680, 0
  %v3734 = vsel %vm56, %v3681, 0
  %v3737 = vsel %vm56, %v3682, 0
  %v3740 = vsel %vm56, %v3683, 0
  %v3743 = vsel %vm56, %v3684, 0
  %v3746 = vsel %vm56, %v3685, 0
  %v3749 = vsel %vm56, %v3686, 0
  %3751 = vmatprep.subr.mxu0 0.0
  %3752 = vmatpush1.msra.mxu0 0.0
  %3753 = vmatprep.subr.mxu0 0.0
  %3754 = vmatpush1.msra.mxu0 0.0
  %3755 = vmatprep.subr.mxu0 0.0
  %3756 = vmatpush1.msra.mxu0 0.0
  %3757 = vmatprep.subr.mxu0 0.0
  %3758 = vmatpush1.msra.mxu0 0.0
  %3759 = vmatprep.subr.mxu0 0.0
  %3760 = vmatpush1.msra.mxu0 0.0
  %3761 = vmatprep.subr.mxu0 0.0
  %3762 = vmatpush1.msra.mxu0 0.0
  %3763 = vmatprep.subr.mxu0 0.0
  %3764 = vmatpush1.msra.mxu0 0.0
  %3765 = vmatprep.subr.mxu0 0.0
  %3766 = vmatpush1.msra.mxu0 0.0
  %3767 = vmatprep.subr.mxu0 0.0
  %3768 = vmatpush1.msra.mxu0 0.0
  %3769 = vmatprep.subr.mxu0 0.0
  %3770 = vmatpush1.msra.mxu0 0.0
  %3771 = vmatprep.subr.mxu0 0.0
  %3772 = vmatpush1.msra.mxu0 0.0
  %3773 = vmatprep.subr.mxu0 0.0
  %3774 = vmatpush1.msra.mxu0 0.0
  %3775 = vmatprep.subr.mxu0 0.0
  %3776 = vmatpush1.msra.mxu0 0.0
  %3777 = vmatprep.subr.mxu0 0.0
  %3778 = vmatpush1.msra.mxu0 0.0
  %3779 = vmatprep.subr.mxu0 0.0
  %3780 = vmatpush1.msra.mxu0 0.0
  %3781 = vmatprep.subr.mxu0 0.0
  %3782 = vmatpush1.msra.mxu0 %v39
  %3783 = vmatprep.subr.mxu0 0.0
  %3784 = vmatpush2.msra.mxu0 0.0
  %3785 = vmatprep.subr.mxu0 0.0
  %3786 = vmatpush2.msra.mxu0 0.0
  %3787 = vmatprep.subr.mxu0 0.0
  %3788 = vmatpush2.msra.mxu0 0.0
  %3789 = vmatprep.subr.mxu0 0.0
  %3790 = vmatpush2.msra.mxu0 0.0
  %3791 = vmatprep.subr.mxu0 0.0
  %3792 = vmatpush2.msra.mxu0 0.0
  %3793 = vmatprep.subr.mxu0 0.0
  %3794 = vmatpush2.msra.mxu0 0.0
  %3795 = vmatprep.subr.mxu0 0.0
  %3796 = vmatpush2.msra.mxu0 0.0
  %3797 = vmatprep.subr.mxu0 0.0
  %3798 = vmatpush2.msra.mxu0 0.0
  %3799 = vmatprep.subr.mxu0 0.0
  %3800 = vmatpush2.msra.mxu0 0.0
  %3801 = vmatprep.subr.mxu0 0.0
  %3802 = vmatpush2.msra.mxu0 0.0
  %3803 = vmatprep.subr.mxu0 0.0
  %3804 = vmatpush2.msra.mxu0 0.0
  %3805 = vmatprep.subr.mxu0 0.0
  %3806 = vmatpush2.msra.mxu0 0.0
  %3807 = vmatprep.subr.mxu0 0.0
  %3808 = vmatpush2.msra.mxu0 0.0
  %3809 = vmatprep.subr.mxu0 0.0
  %3810 = vmatpush2.msra.mxu0 0.0
  %3811 = vmatprep.subr.mxu0 0.0
  %3812 = vmatpush2.msra.mxu0 0.0
  %3813 = vmatprep.subr.mxu0 0.0
  %3814 = vmatpush2.msra.mxu0 0.0
  %3815 = vmatprep.mubr.f32.mxu0 0.0
  %3816 = vmatmul.mubr.f32.gmra.mxu0 %v3704
  %v3817 = vpop.f32.mrf.mxu0
  %v3818 = vadd.f32 %v3687, %v3817
  %v3819 = vpop.f32.mrf.mxu0
  %3820 = vmatprep.mubr.f32.mxu0 0.0
  %3821 = vmatmul.mubr.f32.gmra.mxu0 %v3707
  %v3822 = vpop.f32.mrf.mxu0
  %v3823 = vadd.f32 %v3688, %v3822
  %v3824 = vpop.f32.mrf.mxu0
  %3825 = vmatprep.mubr.f32.mxu0 0.0
  %3826 = vmatmul.mubr.f32.gmra.mxu0 %v3710
  %v3827 = vpop.f32.mrf.mxu0
  %v3828 = vadd.f32 %v3689, %v3827
  %v3829 = vpop.f32.mrf.mxu0
  %3830 = vmatprep.mubr.f32.mxu0 0.0
  %3831 = vmatmul.mubr.f32.gmra.mxu0 %v3713
  %v3832 = vpop.f32.mrf.mxu0
  %v3833 = vadd.f32 %v3690, %v3832
  %v3834 = vpop.f32.mrf.mxu0
  %3835 = vmatprep.mubr.f32.mxu0 0.0
  %3836 = vmatmul.mubr.f32.gmra.mxu0 %v3716
  %v3837 = vpop.f32.mrf.mxu0
  %v3838 = vadd.f32 %v3691, %v3837
  %v3839 = vpop.f32.mrf.mxu0
  %3840 = vmatprep.mubr.f32.mxu0 0.0
  %3841 = vmatmul.mubr.f32.gmra.mxu0 %v3719
  %v3842 = vpop.f32.mrf.mxu0
  %v3843 = vadd.f32 %v3692, %v3842
  %v3844 = vpop.f32.mrf.mxu0
  %3845 = vmatprep.mubr.f32.mxu0 0.0
  %3846 = vmatmul.mubr.f32.gmra.mxu0 %v3722
  %v3847 = vpop.f32.mrf.mxu0
  %v3848 = vadd.f32 %v3693, %v3847
  %v3849 = vpop.f32.mrf.mxu0
  %3850 = vmatprep.mubr.f32.mxu0 0.0
  %3851 = vmatmul.mubr.f32.gmra.mxu0 %v3725
  %v3852 = vpop.f32.mrf.mxu0
  %v3853 = vadd.f32 %v3694, %v3852
  %v3854 = vpop.f32.mrf.mxu0
  %3855 = vmatprep.mubr.f32.mxu0 0.0
  %3856 = vmatmul.mubr.f32.gmra.mxu0 %v3728
  %v3857 = vpop.f32.mrf.mxu0
  %v3858 = vadd.f32 %v3695, %v3857
  %v3859 = vpop.f32.mrf.mxu0
  %3860 = vmatprep.mubr.f32.mxu0 0.0
  %3861 = vmatmul.mubr.f32.gmra.mxu0 %v3731
  %v3862 = vpop.f32.mrf.mxu0
  %v3863 = vadd.f32 %v3696, %v3862
  %v3864 = vpop.f32.mrf.mxu0
  %3865 = vmatprep.mubr.f32.mxu0 0.0
  %3866 = vmatmul.mubr.f32.gmra.mxu0 %v3734
  %v3867 = vpop.f32.mrf.mxu0
  %v3868 = vadd.f32 %v3697, %v3867
  %v3869 = vpop.f32.mrf.mxu0
  %3870 = vmatprep.mubr.f32.mxu0 0.0
  %3871 = vmatmul.mubr.f32.gmra.mxu0 %v3737
  %v3872 = vpop.f32.mrf.mxu0
  %v3873 = vadd.f32 %v3698, %v3872
  %v3874 = vpop.f32.mrf.mxu0
  %3875 = vmatprep.mubr.f32.mxu0 0.0
  %3876 = vmatmul.mubr.f32.gmra.mxu0 %v3740
  %v3877 = vpop.f32.mrf.mxu0
  %v3878 = vadd.f32 %v3699, %v3877
  %v3879 = vpop.f32.mrf.mxu0
  %3880 = vmatprep.mubr.f32.mxu0 0.0
  %3881 = vmatmul.mubr.f32.gmra.mxu0 %v3743
  %v3882 = vpop.f32.mrf.mxu0
  %v3883 = vadd.f32 %v3700, %v3882
  %v3884 = vpop.f32.mrf.mxu0
  %3885 = vmatprep.mubr.f32.mxu0 0.0
  %3886 = vmatmul.mubr.f32.gmra.mxu0 %v3746
  %v3887 = vpop.f32.mrf.mxu0
  %v3888 = vadd.f32 %v3701, %v3887
  %v3889 = vpop.f32.mrf.mxu0
  %3890 = vmatprep.mubr.f32.mxu0 0.0
  %3891 = vmatmul.mubr.f32.gmra.mxu0 %v3749
  %v3892 = vpop.f32.mrf.mxu0
  %v3893 = vadd.f32 %v3702, %v3892
  %v3894 = vpop.f32.mrf.mxu0
  %3895 = vdwg.mxu0
  %v3896 = vmax.f32 %v3818, 0.0
  %v3897 = vmax.f32 %v3823, 0.0
  %v3898 = vmax.f32 %v3828, 0.0
  %v3899 = vmax.f32 %v3833, 0.0
  %v3900 = vmax.f32 %v3838, 0.0
  %v3901 = vmax.f32 %v3843, 0.0
  %v3902 = vmax.f32 %v3848, 0.0
  %v3903 = vmax.f32 %v3853, 0.0
  %v3904 = vmax.f32 %v3858, 0.0
  %v3905 = vmax.f32 %v3863, 0.0
  %v3906 = vmax.f32 %v3868, 0.0
  %v3907 = vmax.f32 %v3873, 0.0
  %v3908 = vmax.f32 %v3878, 0.0
  %v3909 = vmax.f32 %v3883, 0.0
  %v3910 = vmax.f32 %v3888, 0.0
  %v3911 = vmax.f32 %v3893, 0.0
  %v3912 = vld [vmem:[%s3 + $0x30] sm:$0xff]
  %v3914 = vsel %vm56, %v3896, 0
  %v3917 = vsel %vm56, %v3897, 0
  %v3920 = vsel %vm56, %v3898, 0
  %v3923 = vsel %vm56, %v3899, 0
  %v3926 = vsel %vm56, %v3900, 0
  %v3929 = vsel %vm56, %v3901, 0
  %v3932 = vsel %vm56, %v3902, 0
  %v3935 = vsel %vm56, %v3903, 0
  %v3938 = vsel %vm56, %v3904, 0
  %v3941 = vsel %vm56, %v3905, 0
  %v3944 = vsel %vm56, %v3906, 0
  %v3947 = vsel %vm56, %v3907, 0
  %v3950 = vsel %vm56, %v3908, 0
  %v3953 = vsel %vm56, %v3909, 0
  %v3956 = vsel %vm56, %v3910, 0
  %v3959 = vsel %vm56, %v3911, 0
  %3961 = vmatprep.subr.mxu0 0.0
  %3962 = vmatpush1.msra.mxu0 0.0
  %3963 = vmatprep.subr.mxu0 0.0
  %3964 = vmatpush1.msra.mxu0 0.0
  %3965 = vmatprep.subr.mxu0 0.0
  %3966 = vmatpush1.msra.mxu0 0.0
  %3967 = vmatprep.subr.mxu0 0.0
  %3968 = vmatpush1.msra.mxu0 0.0
  %3969 = vmatprep.subr.mxu0 0.0
  %3970 = vmatpush1.msra.mxu0 0.0
  %3971 = vmatprep.subr.mxu0 0.0
  %3972 = vmatpush1.msra.mxu0 0.0
  %3973 = vmatprep.subr.mxu0 0.0
  %3974 = vmatpush1.msra.mxu0 0.0
  %3975 = vmatprep.subr.mxu0 0.0
  %3976 = vmatpush1.msra.mxu0 0.0
  %3977 = vmatprep.subr.mxu0 0.0
  %3978 = vmatpush1.msra.mxu0 0.0
  %3979 = vmatprep.subr.mxu0 0.0
  %3980 = vmatpush1.msra.mxu0 0.0
  %3981 = vmatprep.subr.mxu0 0.0
  %3982 = vmatpush1.msra.mxu0 0.0
  %3983 = vmatprep.subr.mxu0 0.0
  %3984 = vmatpush1.msra.mxu0 0.0
  %3985 = vmatprep.subr.mxu0 0.0
  %3986 = vmatpush1.msra.mxu0 0.0
  %3987 = vmatprep.subr.mxu0 0.0
  %3988 = vmatpush1.msra.mxu0 0.0
  %3989 = vmatprep.subr.mxu0 0.0
  %3990 = vmatpush1.msra.mxu0 0.0
  %3991 = vmatprep.subr.mxu0 0.0
  %3992 = vmatpush1.msra.mxu0 %v3912
  %3993 = vmatprep.subr.mxu0 0.0
  %3994 = vmatpush2.msra.mxu0 0.0
  %3995 = vmatprep.subr.mxu0 0.0
  %3996 = vmatpush2.msra.mxu0 0.0
  %3997 = vmatprep.subr.mxu0 0.0
  %3998 = vmatpush2.msra.mxu0 0.0
  %3999 = vmatprep.subr.mxu0 0.0
  %4000 = vmatpush2.msra.mxu0 0.0
  %4001 = vmatprep.subr.mxu0 0.0
  %4002 = vmatpush2.msra.mxu0 0.0
  %4003 = vmatprep.subr.mxu0 0.0
  %4004 = vmatpush2.msra.mxu0 0.0
  %4005 = vmatprep.subr.mxu0 0.0
  %4006 = vmatpush2.msra.mxu0 0.0
  %4007 = vmatprep.subr.mxu0 0.0
  %4008 = vmatpush2.msra.mxu0 0.0
  %4009 = vmatprep.subr.mxu0 0.0
  %4010 = vmatpush2.msra.mxu0 0.0
  %4011 = vmatprep.subr.mxu0 0.0
  %4012 = vmatpush2.msra.mxu0 0.0
  %4013 = vmatprep.subr.mxu0 0.0
  %4014 = vmatpush2.msra.mxu0 0.0
  %4015 = vmatprep.subr.mxu0 0.0
  %4016 = vmatpush2.msra.mxu0 0.0
  %4017 = vmatprep.subr.mxu0 0.0
  %4018 = vmatpush2.msra.mxu0 0.0
  %4019 = vmatprep.subr.mxu0 0.0
  %4020 = vmatpush2.msra.mxu0 0.0
  %4021 = vmatprep.subr.mxu0 0.0
  %4022 = vmatpush2.msra.mxu0 0.0
  %4023 = vmatprep.subr.mxu0 0.0
  %4024 = vmatpush2.msra.mxu0 0.0
  %4025 = vmatprep.mubr.f32.mxu0 0.0
  %4026 = vmatmul.mubr.f32.gmra.mxu0 %v3914
  %v4027 = vpop.f32.mrf.mxu0
  %v4028 = vadd.f32 0.0, %v4027
  %v4029 = vpop.f32.mrf.mxu0
  %4030 = vmatprep.mubr.f32.mxu0 0.0
  %4031 = vmatmul.mubr.f32.gmra.mxu0 %v3917
  %v4032 = vpop.f32.mrf.mxu0
  %v4033 = vadd.f32 0.0, %v4032
  %v4034 = vpop.f32.mrf.mxu0
  %4035 = vmatprep.mubr.f32.mxu0 0.0
  %4036 = vmatmul.mubr.f32.gmra.mxu0 %v3920
  %v4037 = vpop.f32.mrf.mxu0
  %v4038 = vadd.f32 0.0, %v4037
  %v4039 = vpop.f32.mrf.mxu0
  %4040 = vmatprep.mubr.f32.mxu0 0.0
  %4041 = vmatmul.mubr.f32.gmra.mxu0 %v3923
  %v4042 = vpop.f32.mrf.mxu0
  %v4043 = vadd.f32 0.0, %v4042
  %v4044 = vpop.f32.mrf.mxu0
  %4045 = vmatprep.mubr.f32.mxu0 0.0
  %4046 = vmatmul.mubr.f32.gmra.mxu0 %v3926
  %v4047 = vpop.f32.mrf.mxu0
  %v4048 = vadd.f32 0.0, %v4047
  %v4049 = vpop.f32.mrf.mxu0
  %4050 = vmatprep.mubr.f32.mxu0 0.0
  %4051 = vmatmul.mubr.f32.gmra.mxu0 %v3929
  %v4052 = vpop.f32.mrf.mxu0
  %v4053 = vadd.f32 0.0, %v4052
  %v4054 = vpop.f32.mrf.mxu0
  %4055 = vmatprep.mubr.f32.mxu0 0.0
  %4056 = vmatmul.mubr.f32.gmra.mxu0 %v3932
  %v4057 = vpop.f32.mrf.mxu0
  %v4058 = vadd.f32 0.0, %v4057
  %v4059 = vpop.f32.mrf.mxu0
  %4060 = vmatprep.mubr.f32.mxu0 0.0
  %4061 = vmatmul.mubr.f32.gmra.mxu0 %v3935
  %v4062 = vpop.f32.mrf.mxu0
  %v4063 = vadd.f32 0.0, %v4062
  %v4064 = vpop.f32.mrf.mxu0
  %4065 = vmatprep.mubr.f32.mxu0 0.0
  %4066 = vmatmul.mubr.f32.gmra.mxu0 %v3938
  %v4067 = vpop.f32.mrf.mxu0
  %v4068 = vadd.f32 0.0, %v4067
  %v4069 = vpop.f32.mrf.mxu0
  %4070 = vmatprep.mubr.f32.mxu0 0.0
  %4071 = vmatmul.mubr.f32.gmra.mxu0 %v3941
  %v4072 = vpop.f32.mrf.mxu0
  %v4073 = vadd.f32 0.0, %v4072
  %v4074 = vpop.f32.mrf.mxu0
  %4075 = vmatprep.mubr.f32.mxu0 0.0
  %4076 = vmatmul.mubr.f32.gmra.mxu0 %v3944
  %v4077 = vpop.f32.mrf.mxu0
  %v4078 = vadd.f32 0.0, %v4077
  %v4079 = vpop.f32.mrf.mxu0
  %4080 = vmatprep.mubr.f32.mxu0 0.0
  %4081 = vmatmul.mubr.f32.gmra.mxu0 %v3947
  %v4082 = vpop.f32.mrf.mxu0
  %v4083 = vadd.f32 0.0, %v4082
  %v4084 = vpop.f32.mrf.mxu0
  %4085 = vmatprep.mubr.f32.mxu0 0.0
  %4086 = vmatmul.mubr.f32.gmra.mxu0 %v3950
  %v4087 = vpop.f32.mrf.mxu0
  %v4088 = vadd.f32 0.0, %v4087
  %v4089 = vpop.f32.mrf.mxu0
  %4090 = vmatprep.mubr.f32.mxu0 0.0
  %4091 = vmatmul.mubr.f32.gmra.mxu0 %v3953
  %v4092 = vpop.f32.mrf.mxu0
  %v4093 = vadd.f32 0.0, %v4092
  %v4094 = vpop.f32.mrf.mxu0
  %4095 = vmatprep.mubr.f32.mxu0 0.0
  %4096 = vmatmul.mubr.f32.gmra.mxu0 %v3956
  %v4097 = vpop.f32.mrf.mxu0
  %v4098 = vadd.f32 0.0, %v4097
  %v4099 = vpop.f32.mrf.mxu0
  %4100 = vmatprep.mubr.f32.mxu0 0.0
  %4101 = vmatmul.mubr.f32.gmra.mxu0 %v3959
  %v4102 = vpop.f32.mrf.mxu0
  %v4103 = vadd.f32 0.0, %v4102
  %v4104 = vpop.f32.mrf.mxu0
  %4105 = vdwg.mxu0
  %v4106 = vadd.f32 %v3655, %v4028
  %v4107 = vadd.f32 %v3656, %v4033
  %v4108 = vadd.f32 %v3657, %v4038
  %v4109 = vadd.f32 %v3658, %v4043
  %v4110 = vadd.f32 %v3659, %v4048
  %v4111 = vadd.f32 %v3660, %v4053
  %v4112 = vadd.f32 %v3661, %v4058
  %v4113 = vadd.f32 %v3662, %v4063
  %v4114 = vadd.f32 %v3663, %v4068
  %v4115 = vadd.f32 %v3664, %v4073
  %v4116 = vadd.f32 %v3665, %v4078
  %v4117 = vadd.f32 %v3666, %v4083
  %v4118 = vadd.f32 %v3667, %v4088
  %v4119 = vadd.f32 %v3668, %v4093
  %v4120 = vadd.f32 %v3669, %v4098
  %v4121 = vadd.f32 %v3670, %v4103
  %v4122 = vld [vmem:[%s4 + $0x30] sm:$0xff]
  %4123 = vmatprep.subr.mxu0 0.0
  %4124 = vmatpush1.msra.mxu0 0.0
  %4125 = vmatprep.subr.mxu0 0.0
  %4126 = vmatpush1.msra.mxu0 0.0
  %4127 = vmatprep.subr.mxu0 0.0
  %4128 = vmatpush1.msra.mxu0 0.0
  %4129 = vmatprep.subr.mxu0 0.0
  %4130 = vmatpush1.msra.mxu0 0.0
  %4131 = vmatprep.subr.mxu0 0.0
  %4132 = vmatpush1.msra.mxu0 0.0
  %4133 = vmatprep.subr.mxu0 0.0
  %4134 = vmatpush1.msra.mxu0 0.0
  %4135 = vmatprep.subr.mxu0 0.0
  %4136 = vmatpush1.msra.mxu0 0.0
  %4137 = vmatprep.subr.mxu0 0.0
  %4138 = vmatpush1.msra.mxu0 0.0
  %4139 = vmatprep.subr.mxu0 0.0
  %4140 = vmatpush1.msra.mxu0 0.0
  %4141 = vmatprep.subr.mxu0 0.0
  %4142 = vmatpush1.msra.mxu0 0.0
  %4143 = vmatprep.subr.mxu0 0.0
  %4144 = vmatpush1.msra.mxu0 0.0
  %4145 = vmatprep.subr.mxu0 0.0
  %4146 = vmatpush1.msra.mxu0 0.0
  %4147 = vmatprep.subr.mxu0 0.0
  %4148 = vmatpush1.msra.mxu0 0.0
  %4149 = vmatprep.subr.mxu0 0.0
  %4150 = vmatpush1.msra.mxu0 0.0
  %4151 = vmatprep.subr.mxu0 0.0
  %4152 = vmatpush1.msra.mxu0 0.0
  %4153 = vmatprep.subr.mxu0 0.0
  %4154 = vmatpush1.msra.mxu0 %v4122
  %4155 = vmatprep.subr.mxu0 0.0
  %4156 = vmatpush2.msra.mxu0 0.0
  %4157 = vmatprep.subr.mxu0 0.0
  %4158 = vmatpush2.msra.mxu0 0.0
  %4159 = vmatprep.subr.mxu0 0.0
  %4160 = vmatpush2.msra.mxu0 0.0
  %4161 = vmatprep.subr.mxu0 0.0
  %4162 = vmatpush2.msra.mxu0 0.0
  %4163 = vmatprep.subr.mxu0 0.0
  %4164 = vmatpush2.msra.mxu0 0.0
  %4165 = vmatprep.subr.mxu0 0.0
  %4166 = vmatpush2.msra.mxu0 0.0
  %4167 = vmatprep.subr.mxu0 0.0
  %4168 = vmatpush2.msra.mxu0 0.0
  %4169 = vmatprep.subr.mxu0 0.0
  %4170 = vmatpush2.msra.mxu0 0.0
  %4171 = vmatprep.subr.mxu0 0.0
  %4172 = vmatpush2.msra.mxu0 0.0
  %4173 = vmatprep.subr.mxu0 0.0
  %4174 = vmatpush2.msra.mxu0 0.0
  %4175 = vmatprep.subr.mxu0 0.0
  %4176 = vmatpush2.msra.mxu0 0.0
  %4177 = vmatprep.subr.mxu0 0.0
  %4178 = vmatpush2.msra.mxu0 0.0
  %4179 = vmatprep.subr.mxu0 0.0
  %4180 = vmatpush2.msra.mxu0 0.0
  %4181 = vmatprep.subr.mxu0 0.0
  %4182 = vmatpush2.msra.mxu0 0.0
  %4183 = vmatprep.subr.mxu0 0.0
  %4184 = vmatpush2.msra.mxu0 0.0
  %4185 = vmatprep.subr.mxu0 0.0
  %4186 = vmatpush2.msra.mxu0 0.0
  %4187 = vmatprep.mubr.f32.mxu0 0.0
  %4188 = vmatmul.mubr.f32.gmra.mxu0 %v3704
  %v4189 = vpop.f32.mrf.mxu0
  %v4190 = vadd.f32 0.0, %v4189
  %v4191 = vpop.f32.mrf.mxu0
  %4192 = vmatprep.mubr.f32.mxu0 0.0
  %4193 = vmatmul.mubr.f32.gmra.mxu0 %v3707
  %v4194 = vpop.f32.mrf.mxu0
  %v4195 = vadd.f32 0.0, %v4194
  %v4196 = vpop.f32.mrf.mxu0
  %4197 = vmatprep.mubr.f32.mxu0 0.0
  %4198 = vmatmul.mubr.f32.gmra.mxu0 %v3710
  %v4199 = vpop.f32.mrf.mxu0
  %v4200 = vadd.f32 0.0, %v4199
  %v4201 = vpop.f32.mrf.mxu0
  %4202 = vmatprep.mubr.f32.mxu0 0.0
  %4203 = vmatmul.mubr.f32.gmra.mxu0 %v3713
  %v4204 = vpop.f32.mrf.mxu0
  %v4205 = vadd.f32 0.0, %v4204
  %v4206 = vpop.f32.mrf.mxu0
  %4207 = vmatprep.mubr.f32.mxu0 0.0
  %4208 = vmatmul.mubr.f32.gmra.mxu0 %v3716
  %v4209 = vpop.f32.mrf.mxu0
  %v4210 = vadd.f32 0.0, %v4209
  %v4211 = vpop.f32.mrf.mxu0
  %4212 = vmatprep.mubr.f32.mxu0 0.0
  %4213 = vmatmul.mubr.f32.gmra.mxu0 %v3719
  %v4214 = vpop.f32.mrf.mxu0
  %v4215 = vadd.f32 0.0, %v4214
  %v4216 = vpop.f32.mrf.mxu0
  %4217 = vmatprep.mubr.f32.mxu0 0.0
  %4218 = vmatmul.mubr.f32.gmra.mxu0 %v3722
  %v4219 = vpop.f32.mrf.mxu0
  %v4220 = vadd.f32 0.0, %v4219
  %v4221 = vpop.f32.mrf.mxu0
  %4222 = vmatprep.mubr.f32.mxu0 0.0
  %4223 = vmatmul.mubr.f32.gmra.mxu0 %v3725
  %v4224 = vpop.f32.mrf.mxu0
  %v4225 = vadd.f32 0.0, %v4224
  %v4226 = vpop.f32.mrf.mxu0
  %4227 = vmatprep.mubr.f32.mxu0 0.0
  %4228 = vmatmul.mubr.f32.gmra.mxu0 %v3728
  %v4229 = vpop.f32.mrf.mxu0
  %v4230 = vadd.f32 0.0, %v4229
  %v4231 = vpop.f32.mrf.mxu0
  %4232 = vmatprep.mubr.f32.mxu0 0.0
  %4233 = vmatmul.mubr.f32.gmra.mxu0 %v3731
  %v4234 = vpop.f32.mrf.mxu0
  %v4235 = vadd.f32 0.0, %v4234
  %v4236 = vpop.f32.mrf.mxu0
  %4237 = vmatprep.mubr.f32.mxu0 0.0
  %4238 = vmatmul.mubr.f32.gmra.mxu0 %v3734
  %v4239 = vpop.f32.mrf.mxu0
  %v4240 = vadd.f32 0.0, %v4239
  %v4241 = vpop.f32.mrf.mxu0
  %4242 = vmatprep.mubr.f32.mxu0 0.0
  %4243 = vmatmul.mubr.f32.gmra.mxu0 %v3737
  %v4244 = vpop.f32.mrf.mxu0
  %v4245 = vadd.f32 0.0, %v4244
  %v4246 = vpop.f32.mrf.mxu0
  %4247 = vmatprep.mubr.f32.mxu0 0.0
  %4248 = vmatmul.mubr.f32.gmra.mxu0 %v3740
  %v4249 = vpop.f32.mrf.mxu0
  %v4250 = vadd.f32 0.0, %v4249
  %v4251 = vpop.f32.mrf.mxu0
  %4252 = vmatprep.mubr.f32.mxu0 0.0
  %4253 = vmatmul.mubr.f32.gmra.mxu0 %v3743
  %v4254 = vpop.f32.mrf.mxu0
  %v4255 = vadd.f32 0.0, %v4254
  %v4256 = vpop.f32.mrf.mxu0
  %4257 = vmatprep.mubr.f32.mxu0 0.0
  %4258 = vmatmul.mubr.f32.gmra.mxu0 %v3746
  %v4259 = vpop.f32.mrf.mxu0
  %v4260 = vadd.f32 0.0, %v4259
  %v4261 = vpop.f32.mrf.mxu0
  %4262 = vmatprep.mubr.f32.mxu0 0.0
  %4263 = vmatmul.mubr.f32.gmra.mxu0 %v3749
  %v4264 = vpop.f32.mrf.mxu0
  %v4265 = vadd.f32 0.0, %v4264
  %v4266 = vpop.f32.mrf.mxu0
  %4267 = vdwg.mxu0
  %v4268 = vadd.f32 %v4106, %v4190
  %v4269 = vadd.f32 %v4107, %v4195
  %v4270 = vadd.f32 %v4108, %v4200
  %v4271 = vadd.f32 %v4109, %v4205
  %v4272 = vadd.f32 %v4110, %v4210
  %v4273 = vadd.f32 %v4111, %v4215
  %v4274 = vadd.f32 %v4112, %v4220
  %v4275 = vadd.f32 %v4113, %v4225
  %v4276 = vadd.f32 %v4114, %v4230
  %v4277 = vadd.f32 %v4115, %v4235
  %v4278 = vadd.f32 %v4116, %v4240
  %v4279 = vadd.f32 %v4117, %v4245
  %v4280 = vadd.f32 %v4118, %v4250
  %v4281 = vadd.f32 %v4119, %v4255
  %v4282 = vadd.f32 %v4120, %v4260
  %v4283 = vadd.f32 %v4121, %v4265
  %v4284 = vld [vmem:[%s0 + $0x380] sm:$0xff]
  %v4285 = vld [vmem:[%s0 + $0x388] sm:$0xff]
  %v4286 = vld [vmem:[%s0 + $0x390] sm:$0xff]
  %v4287 = vld [vmem:[%s0 + $0x398] sm:$0xff]
  %v4288 = vld [vmem:[%s0 + $0x3a0] sm:$0xff]
  %v4289 = vld [vmem:[%s0 + $0x3a8] sm:$0xff]
  %v4290 = vld [vmem:[%s0 + $0x3b0] sm:$0xff]
  %v4291 = vld [vmem:[%s0 + $0x3b8] sm:$0xff]
  %v4292 = vld [vmem:[%s0 + $0x3c0] sm:$0xff]
  %v4293 = vld [vmem:[%s0 + $0x3c8] sm:$0xff]
  %v4294 = vld [vmem:[%s0 + $0x3d0] sm:$0xff]
  %v4295 = vld [vmem:[%s0 + $0x3d8] sm:$0xff]
  %v4296 = vld [vmem:[%s0 + $0x3e0] sm:$0xff]
  %v4297 = vld [vmem:[%s0 + $0x3e8] sm:$0xff]
  %v4298 = vld [vmem:[%s0 + $0x3f0] sm:$0xff]
  %v4299 = vld [vmem:[%s0 + $0x3f8] sm:$0xff]
  %v4300 = vld [vmem:[%s1 + $0x380] sm:$0xff]
  %v4301 = vld [vmem:[%s1 + $0x388] sm:$0xff]
  %v4302 = vld [vmem:[%s1 + $0x390] sm:$0xff]
  %v4303 = vld [vmem:[%s1 + $0x398] sm:$0xff]
  %v4304 = vld [vmem:[%s1 + $0x3a0] sm:$0xff]
  %v4305 = vld [vmem:[%s1 + $0x3a8] sm:$0xff]
  %v4306 = vld [vmem:[%s1 + $0x3b0] sm:$0xff]
  %v4307 = vld [vmem:[%s1 + $0x3b8] sm:$0xff]
  %v4308 = vld [vmem:[%s1 + $0x3c0] sm:$0xff]
  %v4309 = vld [vmem:[%s1 + $0x3c8] sm:$0xff]
  %v4310 = vld [vmem:[%s1 + $0x3d0] sm:$0xff]
  %v4311 = vld [vmem:[%s1 + $0x3d8] sm:$0xff]
  %v4312 = vld [vmem:[%s1 + $0x3e0] sm:$0xff]
  %v4313 = vld [vmem:[%s1 + $0x3e8] sm:$0xff]
  %v4314 = vld [vmem:[%s1 + $0x3f0] sm:$0xff]
  %v4315 = vld [vmem:[%s1 + $0x3f8] sm:$0xff]
  %v4317 = vsel %vm56, %v4284, 0
  %v4320 = vsel %vm56, %v4285, 0
  %v4323 = vsel %vm56, %v4286, 0
  %v4326 = vsel %vm56, %v4287, 0
  %v4329 = vsel %vm56, %v4288, 0
  %v4332 = vsel %vm56, %v4289, 0
  %v4335 = vsel %vm56, %v4290, 0
  %v4338 = vsel %vm56, %v4291, 0
  %v4341 = vsel %vm56, %v4292, 0
  %v4344 = vsel %vm56, %v4293, 0
  %v4347 = vsel %vm56, %v4294, 0
  %v4350 = vsel %vm56, %v4295, 0
  %v4353 = vsel %vm56, %v4296, 0
  %v4356 = vsel %vm56, %v4297, 0
  %v4359 = vsel %vm56, %v4298, 0
  %v4362 = vsel %vm56, %v4299, 0
  %4364 = vmatprep.subr.mxu0 0.0
  %4365 = vmatpush1.msra.mxu0 0.0
  %4366 = vmatprep.subr.mxu0 0.0
  %4367 = vmatpush1.msra.mxu0 0.0
  %4368 = vmatprep.subr.mxu0 0.0
  %4369 = vmatpush1.msra.mxu0 0.0
  %4370 = vmatprep.subr.mxu0 0.0
  %4371 = vmatpush1.msra.mxu0 0.0
  %4372 = vmatprep.subr.mxu0 0.0
  %4373 = vmatpush1.msra.mxu0 0.0
  %4374 = vmatprep.subr.mxu0 0.0
  %4375 = vmatpush1.msra.mxu0 0.0
  %4376 = vmatprep.subr.mxu0 0.0
  %4377 = vmatpush1.msra.mxu0 0.0
  %4378 = vmatprep.subr.mxu0 0.0
  %4379 = vmatpush1.msra.mxu0 0.0
  %4380 = vmatprep.subr.mxu0 0.0
  %4381 = vmatpush1.msra.mxu0 0.0
  %4382 = vmatprep.subr.mxu0 0.0
  %4383 = vmatpush1.msra.mxu0 0.0
  %4384 = vmatprep.subr.mxu0 0.0
  %4385 = vmatpush1.msra.mxu0 0.0
  %4386 = vmatprep.subr.mxu0 0.0
  %4387 = vmatpush1.msra.mxu0 0.0
  %4388 = vmatprep.subr.mxu0 0.0
  %4389 = vmatpush1.msra.mxu0 0.0
  %4390 = vmatprep.subr.mxu0 0.0
  %4391 = vmatpush1.msra.mxu0 0.0
  %4392 = vmatprep.subr.mxu0 0.0
  %4393 = vmatpush1.msra.mxu0 0.0
  %4394 = vmatprep.subr.mxu0 0.0
  %4395 = vmatpush1.msra.mxu0 %v39
  %4396 = vmatprep.subr.mxu0 0.0
  %4397 = vmatpush2.msra.mxu0 0.0
  %4398 = vmatprep.subr.mxu0 0.0
  %4399 = vmatpush2.msra.mxu0 0.0
  %4400 = vmatprep.subr.mxu0 0.0
  %4401 = vmatpush2.msra.mxu0 0.0
  %4402 = vmatprep.subr.mxu0 0.0
  %4403 = vmatpush2.msra.mxu0 0.0
  %4404 = vmatprep.subr.mxu0 0.0
  %4405 = vmatpush2.msra.mxu0 0.0
  %4406 = vmatprep.subr.mxu0 0.0
  %4407 = vmatpush2.msra.mxu0 0.0
  %4408 = vmatprep.subr.mxu0 0.0
  %4409 = vmatpush2.msra.mxu0 0.0
  %4410 = vmatprep.subr.mxu0 0.0
  %4411 = vmatpush2.msra.mxu0 0.0
  %4412 = vmatprep.subr.mxu0 0.0
  %4413 = vmatpush2.msra.mxu0 0.0
  %4414 = vmatprep.subr.mxu0 0.0
  %4415 = vmatpush2.msra.mxu0 0.0
  %4416 = vmatprep.subr.mxu0 0.0
  %4417 = vmatpush2.msra.mxu0 0.0
  %4418 = vmatprep.subr.mxu0 0.0
  %4419 = vmatpush2.msra.mxu0 0.0
  %4420 = vmatprep.subr.mxu0 0.0
  %4421 = vmatpush2.msra.mxu0 0.0
  %4422 = vmatprep.subr.mxu0 0.0
  %4423 = vmatpush2.msra.mxu0 0.0
  %4424 = vmatprep.subr.mxu0 0.0
  %4425 = vmatpush2.msra.mxu0 0.0
  %4426 = vmatprep.subr.mxu0 0.0
  %4427 = vmatpush2.msra.mxu0 0.0
  %4428 = vmatprep.mubr.f32.mxu0 0.0
  %4429 = vmatmul.mubr.f32.gmra.mxu0 %v4317
  %v4430 = vpop.f32.mrf.mxu0
  %v4431 = vadd.f32 %v4300, %v4430
  %v4432 = vpop.f32.mrf.mxu0
  %4433 = vmatprep.mubr.f32.mxu0 0.0
  %4434 = vmatmul.mubr.f32.gmra.mxu0 %v4320
  %v4435 = vpop.f32.mrf.mxu0
  %v4436 = vadd.f32 %v4301, %v4435
  %v4437 = vpop.f32.mrf.mxu0
  %4438 = vmatprep.mubr.f32.mxu0 0.0
  %4439 = vmatmul.mubr.f32.gmra.mxu0 %v4323
  %v4440 = vpop.f32.mrf.mxu0
  %v4441 = vadd.f32 %v4302, %v4440
  %v4442 = vpop.f32.mrf.mxu0
  %4443 = vmatprep.mubr.f32.mxu0 0.0
  %4444 = vmatmul.mubr.f32.gmra.mxu0 %v4326
  %v4445 = vpop.f32.mrf.mxu0
  %v4446 = vadd.f32 %v4303, %v4445
  %v4447 = vpop.f32.mrf.mxu0
  %4448 = vmatprep.mubr.f32.mxu0 0.0
  %4449 = vmatmul.mubr.f32.gmra.mxu0 %v4329
  %v4450 = vpop.f32.mrf.mxu0
  %v4451 = vadd.f32 %v4304, %v4450
  %v4452 = vpop.f32.mrf.mxu0
  %4453 = vmatprep.mubr.f32.mxu0 0.0
  %4454 = vmatmul.mubr.f32.gmra.mxu0 %v4332
  %v4455 = vpop.f32.mrf.mxu0
  %v4456 = vadd.f32 %v4305, %v4455
  %v4457 = vpop.f32.mrf.mxu0
  %4458 = vmatprep.mubr.f32.mxu0 0.0
  %4459 = vmatmul.mubr.f32.gmra.mxu0 %v4335
  %v4460 = vpop.f32.mrf.mxu0
  %v4461 = vadd.f32 %v4306, %v4460
  %v4462 = vpop.f32.mrf.mxu0
  %4463 = vmatprep.mubr.f32.mxu0 0.0
  %4464 = vmatmul.mubr.f32.gmra.mxu0 %v4338
  %v4465 = vpop.f32.mrf.mxu0
  %v4466 = vadd.f32 %v4307, %v4465
  %v4467 = vpop.f32.mrf.mxu0
  %4468 = vmatprep.mubr.f32.mxu0 0.0
  %4469 = vmatmul.mubr.f32.gmra.mxu0 %v4341
  %v4470 = vpop.f32.mrf.mxu0
  %v4471 = vadd.f32 %v4308, %v4470
  %v4472 = vpop.f32.mrf.mxu0
  %4473 = vmatprep.mubr.f32.mxu0 0.0
  %4474 = vmatmul.mubr.f32.gmra.mxu0 %v4344
  %v4475 = vpop.f32.mrf.mxu0
  %v4476 = vadd.f32 %v4309, %v4475
  %v4477 = vpop.f32.mrf.mxu0
  %4478 = vmatprep.mubr.f32.mxu0 0.0
  %4479 = vmatmul.mubr.f32.gmra.mxu0 %v4347
  %v4480 = vpop.f32.mrf.mxu0
  %v4481 = vadd.f32 %v4310, %v4480
  %v4482 = vpop.f32.mrf.mxu0
  %4483 = vmatprep.mubr.f32.mxu0 0.0
  %4484 = vmatmul.mubr.f32.gmra.mxu0 %v4350
  %v4485 = vpop.f32.mrf.mxu0
  %v4486 = vadd.f32 %v4311, %v4485
  %v4487 = vpop.f32.mrf.mxu0
  %4488 = vmatprep.mubr.f32.mxu0 0.0
  %4489 = vmatmul.mubr.f32.gmra.mxu0 %v4353
  %v4490 = vpop.f32.mrf.mxu0
  %v4491 = vadd.f32 %v4312, %v4490
  %v4492 = vpop.f32.mrf.mxu0
  %4493 = vmatprep.mubr.f32.mxu0 0.0
  %4494 = vmatmul.mubr.f32.gmra.mxu0 %v4356
  %v4495 = vpop.f32.mrf.mxu0
  %v4496 = vadd.f32 %v4313, %v4495
  %v4497 = vpop.f32.mrf.mxu0
  %4498 = vmatprep.mubr.f32.mxu0 0.0
  %4499 = vmatmul.mubr.f32.gmra.mxu0 %v4359
  %v4500 = vpop.f32.mrf.mxu0
  %v4501 = vadd.f32 %v4314, %v4500
  %v4502 = vpop.f32.mrf.mxu0
  %4503 = vmatprep.mubr.f32.mxu0 0.0
  %4504 = vmatmul.mubr.f32.gmra.mxu0 %v4362
  %v4505 = vpop.f32.mrf.mxu0
  %v4506 = vadd.f32 %v4315, %v4505
  %v4507 = vpop.f32.mrf.mxu0
  %4508 = vdwg.mxu0
  %v4509 = vmax.f32 %v4431, 0.0
  %v4510 = vmax.f32 %v4436, 0.0
  %v4511 = vmax.f32 %v4441, 0.0
  %v4512 = vmax.f32 %v4446, 0.0
  %v4513 = vmax.f32 %v4451, 0.0
  %v4514 = vmax.f32 %v4456, 0.0
  %v4515 = vmax.f32 %v4461, 0.0
  %v4516 = vmax.f32 %v4466, 0.0
  %v4517 = vmax.f32 %v4471, 0.0
  %v4518 = vmax.f32 %v4476, 0.0
  %v4519 = vmax.f32 %v4481, 0.0
  %v4520 = vmax.f32 %v4486, 0.0
  %v4521 = vmax.f32 %v4491, 0.0
  %v4522 = vmax.f32 %v4496, 0.0
  %v4523 = vmax.f32 %v4501, 0.0
  %v4524 = vmax.f32 %v4506, 0.0
  %v4525 = vld [vmem:[%s3 + $0x38] sm:$0xff]
  %v4527 = vsel %vm56, %v4509, 0
  %v4530 = vsel %vm56, %v4510, 0
  %v4533 = vsel %vm56, %v4511, 0
  %v4536 = vsel %vm56, %v4512, 0
  %v4539 = vsel %vm56, %v4513, 0
  %v4542 = vsel %vm56, %v4514, 0
  %v4545 = vsel %vm56, %v4515, 0
  %v4548 = vsel %vm56, %v4516, 0
  %v4551 = vsel %vm56, %v4517, 0
  %v4554 = vsel %vm56, %v4518, 0
  %v4557 = vsel %vm56, %v4519, 0
  %v4560 = vsel %vm56, %v4520, 0
  %v4563 = vsel %vm56, %v4521, 0
  %v4566 = vsel %vm56, %v4522, 0
  %v4569 = vsel %vm56, %v4523, 0
  %v4572 = vsel %vm56, %v4524, 0
  %4574 = vmatprep.subr.mxu0 0.0
  %4575 = vmatpush1.msra.mxu0 0.0
  %4576 = vmatprep.subr.mxu0 0.0
  %4577 = vmatpush1.msra.mxu0 0.0
  %4578 = vmatprep.subr.mxu0 0.0
  %4579 = vmatpush1.msra.mxu0 0.0
  %4580 = vmatprep.subr.mxu0 0.0
  %4581 = vmatpush1.msra.mxu0 0.0
  %4582 = vmatprep.subr.mxu0 0.0
  %4583 = vmatpush1.msra.mxu0 0.0
  %4584 = vmatprep.subr.mxu0 0.0
  %4585 = vmatpush1.msra.mxu0 0.0
  %4586 = vmatprep.subr.mxu0 0.0
  %4587 = vmatpush1.msra.mxu0 0.0
  %4588 = vmatprep.subr.mxu0 0.0
  %4589 = vmatpush1.msra.mxu0 0.0
  %4590 = vmatprep.subr.mxu0 0.0
  %4591 = vmatpush1.msra.mxu0 0.0
  %4592 = vmatprep.subr.mxu0 0.0
  %4593 = vmatpush1.msra.mxu0 0.0
  %4594 = vmatprep.subr.mxu0 0.0
  %4595 = vmatpush1.msra.mxu0 0.0
  %4596 = vmatprep.subr.mxu0 0.0
  %4597 = vmatpush1.msra.mxu0 0.0
  %4598 = vmatprep.subr.mxu0 0.0
  %4599 = vmatpush1.msra.mxu0 0.0
  %4600 = vmatprep.subr.mxu0 0.0
  %4601 = vmatpush1.msra.mxu0 0.0
  %4602 = vmatprep.subr.mxu0 0.0
  %4603 = vmatpush1.msra.mxu0 0.0
  %4604 = vmatprep.subr.mxu0 0.0
  %4605 = vmatpush1.msra.mxu0 %v4525
  %4606 = vmatprep.subr.mxu0 0.0
  %4607 = vmatpush2.msra.mxu0 0.0
  %4608 = vmatprep.subr.mxu0 0.0
  %4609 = vmatpush2.msra.mxu0 0.0
  %4610 = vmatprep.subr.mxu0 0.0
  %4611 = vmatpush2.msra.mxu0 0.0
  %4612 = vmatprep.subr.mxu0 0.0
  %4613 = vmatpush2.msra.mxu0 0.0
  %4614 = vmatprep.subr.mxu0 0.0
  %4615 = vmatpush2.msra.mxu0 0.0
  %4616 = vmatprep.subr.mxu0 0.0
  %4617 = vmatpush2.msra.mxu0 0.0
  %4618 = vmatprep.subr.mxu0 0.0
  %4619 = vmatpush2.msra.mxu0 0.0
  %4620 = vmatprep.subr.mxu0 0.0
  %4621 = vmatpush2.msra.mxu0 0.0
  %4622 = vmatprep.subr.mxu0 0.0
  %4623 = vmatpush2.msra.mxu0 0.0
  %4624 = vmatprep.subr.mxu0 0.0
  %4625 = vmatpush2.msra.mxu0 0.0
  %4626 = vmatprep.subr.mxu0 0.0
  %4627 = vmatpush2.msra.mxu0 0.0
  %4628 = vmatprep.subr.mxu0 0.0
  %4629 = vmatpush2.msra.mxu0 0.0
  %4630 = vmatprep.subr.mxu0 0.0
  %4631 = vmatpush2.msra.mxu0 0.0
  %4632 = vmatprep.subr.mxu0 0.0
  %4633 = vmatpush2.msra.mxu0 0.0
  %4634 = vmatprep.subr.mxu0 0.0
  %4635 = vmatpush2.msra.mxu0 0.0
  %4636 = vmatprep.subr.mxu0 0.0
  %4637 = vmatpush2.msra.mxu0 0.0
  %4638 = vmatprep.mubr.f32.mxu0 0.0
  %4639 = vmatmul.mubr.f32.gmra.mxu0 %v4527
  %v4640 = vpop.f32.mrf.mxu0
  %v4641 = vadd.f32 0.0, %v4640
  %v4642 = vpop.f32.mrf.mxu0
  %4643 = vmatprep.mubr.f32.mxu0 0.0
  %4644 = vmatmul.mubr.f32.gmra.mxu0 %v4530
  %v4645 = vpop.f32.mrf.mxu0
  %v4646 = vadd.f32 0.0, %v4645
  %v4647 = vpop.f32.mrf.mxu0
  %4648 = vmatprep.mubr.f32.mxu0 0.0
  %4649 = vmatmul.mubr.f32.gmra.mxu0 %v4533
  %v4650 = vpop.f32.mrf.mxu0
  %v4651 = vadd.f32 0.0, %v4650
  %v4652 = vpop.f32.mrf.mxu0
  %4653 = vmatprep.mubr.f32.mxu0 0.0
  %4654 = vmatmul.mubr.f32.gmra.mxu0 %v4536
  %v4655 = vpop.f32.mrf.mxu0
  %v4656 = vadd.f32 0.0, %v4655
  %v4657 = vpop.f32.mrf.mxu0
  %4658 = vmatprep.mubr.f32.mxu0 0.0
  %4659 = vmatmul.mubr.f32.gmra.mxu0 %v4539
  %v4660 = vpop.f32.mrf.mxu0
  %v4661 = vadd.f32 0.0, %v4660
  %v4662 = vpop.f32.mrf.mxu0
  %4663 = vmatprep.mubr.f32.mxu0 0.0
  %4664 = vmatmul.mubr.f32.gmra.mxu0 %v4542
  %v4665 = vpop.f32.mrf.mxu0
  %v4666 = vadd.f32 0.0, %v4665
  %v4667 = vpop.f32.mrf.mxu0
  %4668 = vmatprep.mubr.f32.mxu0 0.0
  %4669 = vmatmul.mubr.f32.gmra.mxu0 %v4545
  %v4670 = vpop.f32.mrf.mxu0
  %v4671 = vadd.f32 0.0, %v4670
  %v4672 = vpop.f32.mrf.mxu0
  %4673 = vmatprep.mubr.f32.mxu0 0.0
  %4674 = vmatmul.mubr.f32.gmra.mxu0 %v4548
  %v4675 = vpop.f32.mrf.mxu0
  %v4676 = vadd.f32 0.0, %v4675
  %v4677 = vpop.f32.mrf.mxu0
  %4678 = vmatprep.mubr.f32.mxu0 0.0
  %4679 = vmatmul.mubr.f32.gmra.mxu0 %v4551
  %v4680 = vpop.f32.mrf.mxu0
  %v4681 = vadd.f32 0.0, %v4680
  %v4682 = vpop.f32.mrf.mxu0
  %4683 = vmatprep.mubr.f32.mxu0 0.0
  %4684 = vmatmul.mubr.f32.gmra.mxu0 %v4554
  %v4685 = vpop.f32.mrf.mxu0
  %v4686 = vadd.f32 0.0, %v4685
  %v4687 = vpop.f32.mrf.mxu0
  %4688 = vmatprep.mubr.f32.mxu0 0.0
  %4689 = vmatmul.mubr.f32.gmra.mxu0 %v4557
  %v4690 = vpop.f32.mrf.mxu0
  %v4691 = vadd.f32 0.0, %v4690
  %v4692 = vpop.f32.mrf.mxu0
  %4693 = vmatprep.mubr.f32.mxu0 0.0
  %4694 = vmatmul.mubr.f32.gmra.mxu0 %v4560
  %v4695 = vpop.f32.mrf.mxu0
  %v4696 = vadd.f32 0.0, %v4695
  %v4697 = vpop.f32.mrf.mxu0
  %4698 = vmatprep.mubr.f32.mxu0 0.0
  %4699 = vmatmul.mubr.f32.gmra.mxu0 %v4563
  %v4700 = vpop.f32.mrf.mxu0
  %v4701 = vadd.f32 0.0, %v4700
  %v4702 = vpop.f32.mrf.mxu0
  %4703 = vmatprep.mubr.f32.mxu0 0.0
  %4704 = vmatmul.mubr.f32.gmra.mxu0 %v4566
  %v4705 = vpop.f32.mrf.mxu0
  %v4706 = vadd.f32 0.0, %v4705
  %v4707 = vpop.f32.mrf.mxu0
  %4708 = vmatprep.mubr.f32.mxu0 0.0
  %4709 = vmatmul.mubr.f32.gmra.mxu0 %v4569
  %v4710 = vpop.f32.mrf.mxu0
  %v4711 = vadd.f32 0.0, %v4710
  %v4712 = vpop.f32.mrf.mxu0
  %4713 = vmatprep.mubr.f32.mxu0 0.0
  %4714 = vmatmul.mubr.f32.gmra.mxu0 %v4572
  %v4715 = vpop.f32.mrf.mxu0
  %v4716 = vadd.f32 0.0, %v4715
  %v4717 = vpop.f32.mrf.mxu0
  %4718 = vdwg.mxu0
  %v4719 = vadd.f32 %v4268, %v4641
  %v4720 = vadd.f32 %v4269, %v4646
  %v4721 = vadd.f32 %v4270, %v4651
  %v4722 = vadd.f32 %v4271, %v4656
  %v4723 = vadd.f32 %v4272, %v4661
  %v4724 = vadd.f32 %v4273, %v4666
  %v4725 = vadd.f32 %v4274, %v4671
  %v4726 = vadd.f32 %v4275, %v4676
  %v4727 = vadd.f32 %v4276, %v4681
  %v4728 = vadd.f32 %v4277, %v4686
  %v4729 = vadd.f32 %v4278, %v4691
  %v4730 = vadd.f32 %v4279, %v4696
  %v4731 = vadd.f32 %v4280, %v4701
  %v4732 = vadd.f32 %v4281, %v4706
  %v4733 = vadd.f32 %v4282, %v4711
  %v4734 = vadd.f32 %v4283, %v4716
  %v4735 = vld [vmem:[%s4 + $0x38] sm:$0xff]
  %4736 = vmatprep.subr.mxu0 0.0
  %4737 = vmatpush1.msra.mxu0 0.0
  %4738 = vmatprep.subr.mxu0 0.0
  %4739 = vmatpush1.msra.mxu0 0.0
  %4740 = vmatprep.subr.mxu0 0.0
  %4741 = vmatpush1.msra.mxu0 0.0
  %4742 = vmatprep.subr.mxu0 0.0
  %4743 = vmatpush1.msra.mxu0 0.0
  %4744 = vmatprep.subr.mxu0 0.0
  %4745 = vmatpush1.msra.mxu0 0.0
  %4746 = vmatprep.subr.mxu0 0.0
  %4747 = vmatpush1.msra.mxu0 0.0
  %4748 = vmatprep.subr.mxu0 0.0
  %4749 = vmatpush1.msra.mxu0 0.0
  %4750 = vmatprep.subr.mxu0 0.0
  %4751 = vmatpush1.msra.mxu0 0.0
  %4752 = vmatprep.subr.mxu0 0.0
  %4753 = vmatpush1.msra.mxu0 0.0
  %4754 = vmatprep.subr.mxu0 0.0
  %4755 = vmatpush1.msra.mxu0 0.0
  %4756 = vmatprep.subr.mxu0 0.0
  %4757 = vmatpush1.msra.mxu0 0.0
  %4758 = vmatprep.subr.mxu0 0.0
  %4759 = vmatpush1.msra.mxu0 0.0
  %4760 = vmatprep.subr.mxu0 0.0
  %4761 = vmatpush1.msra.mxu0 0.0
  %4762 = vmatprep.subr.mxu0 0.0
  %4763 = vmatpush1.msra.mxu0 0.0
  %4764 = vmatprep.subr.mxu0 0.0
  %4765 = vmatpush1.msra.mxu0 0.0
  %4766 = vmatprep.subr.mxu0 0.0
  %4767 = vmatpush1.msra.mxu0 %v4735
  %4768 = vmatprep.subr.mxu0 0.0
  %4769 = vmatpush2.msra.mxu0 0.0
  %4770 = vmatprep.subr.mxu0 0.0
  %4771 = vmatpush2.msra.mxu0 0.0
  %4772 = vmatprep.subr.mxu0 0.0
  %4773 = vmatpush2.msra.mxu0 0.0
  %4774 = vmatprep.subr.mxu0 0.0
  %4775 = vmatpush2.msra.mxu0 0.0
  %4776 = vmatprep.subr.mxu0 0.0
  %4777 = vmatpush2.msra.mxu0 0.0
  %4778 = vmatprep.subr.mxu0 0.0
  %4779 = vmatpush2.msra.mxu0 0.0
  %4780 = vmatprep.subr.mxu0 0.0
  %4781 = vmatpush2.msra.mxu0 0.0
  %4782 = vmatprep.subr.mxu0 0.0
  %4783 = vmatpush2.msra.mxu0 0.0
  %4784 = vmatprep.subr.mxu0 0.0
  %4785 = vmatpush2.msra.mxu0 0.0
  %4786 = vmatprep.subr.mxu0 0.0
  %4787 = vmatpush2.msra.mxu0 0.0
  %4788 = vmatprep.subr.mxu0 0.0
  %4789 = vmatpush2.msra.mxu0 0.0
  %4790 = vmatprep.subr.mxu0 0.0
  %4791 = vmatpush2.msra.mxu0 0.0
  %4792 = vmatprep.subr.mxu0 0.0
  %4793 = vmatpush2.msra.mxu0 0.0
  %4794 = vmatprep.subr.mxu0 0.0
  %4795 = vmatpush2.msra.mxu0 0.0
  %4796 = vmatprep.subr.mxu0 0.0
  %4797 = vmatpush2.msra.mxu0 0.0
  %4798 = vmatprep.subr.mxu0 0.0
  %4799 = vmatpush2.msra.mxu0 0.0
  %4800 = vmatprep.mubr.f32.mxu0 0.0
  %4801 = vmatmul.mubr.f32.gmra.mxu0 %v4317
  %v4802 = vpop.f32.mrf.mxu0
  %v4803 = vadd.f32 0.0, %v4802
  %v4804 = vpop.f32.mrf.mxu0
  %4805 = vmatprep.mubr.f32.mxu0 0.0
  %4806 = vmatmul.mubr.f32.gmra.mxu0 %v4320
  %v4807 = vpop.f32.mrf.mxu0
  %v4808 = vadd.f32 0.0, %v4807
  %v4809 = vpop.f32.mrf.mxu0
  %4810 = vmatprep.mubr.f32.mxu0 0.0
  %4811 = vmatmul.mubr.f32.gmra.mxu0 %v4323
  %v4812 = vpop.f32.mrf.mxu0
  %v4813 = vadd.f32 0.0, %v4812
  %v4814 = vpop.f32.mrf.mxu0
  %4815 = vmatprep.mubr.f32.mxu0 0.0
  %4816 = vmatmul.mubr.f32.gmra.mxu0 %v4326
  %v4817 = vpop.f32.mrf.mxu0
  %v4818 = vadd.f32 0.0, %v4817
  %v4819 = vpop.f32.mrf.mxu0
  %4820 = vmatprep.mubr.f32.mxu0 0.0
  %4821 = vmatmul.mubr.f32.gmra.mxu0 %v4329
  %v4822 = vpop.f32.mrf.mxu0
  %v4823 = vadd.f32 0.0, %v4822
  %v4824 = vpop.f32.mrf.mxu0
  %4825 = vmatprep.mubr.f32.mxu0 0.0
  %4826 = vmatmul.mubr.f32.gmra.mxu0 %v4332
  %v4827 = vpop.f32.mrf.mxu0
  %v4828 = vadd.f32 0.0, %v4827
  %v4829 = vpop.f32.mrf.mxu0
  %4830 = vmatprep.mubr.f32.mxu0 0.0
  %4831 = vmatmul.mubr.f32.gmra.mxu0 %v4335
  %v4832 = vpop.f32.mrf.mxu0
  %v4833 = vadd.f32 0.0, %v4832
  %v4834 = vpop.f32.mrf.mxu0
  %4835 = vmatprep.mubr.f32.mxu0 0.0
  %4836 = vmatmul.mubr.f32.gmra.mxu0 %v4338
  %v4837 = vpop.f32.mrf.mxu0
  %v4838 = vadd.f32 0.0, %v4837
  %v4839 = vpop.f32.mrf.mxu0
  %4840 = vmatprep.mubr.f32.mxu0 0.0
  %4841 = vmatmul.mubr.f32.gmra.mxu0 %v4341
  %v4842 = vpop.f32.mrf.mxu0
  %v4843 = vadd.f32 0.0, %v4842
  %v4844 = vpop.f32.mrf.mxu0
  %4845 = vmatprep.mubr.f32.mxu0 0.0
  %4846 = vmatmul.mubr.f32.gmra.mxu0 %v4344
  %v4847 = vpop.f32.mrf.mxu0
  %v4848 = vadd.f32 0.0, %v4847
  %v4849 = vpop.f32.mrf.mxu0
  %4850 = vmatprep.mubr.f32.mxu0 0.0
  %4851 = vmatmul.mubr.f32.gmra.mxu0 %v4347
  %v4852 = vpop.f32.mrf.mxu0
  %v4853 = vadd.f32 0.0, %v4852
  %v4854 = vpop.f32.mrf.mxu0
  %4855 = vmatprep.mubr.f32.mxu0 0.0
  %4856 = vmatmul.mubr.f32.gmra.mxu0 %v4350
  %v4857 = vpop.f32.mrf.mxu0
  %v4858 = vadd.f32 0.0, %v4857
  %v4859 = vpop.f32.mrf.mxu0
  %4860 = vmatprep.mubr.f32.mxu0 0.0
  %4861 = vmatmul.mubr.f32.gmra.mxu0 %v4353
  %v4862 = vpop.f32.mrf.mxu0
  %v4863 = vadd.f32 0.0, %v4862
  %v4864 = vpop.f32.mrf.mxu0
  %4865 = vmatprep.mubr.f32.mxu0 0.0
  %4866 = vmatmul.mubr.f32.gmra.mxu0 %v4356
  %v4867 = vpop.f32.mrf.mxu0
  %v4868 = vadd.f32 0.0, %v4867
  %v4869 = vpop.f32.mrf.mxu0
  %4870 = vmatprep.mubr.f32.mxu0 0.0
  %4871 = vmatmul.mubr.f32.gmra.mxu0 %v4359
  %v4872 = vpop.f32.mrf.mxu0
  %v4873 = vadd.f32 0.0, %v4872
  %v4874 = vpop.f32.mrf.mxu0
  %4875 = vmatprep.mubr.f32.mxu0 0.0
  %4876 = vmatmul.mubr.f32.gmra.mxu0 %v4362
  %v4877 = vpop.f32.mrf.mxu0
  %v4878 = vadd.f32 0.0, %v4877
  %v4879 = vpop.f32.mrf.mxu0
  %4880 = vdwg.mxu0
  %v4881 = vadd.f32 %v4719, %v4803
  %v4882 = vadd.f32 %v4720, %v4808
  %v4883 = vadd.f32 %v4721, %v4813
  %v4884 = vadd.f32 %v4722, %v4818
  %v4885 = vadd.f32 %v4723, %v4823
  %v4886 = vadd.f32 %v4724, %v4828
  %v4887 = vadd.f32 %v4725, %v4833
  %v4888 = vadd.f32 %v4726, %v4838
  %v4889 = vadd.f32 %v4727, %v4843
  %v4890 = vadd.f32 %v4728, %v4848
  %v4891 = vadd.f32 %v4729, %v4853
  %v4892 = vadd.f32 %v4730, %v4858
  %v4893 = vadd.f32 %v4731, %v4863
  %v4894 = vadd.f32 %v4732, %v4868
  %v4895 = vadd.f32 %v4733, %v4873
  %v4896 = vadd.f32 %v4734, %v4878
  %v4897 = vld [vmem:[%s0 + $0x400] sm:$0xff]
  %v4898 = vld [vmem:[%s0 + $0x408] sm:$0xff]
  %v4899 = vld [vmem:[%s0 + $0x410] sm:$0xff]
  %v4900 = vld [vmem:[%s0 + $0x418] sm:$0xff]
  %v4901 = vld [vmem:[%s0 + $0x420] sm:$0xff]
  %v4902 = vld [vmem:[%s0 + $0x428] sm:$0xff]
  %v4903 = vld [vmem:[%s0 + $0x430] sm:$0xff]
  %v4904 = vld [vmem:[%s0 + $0x438] sm:$0xff]
  %v4905 = vld [vmem:[%s0 + $0x440] sm:$0xff]
  %v4906 = vld [vmem:[%s0 + $0x448] sm:$0xff]
  %v4907 = vld [vmem:[%s0 + $0x450] sm:$0xff]
  %v4908 = vld [vmem:[%s0 + $0x458] sm:$0xff]
  %v4909 = vld [vmem:[%s0 + $0x460] sm:$0xff]
  %v4910 = vld [vmem:[%s0 + $0x468] sm:$0xff]
  %v4911 = vld [vmem:[%s0 + $0x470] sm:$0xff]
  %v4912 = vld [vmem:[%s0 + $0x478] sm:$0xff]
  %v4913 = vld [vmem:[%s1 + $0x400] sm:$0xff]
  %v4914 = vld [vmem:[%s1 + $0x408] sm:$0xff]
  %v4915 = vld [vmem:[%s1 + $0x410] sm:$0xff]
  %v4916 = vld [vmem:[%s1 + $0x418] sm:$0xff]
  %v4917 = vld [vmem:[%s1 + $0x420] sm:$0xff]
  %v4918 = vld [vmem:[%s1 + $0x428] sm:$0xff]
  %v4919 = vld [vmem:[%s1 + $0x430] sm:$0xff]
  %v4920 = vld [vmem:[%s1 + $0x438] sm:$0xff]
  %v4921 = vld [vmem:[%s1 + $0x440] sm:$0xff]
  %v4922 = vld [vmem:[%s1 + $0x448] sm:$0xff]
  %v4923 = vld [vmem:[%s1 + $0x450] sm:$0xff]
  %v4924 = vld [vmem:[%s1 + $0x458] sm:$0xff]
  %v4925 = vld [vmem:[%s1 + $0x460] sm:$0xff]
  %v4926 = vld [vmem:[%s1 + $0x468] sm:$0xff]
  %v4927 = vld [vmem:[%s1 + $0x470] sm:$0xff]
  %v4928 = vld [vmem:[%s1 + $0x478] sm:$0xff]
  %v4930 = vsel %vm56, %v4897, 0
  %v4933 = vsel %vm56, %v4898, 0
  %v4936 = vsel %vm56, %v4899, 0
  %v4939 = vsel %vm56, %v4900, 0
  %v4942 = vsel %vm56, %v4901, 0
  %v4945 = vsel %vm56, %v4902, 0
  %v4948 = vsel %vm56, %v4903, 0
  %v4951 = vsel %vm56, %v4904, 0
  %v4954 = vsel %vm56, %v4905, 0
  %v4957 = vsel %vm56, %v4906, 0
  %v4960 = vsel %vm56, %v4907, 0
  %v4963 = vsel %vm56, %v4908, 0
  %v4966 = vsel %vm56, %v4909, 0
  %v4969 = vsel %vm56, %v4910, 0
  %v4972 = vsel %vm56, %v4911, 0
  %v4975 = vsel %vm56, %v4912, 0
  %4977 = vmatprep.subr.mxu0 0.0
  %4978 = vmatpush1.msra.mxu0 0.0
  %4979 = vmatprep.subr.mxu0 0.0
  %4980 = vmatpush1.msra.mxu0 0.0
  %4981 = vmatprep.subr.mxu0 0.0
  %4982 = vmatpush1.msra.mxu0 0.0
  %4983 = vmatprep.subr.mxu0 0.0
  %4984 = vmatpush1.msra.mxu0 0.0
  %4985 = vmatprep.subr.mxu0 0.0
  %4986 = vmatpush1.msra.mxu0 0.0
  %4987 = vmatprep.subr.mxu0 0.0
  %4988 = vmatpush1.msra.mxu0 0.0
  %4989 = vmatprep.subr.mxu0 0.0
  %4990 = vmatpush1.msra.mxu0 0.0
  %4991 = vmatprep.subr.mxu0 0.0
  %4992 = vmatpush1.msra.mxu0 0.0
  %4993 = vmatprep.subr.mxu0 0.0
  %4994 = vmatpush1.msra.mxu0 0.0
  %4995 = vmatprep.subr.mxu0 0.0
  %4996 = vmatpush1.msra.mxu0 0.0
  %4997 = vmatprep.subr.mxu0 0.0
  %4998 = vmatpush1.msra.mxu0 0.0
  %4999 = vmatprep.subr.mxu0 0.0
  %5000 = vmatpush1.msra.mxu0 0.0
  %5001 = vmatprep.subr.mxu0 0.0
  %5002 = vmatpush1.msra.mxu0 0.0
  %5003 = vmatprep.subr.mxu0 0.0
  %5004 = vmatpush1.msra.mxu0 0.0
  %5005 = vmatprep.subr.mxu0 0.0
  %5006 = vmatpush1.msra.mxu0 0.0
  %5007 = vmatprep.subr.mxu0 0.0
  %5008 = vmatpush1.msra.mxu0 %v39
  %5009 = vmatprep.subr.mxu0 0.0
  %5010 = vmatpush2.msra.mxu0 0.0
  %5011 = vmatprep.subr.mxu0 0.0
  %5012 = vmatpush2.msra.mxu0 0.0
  %5013 = vmatprep.subr.mxu0 0.0
  %5014 = vmatpush2.msra.mxu0 0.0
  %5015 = vmatprep.subr.mxu0 0.0
  %5016 = vmatpush2.msra.mxu0 0.0
  %5017 = vmatprep.subr.mxu0 0.0
  %5018 = vmatpush2.msra.mxu0 0.0
  %5019 = vmatprep.subr.mxu0 0.0
  %5020 = vmatpush2.msra.mxu0 0.0
  %5021 = vmatprep.subr.mxu0 0.0
  %5022 = vmatpush2.msra.mxu0 0.0
  %5023 = vmatprep.subr.mxu0 0.0
  %5024 = vmatpush2.msra.mxu0 0.0
  %5025 = vmatprep.subr.mxu0 0.0
  %5026 = vmatpush2.msra.mxu0 0.0
  %5027 = vmatprep.subr.mxu0 0.0
  %5028 = vmatpush2.msra.mxu0 0.0
  %5029 = vmatprep.subr.mxu0 0.0
  %5030 = vmatpush2.msra.mxu0 0.0
  %5031 = vmatprep.subr.mxu0 0.0
  %5032 = vmatpush2.msra.mxu0 0.0
  %5033 = vmatprep.subr.mxu0 0.0
  %5034 = vmatpush2.msra.mxu0 0.0
  %5035 = vmatprep.subr.mxu0 0.0
  %5036 = vmatpush2.msra.mxu0 0.0
  %5037 = vmatprep.subr.mxu0 0.0
  %5038 = vmatpush2.msra.mxu0 0.0
  %5039 = vmatprep.subr.mxu0 0.0
  %5040 = vmatpush2.msra.mxu0 0.0
  %5041 = vmatprep.mubr.f32.mxu0 0.0
  %5042 = vmatmul.mubr.f32.gmra.mxu0 %v4930
  %v5043 = vpop.f32.mrf.mxu0
  %v5044 = vadd.f32 %v4913, %v5043
  %v5045 = vpop.f32.mrf.mxu0
  %5046 = vmatprep.mubr.f32.mxu0 0.0
  %5047 = vmatmul.mubr.f32.gmra.mxu0 %v4933
  %v5048 = vpop.f32.mrf.mxu0
  %v5049 = vadd.f32 %v4914, %v5048
  %v5050 = vpop.f32.mrf.mxu0
  %5051 = vmatprep.mubr.f32.mxu0 0.0
  %5052 = vmatmul.mubr.f32.gmra.mxu0 %v4936
  %v5053 = vpop.f32.mrf.mxu0
  %v5054 = vadd.f32 %v4915, %v5053
  %v5055 = vpop.f32.mrf.mxu0
  %5056 = vmatprep.mubr.f32.mxu0 0.0
  %5057 = vmatmul.mubr.f32.gmra.mxu0 %v4939
  %v5058 = vpop.f32.mrf.mxu0
  %v5059 = vadd.f32 %v4916, %v5058
  %v5060 = vpop.f32.mrf.mxu0
  %5061 = vmatprep.mubr.f32.mxu0 0.0
  %5062 = vmatmul.mubr.f32.gmra.mxu0 %v4942
  %v5063 = vpop.f32.mrf.mxu0
  %v5064 = vadd.f32 %v4917, %v5063
  %v5065 = vpop.f32.mrf.mxu0
  %5066 = vmatprep.mubr.f32.mxu0 0.0
  %5067 = vmatmul.mubr.f32.gmra.mxu0 %v4945
  %v5068 = vpop.f32.mrf.mxu0
  %v5069 = vadd.f32 %v4918, %v5068
  %v5070 = vpop.f32.mrf.mxu0
  %5071 = vmatprep.mubr.f32.mxu0 0.0
  %5072 = vmatmul.mubr.f32.gmra.mxu0 %v4948
  %v5073 = vpop.f32.mrf.mxu0
  %v5074 = vadd.f32 %v4919, %v5073
  %v5075 = vpop.f32.mrf.mxu0
  %5076 = vmatprep.mubr.f32.mxu0 0.0
  %5077 = vmatmul.mubr.f32.gmra.mxu0 %v4951
  %v5078 = vpop.f32.mrf.mxu0
  %v5079 = vadd.f32 %v4920, %v5078
  %v5080 = vpop.f32.mrf.mxu0
  %5081 = vmatprep.mubr.f32.mxu0 0.0
  %5082 = vmatmul.mubr.f32.gmra.mxu0 %v4954
  %v5083 = vpop.f32.mrf.mxu0
  %v5084 = vadd.f32 %v4921, %v5083
  %v5085 = vpop.f32.mrf.mxu0
  %5086 = vmatprep.mubr.f32.mxu0 0.0
  %5087 = vmatmul.mubr.f32.gmra.mxu0 %v4957
  %v5088 = vpop.f32.mrf.mxu0
  %v5089 = vadd.f32 %v4922, %v5088
  %v5090 = vpop.f32.mrf.mxu0
  %5091 = vmatprep.mubr.f32.mxu0 0.0
  %5092 = vmatmul.mubr.f32.gmra.mxu0 %v4960
  %v5093 = vpop.f32.mrf.mxu0
  %v5094 = vadd.f32 %v4923, %v5093
  %v5095 = vpop.f32.mrf.mxu0
  %5096 = vmatprep.mubr.f32.mxu0 0.0
  %5097 = vmatmul.mubr.f32.gmra.mxu0 %v4963
  %v5098 = vpop.f32.mrf.mxu0
  %v5099 = vadd.f32 %v4924, %v5098
  %v5100 = vpop.f32.mrf.mxu0
  %5101 = vmatprep.mubr.f32.mxu0 0.0
  %5102 = vmatmul.mubr.f32.gmra.mxu0 %v4966
  %v5103 = vpop.f32.mrf.mxu0
  %v5104 = vadd.f32 %v4925, %v5103
  %v5105 = vpop.f32.mrf.mxu0
  %5106 = vmatprep.mubr.f32.mxu0 0.0
  %5107 = vmatmul.mubr.f32.gmra.mxu0 %v4969
  %v5108 = vpop.f32.mrf.mxu0
  %v5109 = vadd.f32 %v4926, %v5108
  %v5110 = vpop.f32.mrf.mxu0
  %5111 = vmatprep.mubr.f32.mxu0 0.0
  %5112 = vmatmul.mubr.f32.gmra.mxu0 %v4972
  %v5113 = vpop.f32.mrf.mxu0
  %v5114 = vadd.f32 %v4927, %v5113
  %v5115 = vpop.f32.mrf.mxu0
  %5116 = vmatprep.mubr.f32.mxu0 0.0
  %5117 = vmatmul.mubr.f32.gmra.mxu0 %v4975
  %v5118 = vpop.f32.mrf.mxu0
  %v5119 = vadd.f32 %v4928, %v5118
  %v5120 = vpop.f32.mrf.mxu0
  %5121 = vdwg.mxu0
  %v5122 = vmax.f32 %v5044, 0.0
  %v5123 = vmax.f32 %v5049, 0.0
  %v5124 = vmax.f32 %v5054, 0.0
  %v5125 = vmax.f32 %v5059, 0.0
  %v5126 = vmax.f32 %v5064, 0.0
  %v5127 = vmax.f32 %v5069, 0.0
  %v5128 = vmax.f32 %v5074, 0.0
  %v5129 = vmax.f32 %v5079, 0.0
  %v5130 = vmax.f32 %v5084, 0.0
  %v5131 = vmax.f32 %v5089, 0.0
  %v5132 = vmax.f32 %v5094, 0.0
  %v5133 = vmax.f32 %v5099, 0.0
  %v5134 = vmax.f32 %v5104, 0.0
  %v5135 = vmax.f32 %v5109, 0.0
  %v5136 = vmax.f32 %v5114, 0.0
  %v5137 = vmax.f32 %v5119, 0.0
  %v5138 = vld [vmem:[%s3 + $0x40] sm:$0xff]
  %v5140 = vsel %vm56, %v5122, 0
  %v5143 = vsel %vm56, %v5123, 0
  %v5146 = vsel %vm56, %v5124, 0
  %v5149 = vsel %vm56, %v5125, 0
  %v5152 = vsel %vm56, %v5126, 0
  %v5155 = vsel %vm56, %v5127, 0
  %v5158 = vsel %vm56, %v5128, 0
  %v5161 = vsel %vm56, %v5129, 0
  %v5164 = vsel %vm56, %v5130, 0
  %v5167 = vsel %vm56, %v5131, 0
  %v5170 = vsel %vm56, %v5132, 0
  %v5173 = vsel %vm56, %v5133, 0
  %v5176 = vsel %vm56, %v5134, 0
  %v5179 = vsel %vm56, %v5135, 0
  %v5182 = vsel %vm56, %v5136, 0
  %v5185 = vsel %vm56, %v5137, 0
  %5187 = vmatprep.subr.mxu0 0.0
  %5188 = vmatpush1.msra.mxu0 0.0
  %5189 = vmatprep.subr.mxu0 0.0
  %5190 = vmatpush1.msra.mxu0 0.0
  %5191 = vmatprep.subr.mxu0 0.0
  %5192 = vmatpush1.msra.mxu0 0.0
  %5193 = vmatprep.subr.mxu0 0.0
  %5194 = vmatpush1.msra.mxu0 0.0
  %5195 = vmatprep.subr.mxu0 0.0
  %5196 = vmatpush1.msra.mxu0 0.0
  %5197 = vmatprep.subr.mxu0 0.0
  %5198 = vmatpush1.msra.mxu0 0.0
  %5199 = vmatprep.subr.mxu0 0.0
  %5200 = vmatpush1.msra.mxu0 0.0
  %5201 = vmatprep.subr.mxu0 0.0
  %5202 = vmatpush1.msra.mxu0 0.0
  %5203 = vmatprep.subr.mxu0 0.0
  %5204 = vmatpush1.msra.mxu0 0.0
  %5205 = vmatprep.subr.mxu0 0.0
  %5206 = vmatpush1.msra.mxu0 0.0
  %5207 = vmatprep.subr.mxu0 0.0
  %5208 = vmatpush1.msra.mxu0 0.0
  %5209 = vmatprep.subr.mxu0 0.0
  %5210 = vmatpush1.msra.mxu0 0.0
  %5211 = vmatprep.subr.mxu0 0.0
  %5212 = vmatpush1.msra.mxu0 0.0
  %5213 = vmatprep.subr.mxu0 0.0
  %5214 = vmatpush1.msra.mxu0 0.0
  %5215 = vmatprep.subr.mxu0 0.0
  %5216 = vmatpush1.msra.mxu0 0.0
  %5217 = vmatprep.subr.mxu0 0.0
  %5218 = vmatpush1.msra.mxu0 %v5138
  %5219 = vmatprep.subr.mxu0 0.0
  %5220 = vmatpush2.msra.mxu0 0.0
  %5221 = vmatprep.subr.mxu0 0.0
  %5222 = vmatpush2.msra.mxu0 0.0
  %5223 = vmatprep.subr.mxu0 0.0
  %5224 = vmatpush2.msra.mxu0 0.0
  %5225 = vmatprep.subr.mxu0 0.0
  %5226 = vmatpush2.msra.mxu0 0.0
  %5227 = vmatprep.subr.mxu0 0.0
  %5228 = vmatpush2.msra.mxu0 0.0
  %5229 = vmatprep.subr.mxu0 0.0
  %5230 = vmatpush2.msra.mxu0 0.0
  %5231 = vmatprep.subr.mxu0 0.0
  %5232 = vmatpush2.msra.mxu0 0.0
  %5233 = vmatprep.subr.mxu0 0.0
  %5234 = vmatpush2.msra.mxu0 0.0
  %5235 = vmatprep.subr.mxu0 0.0
  %5236 = vmatpush2.msra.mxu0 0.0
  %5237 = vmatprep.subr.mxu0 0.0
  %5238 = vmatpush2.msra.mxu0 0.0
  %5239 = vmatprep.subr.mxu0 0.0
  %5240 = vmatpush2.msra.mxu0 0.0
  %5241 = vmatprep.subr.mxu0 0.0
  %5242 = vmatpush2.msra.mxu0 0.0
  %5243 = vmatprep.subr.mxu0 0.0
  %5244 = vmatpush2.msra.mxu0 0.0
  %5245 = vmatprep.subr.mxu0 0.0
  %5246 = vmatpush2.msra.mxu0 0.0
  %5247 = vmatprep.subr.mxu0 0.0
  %5248 = vmatpush2.msra.mxu0 0.0
  %5249 = vmatprep.subr.mxu0 0.0
  %5250 = vmatpush2.msra.mxu0 0.0
  %5251 = vmatprep.mubr.f32.mxu0 0.0
  %5252 = vmatmul.mubr.f32.gmra.mxu0 %v5140
  %v5253 = vpop.f32.mrf.mxu0
  %v5254 = vadd.f32 0.0, %v5253
  %v5255 = vpop.f32.mrf.mxu0
  %5256 = vmatprep.mubr.f32.mxu0 0.0
  %5257 = vmatmul.mubr.f32.gmra.mxu0 %v5143
  %v5258 = vpop.f32.mrf.mxu0
  %v5259 = vadd.f32 0.0, %v5258
  %v5260 = vpop.f32.mrf.mxu0
  %5261 = vmatprep.mubr.f32.mxu0 0.0
  %5262 = vmatmul.mubr.f32.gmra.mxu0 %v5146
  %v5263 = vpop.f32.mrf.mxu0
  %v5264 = vadd.f32 0.0, %v5263
  %v5265 = vpop.f32.mrf.mxu0
  %5266 = vmatprep.mubr.f32.mxu0 0.0
  %5267 = vmatmul.mubr.f32.gmra.mxu0 %v5149
  %v5268 = vpop.f32.mrf.mxu0
  %v5269 = vadd.f32 0.0, %v5268
  %v5270 = vpop.f32.mrf.mxu0
  %5271 = vmatprep.mubr.f32.mxu0 0.0
  %5272 = vmatmul.mubr.f32.gmra.mxu0 %v5152
  %v5273 = vpop.f32.mrf.mxu0
  %v5274 = vadd.f32 0.0, %v5273
  %v5275 = vpop.f32.mrf.mxu0
  %5276 = vmatprep.mubr.f32.mxu0 0.0
  %5277 = vmatmul.mubr.f32.gmra.mxu0 %v5155
  %v5278 = vpop.f32.mrf.mxu0
  %v5279 = vadd.f32 0.0, %v5278
  %v5280 = vpop.f32.mrf.mxu0
  %5281 = vmatprep.mubr.f32.mxu0 0.0
  %5282 = vmatmul.mubr.f32.gmra.mxu0 %v5158
  %v5283 = vpop.f32.mrf.mxu0
  %v5284 = vadd.f32 0.0, %v5283
  %v5285 = vpop.f32.mrf.mxu0
  %5286 = vmatprep.mubr.f32.mxu0 0.0
  %5287 = vmatmul.mubr.f32.gmra.mxu0 %v5161
  %v5288 = vpop.f32.mrf.mxu0
  %v5289 = vadd.f32 0.0, %v5288
  %v5290 = vpop.f32.mrf.mxu0
  %5291 = vmatprep.mubr.f32.mxu0 0.0
  %5292 = vmatmul.mubr.f32.gmra.mxu0 %v5164
  %v5293 = vpop.f32.mrf.mxu0
  %v5294 = vadd.f32 0.0, %v5293
  %v5295 = vpop.f32.mrf.mxu0
  %5296 = vmatprep.mubr.f32.mxu0 0.0
  %5297 = vmatmul.mubr.f32.gmra.mxu0 %v5167
  %v5298 = vpop.f32.mrf.mxu0
  %v5299 = vadd.f32 0.0, %v5298
  %v5300 = vpop.f32.mrf.mxu0
  %5301 = vmatprep.mubr.f32.mxu0 0.0
  %5302 = vmatmul.mubr.f32.gmra.mxu0 %v5170
  %v5303 = vpop.f32.mrf.mxu0
  %v5304 = vadd.f32 0.0, %v5303
  %v5305 = vpop.f32.mrf.mxu0
  %5306 = vmatprep.mubr.f32.mxu0 0.0
  %5307 = vmatmul.mubr.f32.gmra.mxu0 %v5173
  %v5308 = vpop.f32.mrf.mxu0
  %v5309 = vadd.f32 0.0, %v5308
  %v5310 = vpop.f32.mrf.mxu0
  %5311 = vmatprep.mubr.f32.mxu0 0.0
  %5312 = vmatmul.mubr.f32.gmra.mxu0 %v5176
  %v5313 = vpop.f32.mrf.mxu0
  %v5314 = vadd.f32 0.0, %v5313
  %v5315 = vpop.f32.mrf.mxu0
  %5316 = vmatprep.mubr.f32.mxu0 0.0
  %5317 = vmatmul.mubr.f32.gmra.mxu0 %v5179
  %v5318 = vpop.f32.mrf.mxu0
  %v5319 = vadd.f32 0.0, %v5318
  %v5320 = vpop.f32.mrf.mxu0
  %5321 = vmatprep.mubr.f32.mxu0 0.0
  %5322 = vmatmul.mubr.f32.gmra.mxu0 %v5182
  %v5323 = vpop.f32.mrf.mxu0
  %v5324 = vadd.f32 0.0, %v5323
  %v5325 = vpop.f32.mrf.mxu0
  %5326 = vmatprep.mubr.f32.mxu0 0.0
  %5327 = vmatmul.mubr.f32.gmra.mxu0 %v5185
  %v5328 = vpop.f32.mrf.mxu0
  %v5329 = vadd.f32 0.0, %v5328
  %v5330 = vpop.f32.mrf.mxu0
  %5331 = vdwg.mxu0
  %v5332 = vadd.f32 %v4881, %v5254
  %v5333 = vadd.f32 %v4882, %v5259
  %v5334 = vadd.f32 %v4883, %v5264
  %v5335 = vadd.f32 %v4884, %v5269
  %v5336 = vadd.f32 %v4885, %v5274
  %v5337 = vadd.f32 %v4886, %v5279
  %v5338 = vadd.f32 %v4887, %v5284
  %v5339 = vadd.f32 %v4888, %v5289
  %v5340 = vadd.f32 %v4889, %v5294
  %v5341 = vadd.f32 %v4890, %v5299
  %v5342 = vadd.f32 %v4891, %v5304
  %v5343 = vadd.f32 %v4892, %v5309
  %v5344 = vadd.f32 %v4893, %v5314
  %v5345 = vadd.f32 %v4894, %v5319
  %v5346 = vadd.f32 %v4895, %v5324
  %v5347 = vadd.f32 %v4896, %v5329
  %v5348 = vld [vmem:[%s4 + $0x40] sm:$0xff]
  %5349 = vmatprep.subr.mxu0 0.0
  %5350 = vmatpush1.msra.mxu0 0.0
  %5351 = vmatprep.subr.mxu0 0.0
  %5352 = vmatpush1.msra.mxu0 0.0
  %5353 = vmatprep.subr.mxu0 0.0
  %5354 = vmatpush1.msra.mxu0 0.0
  %5355 = vmatprep.subr.mxu0 0.0
  %5356 = vmatpush1.msra.mxu0 0.0
  %5357 = vmatprep.subr.mxu0 0.0
  %5358 = vmatpush1.msra.mxu0 0.0
  %5359 = vmatprep.subr.mxu0 0.0
  %5360 = vmatpush1.msra.mxu0 0.0
  %5361 = vmatprep.subr.mxu0 0.0
  %5362 = vmatpush1.msra.mxu0 0.0
  %5363 = vmatprep.subr.mxu0 0.0
  %5364 = vmatpush1.msra.mxu0 0.0
  %5365 = vmatprep.subr.mxu0 0.0
  %5366 = vmatpush1.msra.mxu0 0.0
  %5367 = vmatprep.subr.mxu0 0.0
  %5368 = vmatpush1.msra.mxu0 0.0
  %5369 = vmatprep.subr.mxu0 0.0
  %5370 = vmatpush1.msra.mxu0 0.0
  %5371 = vmatprep.subr.mxu0 0.0
  %5372 = vmatpush1.msra.mxu0 0.0
  %5373 = vmatprep.subr.mxu0 0.0
  %5374 = vmatpush1.msra.mxu0 0.0
  %5375 = vmatprep.subr.mxu0 0.0
  %5376 = vmatpush1.msra.mxu0 0.0
  %5377 = vmatprep.subr.mxu0 0.0
  %5378 = vmatpush1.msra.mxu0 0.0
  %5379 = vmatprep.subr.mxu0 0.0
  %5380 = vmatpush1.msra.mxu0 %v5348
  %5381 = vmatprep.subr.mxu0 0.0
  %5382 = vmatpush2.msra.mxu0 0.0
  %5383 = vmatprep.subr.mxu0 0.0
  %5384 = vmatpush2.msra.mxu0 0.0
  %5385 = vmatprep.subr.mxu0 0.0
  %5386 = vmatpush2.msra.mxu0 0.0
  %5387 = vmatprep.subr.mxu0 0.0
  %5388 = vmatpush2.msra.mxu0 0.0
  %5389 = vmatprep.subr.mxu0 0.0
  %5390 = vmatpush2.msra.mxu0 0.0
  %5391 = vmatprep.subr.mxu0 0.0
  %5392 = vmatpush2.msra.mxu0 0.0
  %5393 = vmatprep.subr.mxu0 0.0
  %5394 = vmatpush2.msra.mxu0 0.0
  %5395 = vmatprep.subr.mxu0 0.0
  %5396 = vmatpush2.msra.mxu0 0.0
  %5397 = vmatprep.subr.mxu0 0.0
  %5398 = vmatpush2.msra.mxu0 0.0
  %5399 = vmatprep.subr.mxu0 0.0
  %5400 = vmatpush2.msra.mxu0 0.0
  %5401 = vmatprep.subr.mxu0 0.0
  %5402 = vmatpush2.msra.mxu0 0.0
  %5403 = vmatprep.subr.mxu0 0.0
  %5404 = vmatpush2.msra.mxu0 0.0
  %5405 = vmatprep.subr.mxu0 0.0
  %5406 = vmatpush2.msra.mxu0 0.0
  %5407 = vmatprep.subr.mxu0 0.0
  %5408 = vmatpush2.msra.mxu0 0.0
  %5409 = vmatprep.subr.mxu0 0.0
  %5410 = vmatpush2.msra.mxu0 0.0
  %5411 = vmatprep.subr.mxu0 0.0
  %5412 = vmatpush2.msra.mxu0 0.0
  %5413 = vmatprep.mubr.f32.mxu0 0.0
  %5414 = vmatmul.mubr.f32.gmra.mxu0 %v4930
  %v5415 = vpop.f32.mrf.mxu0
  %v5416 = vadd.f32 0.0, %v5415
  %v5417 = vpop.f32.mrf.mxu0
  %5418 = vmatprep.mubr.f32.mxu0 0.0
  %5419 = vmatmul.mubr.f32.gmra.mxu0 %v4933
  %v5420 = vpop.f32.mrf.mxu0
  %v5421 = vadd.f32 0.0, %v5420
  %v5422 = vpop.f32.mrf.mxu0
  %5423 = vmatprep.mubr.f32.mxu0 0.0
  %5424 = vmatmul.mubr.f32.gmra.mxu0 %v4936
  %v5425 = vpop.f32.mrf.mxu0
  %v5426 = vadd.f32 0.0, %v5425
  %v5427 = vpop.f32.mrf.mxu0
  %5428 = vmatprep.mubr.f32.mxu0 0.0
  %5429 = vmatmul.mubr.f32.gmra.mxu0 %v4939
  %v5430 = vpop.f32.mrf.mxu0
  %v5431 = vadd.f32 0.0, %v5430
  %v5432 = vpop.f32.mrf.mxu0
  %5433 = vmatprep.mubr.f32.mxu0 0.0
  %5434 = vmatmul.mubr.f32.gmra.mxu0 %v4942
  %v5435 = vpop.f32.mrf.mxu0
  %v5436 = vadd.f32 0.0, %v5435
  %v5437 = vpop.f32.mrf.mxu0
  %5438 = vmatprep.mubr.f32.mxu0 0.0
  %5439 = vmatmul.mubr.f32.gmra.mxu0 %v4945
  %v5440 = vpop.f32.mrf.mxu0
  %v5441 = vadd.f32 0.0, %v5440
  %v5442 = vpop.f32.mrf.mxu0
  %5443 = vmatprep.mubr.f32.mxu0 0.0
  %5444 = vmatmul.mubr.f32.gmra.mxu0 %v4948
  %v5445 = vpop.f32.mrf.mxu0
  %v5446 = vadd.f32 0.0, %v5445
  %v5447 = vpop.f32.mrf.mxu0
  %5448 = vmatprep.mubr.f32.mxu0 0.0
  %5449 = vmatmul.mubr.f32.gmra.mxu0 %v4951
  %v5450 = vpop.f32.mrf.mxu0
  %v5451 = vadd.f32 0.0, %v5450
  %v5452 = vpop.f32.mrf.mxu0
  %5453 = vmatprep.mubr.f32.mxu0 0.0
  %5454 = vmatmul.mubr.f32.gmra.mxu0 %v4954
  %v5455 = vpop.f32.mrf.mxu0
  %v5456 = vadd.f32 0.0, %v5455
  %v5457 = vpop.f32.mrf.mxu0
  %5458 = vmatprep.mubr.f32.mxu0 0.0
  %5459 = vmatmul.mubr.f32.gmra.mxu0 %v4957
  %v5460 = vpop.f32.mrf.mxu0
  %v5461 = vadd.f32 0.0, %v5460
  %v5462 = vpop.f32.mrf.mxu0
  %5463 = vmatprep.mubr.f32.mxu0 0.0
  %5464 = vmatmul.mubr.f32.gmra.mxu0 %v4960
  %v5465 = vpop.f32.mrf.mxu0
  %v5466 = vadd.f32 0.0, %v5465
  %v5467 = vpop.f32.mrf.mxu0
  %5468 = vmatprep.mubr.f32.mxu0 0.0
  %5469 = vmatmul.mubr.f32.gmra.mxu0 %v4963
  %v5470 = vpop.f32.mrf.mxu0
  %v5471 = vadd.f32 0.0, %v5470
  %v5472 = vpop.f32.mrf.mxu0
  %5473 = vmatprep.mubr.f32.mxu0 0.0
  %5474 = vmatmul.mubr.f32.gmra.mxu0 %v4966
  %v5475 = vpop.f32.mrf.mxu0
  %v5476 = vadd.f32 0.0, %v5475
  %v5477 = vpop.f32.mrf.mxu0
  %5478 = vmatprep.mubr.f32.mxu0 0.0
  %5479 = vmatmul.mubr.f32.gmra.mxu0 %v4969
  %v5480 = vpop.f32.mrf.mxu0
  %v5481 = vadd.f32 0.0, %v5480
  %v5482 = vpop.f32.mrf.mxu0
  %5483 = vmatprep.mubr.f32.mxu0 0.0
  %5484 = vmatmul.mubr.f32.gmra.mxu0 %v4972
  %v5485 = vpop.f32.mrf.mxu0
  %v5486 = vadd.f32 0.0, %v5485
  %v5487 = vpop.f32.mrf.mxu0
  %5488 = vmatprep.mubr.f32.mxu0 0.0
  %5489 = vmatmul.mubr.f32.gmra.mxu0 %v4975
  %v5490 = vpop.f32.mrf.mxu0
  %v5491 = vadd.f32 0.0, %v5490
  %v5492 = vpop.f32.mrf.mxu0
  %5493 = vdwg.mxu0
  %v5494 = vadd.f32 %v5332, %v5416
  %v5495 = vadd.f32 %v5333, %v5421
  %v5496 = vadd.f32 %v5334, %v5426
  %v5497 = vadd.f32 %v5335, %v5431
  %v5498 = vadd.f32 %v5336, %v5436
  %v5499 = vadd.f32 %v5337, %v5441
  %v5500 = vadd.f32 %v5338, %v5446
  %v5501 = vadd.f32 %v5339, %v5451
  %v5502 = vadd.f32 %v5340, %v5456
  %v5503 = vadd.f32 %v5341, %v5461
  %v5504 = vadd.f32 %v5342, %v5466
  %v5505 = vadd.f32 %v5343, %v5471
  %v5506 = vadd.f32 %v5344, %v5476
  %v5507 = vadd.f32 %v5345, %v5481
  %v5508 = vadd.f32 %v5346, %v5486
  %v5509 = vadd.f32 %v5347, %v5491
  %v5510 = vld [vmem:[%s5] sm:$0x1]
  %v5512 = vlaneseq
  %v5513 = vshrl.u32 %v5512, 7
  %v5514 = vsub.s32 0, %v5513
  %v5515 = vrot.slane %v5510, %v5514
  %v5517 = vadd.f32 %v5494, %v5515
  %v5518 = vadd.f32 %v5495, %v5515
  %v5519 = vadd.f32 %v5496, %v5515
  %v5520 = vadd.f32 %v5497, %v5515
  %v5521 = vadd.f32 %v5498, %v5515
  %v5522 = vadd.f32 %v5499, %v5515
  %v5523 = vadd.f32 %v5500, %v5515
  %v5524 = vadd.f32 %v5501, %v5515
  %v5525 = vadd.f32 %v5502, %v5515
  %v5526 = vadd.f32 %v5503, %v5515
  %v5527 = vadd.f32 %v5504, %v5515
  %v5528 = vadd.f32 %v5505, %v5515
  %v5529 = vadd.f32 %v5506, %v5515
  %v5530 = vadd.f32 %v5507, %v5515
  %v5531 = vadd.f32 %v5508, %v5515
  %v5532 = vadd.f32 %v5509, %v5515
  %v5533 = vmax.f32 %v5517, 0.0
  %v5534 = vmax.f32 %v5518, 0.0
  %v5535 = vmax.f32 %v5519, 0.0
  %v5536 = vmax.f32 %v5520, 0.0
  %v5537 = vmax.f32 %v5521, 0.0
  %v5538 = vmax.f32 %v5522, 0.0
  %v5539 = vmax.f32 %v5523, 0.0
  %v5540 = vmax.f32 %v5524, 0.0
  %v5541 = vmax.f32 %v5525, 0.0
  %v5542 = vmax.f32 %v5526, 0.0
  %v5543 = vmax.f32 %v5527, 0.0
  %v5544 = vmax.f32 %v5528, 0.0
  %v5545 = vmax.f32 %v5529, 0.0
  %v5546 = vmax.f32 %v5530, 0.0
  %v5547 = vmax.f32 %v5531, 0.0
  %v5548 = vmax.f32 %v5532, 0.0
  %5549 = vst [vmem:[%s6] sm:$0xff] %v5533
  %5550 = vst [vmem:[%s6 + $0x8] sm:$0xff] %v5534
  %5551 = vst [vmem:[%s6 + $0x10] sm:$0xff] %v5535
  %5552 = vst [vmem:[%s6 + $0x18] sm:$0xff] %v5536
  %5553 = vst [vmem:[%s6 + $0x20] sm:$0xff] %v5537
  %5554 = vst [vmem:[%s6 + $0x28] sm:$0xff] %v5538
  %5555 = vst [vmem:[%s6 + $0x30] sm:$0xff] %v5539
  %5556 = vst [vmem:[%s6 + $0x38] sm:$0xff] %v5540
  %5557 = vst [vmem:[%s6 + $0x40] sm:$0xff] %v5541
  %5558 = vst [vmem:[%s6 + $0x48] sm:$0xff] %v5542
  %5559 = vst [vmem:[%s6 + $0x50] sm:$0xff] %v5543
  %5560 = vst [vmem:[%s6 + $0x58] sm:$0xff] %v5544
  %5561 = vst [vmem:[%s6 + $0x60] sm:$0xff] %v5545
  %5562 = vst [vmem:[%s6 + $0x68] sm:$0xff] %v5546
  %5563 = vst [vmem:[%s6 + $0x70] sm:$0xff] %v5547
  %5564 = vst [vmem:[%s6 + $0x78] sm:$0xff] %v5548
  // Predicated region
  $region26: #{conv_res_forward.1} parent=0 // pred_check
    _
  $region27: #{conv_res_forward.1} parent=0 // pred_check_branch
    %5566 = sbr.rel (0) target = $region29
  $region28: #{conv_res_forward.1} parent=0 // pred_region
    _
  $region29: #{conv_res_forward.1} parent=0 // pred_fallthru
    _
  // Predicated region
  $region30: #{conv_res_forward.1} parent=0 // pred_check
    _
  $region31: #{conv_res_forward.1} parent=0 // pred_check_branch
    %5568 = sbr.rel (0) target = $region33
  $region32: #{conv_res_forward.1} parent=0 // pred_region
    _
  $region33: #{conv_res_forward.1} parent=0 // pred_fallthru
    _

</llo_original>
